<compile_context>
chip_gen: v7x
topology: tpu7x:2x2x1
jax: 0.10.0
libtpu: 0.0.40
codegen_flags: <defaults>
</compile_context>

<pallas_src>
import math
import functools

import jax
import jax.numpy as jnp
from jax import lax
from jax.experimental import pallas as pl
from jax.experimental.pallas import tpu as pltpu


# ----------------------------- in-kernel helpers -----------------------------

def _layernorm(x, gamma, beta, eps=1e-5):
    mu = jnp.mean(x, axis=-1, keepdims=True)
    var = jnp.mean(jnp.square(x - mu), axis=-1, keepdims=True)
    return (x - mu) * lax.rsqrt(var + eps) * gamma + beta


def _dot_t(a, w):
    # a [M, K] @ w[N, K]^T -> [M, N], f32 accumulation on the MXU
    return lax.dot_general(a, w, (((1,), (1,)), ((), ())),
                           preferred_element_type=jnp.float32)


# ------------------------- fused encoder-stack kernel -------------------------
# grid = (B // TB, L): one batch TILE per parallel step; all layers iterate on the
# last ("arbitrary") axis while the [TB, S, E] activation stays resident in o_ref.

def encoder_stack_kernel(x_ref,
                         wq_ref, wk_ref, wv_ref, bq_ref, bk_ref, bv_ref,
                         wo_ref, bo_ref,
                         w1_ref, b1_ref, w2_ref, b2_ref,
                         g1_ref, be1_ref, g2_ref, be2_ref,
                         o_ref, mask_ref, *, nhead):
    l = pl.program_id(1)
    TB, S, E = o_ref.shape
    H = nhead
    Dh = E // H

    @pl.when(l == 0)
    def _():
        # seed the resident activation (o_ref doubles as the layer-to-layer buffer)
        o_ref[...] = x_ref[...]
        # additive causal mask, built once per batch block
        row = lax.broadcasted_iota(jnp.int32, (S, S), 0)
        col = lax.broadcasted_iota(jnp.int32, (S, S), 1)
        mask_ref[...] = jnp.where(col <= row, 0.0, -1e30).astype(jnp.float32)

    # layer weights: DMA'd once per (layer, batch tile) -- shared by all TB rows below
    wq = wq_ref[0]; wk = wk_ref[0]; wv = wv_ref[0]; wo = wo_ref[0]
    w1 = w1_ref[0]; w2 = w2_ref[0]
    bq = bq_ref[0]; bk = bk_ref[0]; bv = bv_ref[0]
    bo = bo_ref[0]; b1 = b1_ref[0]; b2 = b2_ref[0]
    g1 = g1_ref[0]; be1 = be1_ref[0]; g2 = g2_ref[0]; be2 = be2_ref[0]
    mask = mask_ref[...]

    x_all = o_ref[...]                              # [TB, S, E] f32, VMEM-resident

    # Static unroll over the TB batch rows of this block (attention must not mix rows,
    # so the attention dots stay per-row / head-batched).
    for tb in range(TB):
        x = x_all[tb]                               # [S, E] f32
        xb = x.astype(jnp.bfloat16)                 # single bf16 copy reused by q/k/v

        def proj_t(w, b):
            # (W @ x^T + b) viewed head-major: [H, Dh, S] (cheap sublane split)
            t = lax.dot_general(w, xb, (((1,), (1,)), ((), ())),
                                preferred_element_type=jnp.float32)     # [E, S]
            return (t + b).reshape(H, Dh, S)

        qT = proj_t(wq, bq)                         # 1/sqrt(Dh) pre-folded into wq/bq
        kT = proj_t(wk, bk)
        vT = proj_t(wv, bv)

        # scores[h, i, j] = q_h(i) . k_h(j)  -- one head-batched MXU call
        s = lax.dot_general(qT.astype(jnp.bfloat16), kT.astype(jnp.bfloat16),
                            (((1,), (1,)), ((0,), (0,))),
                            preferred_element_type=jnp.float32)         # [H, S, S]
        s = s + mask                                 # precomputed additive causal mask
        s = s - jnp.max(s, axis=-1, keepdims=True)
        p = jnp.exp(s)
        p = p * pl.reciprocal(jnp.sum(p, axis=-1, keepdims=True), approx=True)

        # ctx^T[h, d, i] = sum_j v^T[h, d, j] * p[h, i, j]
        ctxT = lax.dot_general(vT.astype(jnp.bfloat16), p.astype(jnp.bfloat16),
                               (((2,), (2,)), ((0,), (0,))),
                               preferred_element_type=jnp.float32)      # [H, Dh, S]
        ctxE = ctxT.reshape(E, S)                    # concat heads = sublane merge

        # merged output projection: single K=E MXU-dense matmul against original w_o
        attn = lax.dot_general(ctxE.astype(jnp.bfloat16), wo,
                               (((0,), (1,)), ((), ())),
                               preferred_element_type=jnp.float32) + bo  # [S, E]

        # residual + norm1 (post-norm; dropout == identity)
        y = _layernorm(x + attn, g1, be1)

        # feed-forward (relu)
        yb = y.astype(jnp.bfloat16)
        h1 = jnp.maximum(_dot_t(yb, w1) + b1, 0.0)
        ff = _dot_t(h1.astype(jnp.bfloat16), w2) + b2
        z = _layernorm(y + ff, g2, be2)

        o_ref[tb] = z


def _vmem_budget(TB, S, E, F, H):
    # double-buffered bf16 layer weights + f32 biases/norm params
    w = 2 * ((4 * E * E + 2 * E * F) * 2 + (9 * E + F) * 4)
    # resident activation block (in + out) + per-row attention / FFN intermediates
    act = 3 * TB * S * E * 4
    inter = 3 * H * S * S * 4 + 6 * E * S * 4 + 2 * S * F * 4 + S * S * 4
    est = w + act + inter + (1 << 20)
    # v7x has only 64 MiB physical VMEM; keep the scoped limit comfortably below it.
    return int(min(max(est, 32 << 20), 56 << 20))


def run_encoder_stack(x, sp, *, nhead, batch_tile=None):
    """x: [B, S, E] f32.  sp: stacked per-layer params (leading L axis)."""
    B, S, E = x.shape
    L = sp["wq"].shape[0]
    F = sp["w1"].shape[1]
    Dh = E // nhead
    assert nhead * Dh == E
    # head-major reshape [E, S] -> [H, Dh, S] is only a cheap sublane split if Dh % 8 == 0
    assert Dh % 8 == 0, "head_dim must be a multiple of 8"

    # TB batch rows share one weight fetch per layer (weight HBM traffic / TB).
    TB = B if batch_tile is None else max(1, min(batch_tile, B))
    assert B % TB == 0, "batch must be divisible by the batch tile"
    nb = B // TB

    wmap = lambda b, l: (l, 0, 0)

    return pl.pallas_call(
        functools.partial(encoder_stack_kernel, nhead=nhead),
        out_shape=jax.ShapeDtypeStruct((B, S, E), jnp.float32),
        grid=(nb, L),
        in_specs=[
            pl.BlockSpec((TB, S, E), lambda b, l: (b, 0, 0)),   # x (fetched once per tile)
            pl.BlockSpec((1, E, E), wmap),                      # wq (scale pre-folded)
            pl.BlockSpec((1, E, E), wmap),                      # wk
            pl.BlockSpec((1, E, E), wmap),                      # wv
            pl.BlockSpec((1, E, 1), wmap),                      # bq (scale pre-folded)
            pl.BlockSpec((1, E, 1), wmap),                      # bk
            pl.BlockSpec((1, E, 1), wmap),                      # bv
            pl.BlockSpec((1, E, E), wmap),                      # wo (original [E, E])
            pl.BlockSpec((1, 1, E), wmap),                      # bo (lane-dense)
            pl.BlockSpec((1, F, E), wmap),                      # w1
            pl.BlockSpec((1, 1, F), wmap),                      # b1
            pl.BlockSpec((1, E, F), wmap),                      # w2
            pl.BlockSpec((1, 1, E), wmap),                      # b2
            pl.BlockSpec((1, 1, E), wmap),                      # norm1 gamma
            pl.BlockSpec((1, 1, E), wmap),                      # norm1 beta
            pl.BlockSpec((1, 1, E), wmap),                      # norm2 gamma
            pl.BlockSpec((1, 1, E), wmap),                      # norm2 beta
        ],
        out_specs=pl.BlockSpec((TB, S, E), lambda b, l: (b, 0, 0)),
        scratch_shapes=[pltpu.VMEM((S, S), jnp.float32)],       # additive causal mask
        compiler_params=pltpu.CompilerParams(
            dimension_semantics=("parallel", "arbitrary"),
            vmem_limit_bytes=_vmem_budget(TB, S, E, F, nhead)),
    )(x,
      sp["wq"], sp["wk"], sp["wv"], sp["bq"], sp["bk"], sp["bv"],
      sp["wo"], sp["bo"],
      sp["w1"], sp["b1"], sp["w2"], sp["b2"],
      sp["g1"], sp["be1"], sp["g2"], sp["be2"])


# ------------------------------ generator kernel ------------------------------
# Vocab padded to a multiple of the (wide, lane-dense) vocab tile.

def generator_kernel(x_ref, w_ref, b_ref, o_ref):
    xb = x_ref[...].astype(jnp.bfloat16)
    o_ref[...] = _dot_t(xb, w_ref[...]) + b_ref[...]


def run_generator(x2d, w_pad, b_pad, *, tile_v=512):
    # TODO(synk): also tile the row axis when S*B is large (cap tiles for v7x VMEM).
    N, E = x2d.shape
    Vp = w_pad.shape[0]
    tile_v = min(tile_v, Vp)
    assert Vp % tile_v == 0
    return pl.pallas_call(
        generator_kernel,
        out_shape=jax.ShapeDtypeStruct((N, Vp), jnp.float32),
        grid=(Vp // tile_v,),
        in_specs=[
            pl.BlockSpec((N, E), lambda v: (0, 0)),
            pl.BlockSpec((tile_v, E), lambda v: (v, 0)),
            pl.BlockSpec((1, tile_v), lambda v: (0, v)),
        ],
        out_specs=pl.BlockSpec((N, tile_v), lambda v: (0, v)),
        compiler_params=pltpu.CompilerParams(dimension_semantics=("parallel",)),
    )(x2d, w_pad, b_pad)


# ------------------------------ parameter setup -------------------------------

def make_positional_encoding(d_model, max_len):
    position = jnp.arange(max_len, dtype=jnp.float32)[:, None]
    div_term = jnp.exp(jnp.arange(0, d_model, 2, dtype=jnp.float32)
                       * (-math.log(10000.0) / d_model))
    pe = jnp.zeros((max_len, 1, d_model), jnp.float32)
    pe = pe.at[:, 0, 0::2].set(jnp.sin(position * div_term))
    pe = pe.at[:, 0, 1::2].set(jnp.cos(position * div_term))
    return pe


def init_params(key, num_tokens, d_model, nhead, dim_ff, num_layers,
                max_len=64, gen_tile_v=512):
    E, F, H = d_model, dim_ff, nhead
    Dh = E // H
    initrange = 0.1
    keys = jax.random.split(key, 2 + num_layers)

    def u(k, shape, fan_in):
        lim = 1.0 / math.sqrt(fan_in)
        return jax.random.uniform(k, shape, jnp.float32, -lim, lim)

    names = ["wq", "wk", "wv", "bq", "bk", "bv", "wo", "bo",
             "w1", "b1", "w2", "b2", "g1", "be1", "g2", "be2"]
    acc = {n: [] for n in names}
    q_scale = 1.0 / math.sqrt(Dh)          # PyTorch MHA scales q before q @ k^T
    for l in range(num_layers):
        k = jax.random.split(keys[2 + l], 8)
        w_in = u(k[0], (3 * E, E), E)      # packed in_proj weight (PyTorch layout)
        b_in = u(k[1], (3 * E,), E)
        acc["wq"].append(w_in[0:E] * q_scale)
        acc["bq"].append(b_in[0:E, None] * q_scale)
        acc["wk"].append(w_in[E:2 * E]);   acc["bk"].append(b_in[E:2 * E, None])
        acc["wv"].append(w_in[2 * E:]);    acc["bv"].append(b_in[2 * E:, None])
        acc["wo"].append(u(k[2], (E, E), E))            # out_proj kept as [E, E]
        acc["bo"].append(u(k[3], (1, E), E))
        acc["w1"].append(u(k[4], (F, E), E)); acc["b1"].append(u(k[5], (1, F), E))
        acc["w2"].append(u(k[6], (E, F), F)); acc["b2"].append(u(k[7], (1, E), F))
        acc["g1"].append(jnp.ones((1, E), jnp.float32))
        acc["be1"].append(jnp.zeros((1, E), jnp.float32))
        acc["g2"].append(jnp.ones((1, E), jnp.float32))
        acc["be2"].append(jnp.zeros((1, E), jnp.float32))

    bf16_names = {"wq", "wk", "wv", "wo", "w1", "w2"}
    stack = {n: jnp.stack(v).astype(jnp.bfloat16 if n in bf16_names else jnp.float32)
             for n, v in acc.items()}

    # generator, vocab padded to a lane-dense multiple of the vocab tile
    Vp = ((num_tokens + gen_tile_v - 1) // gen_tile_v) * gen_tile_v
    gw = jax.random.uniform(keys[1], (num_tokens, E), jnp.float32, -initrange, initrange)
    gen_w = jnp.zeros((Vp, E), jnp.bfloat16).at[:num_tokens].set(gw.astype(jnp.bfloat16))

    return {
        "nhead": nhead,
        "num_tokens": num_tokens,
        "emb": jax.random.uniform(keys[0], (num_tokens, E), jnp.float32,
                                  -initrange, initrange),
        "pe": make_positional_encoding(E, max_len),
        "stack": stack,
        "gen_w": gen_w,
        "gen_b": jnp.zeros((1, Vp), jnp.float32),
    }


# ------------------------------- model forward --------------------------------

def model_forward(params, src_tokens, src_mask=None):
    """src_tokens: int32 [S, B] (batch_first=False).  Returns logits [S, B, num_tokens].
    src_mask is assumed to be the standard causal mask and is generated in-kernel."""
    del src_mask
    S, B = src_tokens.shape
    E = params["emb"].shape[1]
    V = params["num_tokens"]

    # embedding * sqrt(d_model) + positional encoding (gather-dominated XLA glue)
    x = jnp.take(params["emb"], src_tokens, axis=0) * math.sqrt(E)     # [S, B, E]
    x = x + params["pe"][:S]
    x = jnp.transpose(x, (1, 0, 2))                                    # [B, S, E]

    x = run_encoder_stack(x, params["stack"], nhead=params["nhead"])   # fused L layers

    x = jnp.transpose(x, (1, 0, 2)).reshape(S * B, E)                  # [S*B, E]
    logits = run_generator(x, params["gen_w"], params["gen_b"])        # [S*B, Vp]
    return logits[:, :V].reshape(S, B, V)


# ------------------------------------ main -------------------------------------

if __name__ == "__main__":
    num_tokens, d_model, num_heads, dim_ff, num_layers = 50, 32, 4, 64, 2
    S, B = 8, 2

    key = jax.random.PRNGKey(0)
    pkey, tkey = jax.random.split(key)
    params = init_params(pkey, num_tokens, d_model, num_heads, dim_ff, num_layers)

    src = jax.random.randint(tkey, (S, B), 0, num_tokens, dtype=jnp.int32)

    out = model_forward(params, src)
    out = jax.block_until_ready(out)

    assert out.shape == (S, B, num_tokens)
    assert bool(jnp.all(jnp.isfinite(out)))
    print("KERNEL_OK")
</pallas_src>

<mosaic_0001>
module attributes {stable_mosaic.version = 11 : i64} {
  func.func @encoder_stack_kernel(%arg0: i32, %arg1: i32, %arg2: memref<2x8x32xf32, #tpu.memory_space<vmem>>, %arg3: memref<1x32x32xbf16, #tpu.memory_space<vmem>>, %arg4: memref<1x32x32xbf16, #tpu.memory_space<vmem>>, %arg5: memref<1x32x32xbf16, #tpu.memory_space<vmem>>, %arg6: memref<1x32x1xf32, #tpu.memory_space<vmem>>, %arg7: memref<1x32x1xf32, #tpu.memory_space<vmem>>, %arg8: memref<1x32x1xf32, #tpu.memory_space<vmem>>, %arg9: memref<1x32x32xbf16, #tpu.memory_space<vmem>>, %arg10: memref<1x1x32xf32, #tpu.memory_space<vmem>>, %arg11: memref<1x64x32xbf16, #tpu.memory_space<vmem>>, %arg12: memref<1x1x64xf32, #tpu.memory_space<vmem>>, %arg13: memref<1x32x64xbf16, #tpu.memory_space<vmem>>, %arg14: memref<1x1x32xf32, #tpu.memory_space<vmem>>, %arg15: memref<1x1x32xf32, #tpu.memory_space<vmem>>, %arg16: memref<1x1x32xf32, #tpu.memory_space<vmem>>, %arg17: memref<1x1x32xf32, #tpu.memory_space<vmem>>, %arg18: memref<1x1x32xf32, #tpu.memory_space<vmem>>, %arg19: memref<2x8x32xf32, #tpu.memory_space<vmem>>, %arg20: memref<8x8xf32, #tpu.memory_space<vmem>>) attributes {dimension_semantics = [#tpu.dimension_semantics<parallel>, #tpu.dimension_semantics<arbitrary>], iteration_bounds = array<i64: 1, 2>, scalar_prefetch = 0 : i64, scratch_operands = 1 : i64, tpu.core_type = #tpu.core_type<tc>, window_params = [{transform_indices = @transform_0, window_bounds = array<i64: 2, 8, 32>}, {transform_indices = @transform_1, window_bounds = array<i64: 1, 32, 32>}, {transform_indices = @transform_2, window_bounds = array<i64: 1, 32, 32>}, {transform_indices = @transform_3, window_bounds = array<i64: 1, 32, 32>}, {transform_indices = @transform_4, window_bounds = array<i64: 1, 32, 1>}, {transform_indices = @transform_5, window_bounds = array<i64: 1, 32, 1>}, {transform_indices = @transform_6, window_bounds = array<i64: 1, 32, 1>}, {transform_indices = @transform_7, window_bounds = array<i64: 1, 32, 32>}, {transform_indices = @transform_8, window_bounds = array<i64: 1, 1, 32>}, {transform_indices = @transform_9, window_bounds = array<i64: 1, 64, 32>}, {transform_indices = @transform_10, window_bounds = array<i64: 1, 1, 64>}, {transform_indices = @transform_11, window_bounds = array<i64: 1, 32, 64>}, {transform_indices = @transform_12, window_bounds = array<i64: 1, 1, 32>}, {transform_indices = @transform_13, window_bounds = array<i64: 1, 1, 32>}, {transform_indices = @transform_14, window_bounds = array<i64: 1, 1, 32>}, {transform_indices = @transform_15, window_bounds = array<i64: 1, 1, 32>}, {transform_indices = @transform_16, window_bounds = array<i64: 1, 1, 32>}, {transform_indices = @transform_17, window_bounds = array<i64: 2, 8, 32>}]} {
    %c0_i32 = arith.constant 0 : i32
    %0 = arith.cmpi eq, %arg1, %c0_i32 : i32
    %1 = arith.extui %0 : i1 to i32
    %c0_i32_0 = arith.constant 0 : i32
    %2 = arith.cmpi ne, %1, %c0_i32_0 : i32
    scf.if %2 {
      %c0_99 = arith.constant 0 : index
      %c0_100 = arith.constant 0 : index
      %c0_101 = arith.constant 0 : index
      %233 = vector.load %arg2[%c0_99, %c0_100, %c0_101] : memref<2x8x32xf32, #tpu.memory_space<vmem>>, vector<2x8x32xf32>
      %c0_102 = arith.constant 0 : index
      %c0_103 = arith.constant 0 : index
      %c0_104 = arith.constant 0 : index
      %234 = vector.load %arg19[%c0_102, %c0_103, %c0_104] : memref<2x8x32xf32, #tpu.memory_space<vmem>>, vector<2x8x32xf32>
      tpu.vector_store %arg19[%c0_102, %c0_103, %c0_104], %233 {strides = array<i32>} : memref<2x8x32xf32, #tpu.memory_space<vmem>>, vector<2x8x32xf32>,
      %235 = tpu.iota {dimensions = array<i32: 0>} : vector<8x8xi32>
      %236 = tpu.iota {dimensions = array<i32: 1>} : vector<8x8xi32>
      %237 = arith.cmpi sle, %236, %235 : vector<8x8xi32>
      %cst_105 = arith.constant 0.000000e+00 : f32
      %cst_106 = arith.constant -1.000000e+30 : f32
      %238 = vector.broadcast %cst_105 : f32 to vector<8x8xf32>
      %239 = vector.broadcast %cst_106 : f32 to vector<8x8xf32>
      %240 = arith.select %237, %238, %239 : vector<8x8xi1>, vector<8x8xf32>
      %c0_107 = arith.constant 0 : index
      %c0_108 = arith.constant 0 : index
      %241 = vector.load %arg20[%c0_107, %c0_108] : memref<8x8xf32, #tpu.memory_space<vmem>>, vector<8x8xf32>
      tpu.vector_store %arg20[%c0_107, %c0_108], %240 {strides = array<i32>} : memref<8x8xf32, #tpu.memory_space<vmem>>, vector<8x8xf32>,
    } else {
    }
    %c0 = arith.constant 0 : index
    %c0_1 = arith.constant 0 : index
    %c0_2 = arith.constant 0 : index
    %3 = vector.load %arg3[%c0, %c0_1, %c0_2] : memref<1x32x32xbf16, #tpu.memory_space<vmem>>, vector<1x32x32xbf16>
    %4 = vector.shape_cast %3 : vector<1x32x32xbf16> to vector<32x32xbf16>
    %c0_3 = arith.constant 0 : index
    %c0_4 = arith.constant 0 : index
    %c0_5 = arith.constant 0 : index
    %5 = vector.load %arg4[%c0_3, %c0_4, %c0_5] : memref<1x32x32xbf16, #tpu.memory_space<vmem>>, vector<1x32x32xbf16>
    %6 = vector.shape_cast %5 : vector<1x32x32xbf16> to vector<32x32xbf16>
    %c0_6 = arith.constant 0 : index
    %c0_7 = arith.constant 0 : index
    %c0_8 = arith.constant 0 : index
    %7 = vector.load %arg5[%c0_6, %c0_7, %c0_8] : memref<1x32x32xbf16, #tpu.memory_space<vmem>>, vector<1x32x32xbf16>
    %8 = vector.shape_cast %7 : vector<1x32x32xbf16> to vector<32x32xbf16>
    %c0_9 = arith.constant 0 : index
    %c0_10 = arith.constant 0 : index
    %c0_11 = arith.constant 0 : index
    %9 = vector.load %arg9[%c0_9, %c0_10, %c0_11] : memref<1x32x32xbf16, #tpu.memory_space<vmem>>, vector<1x32x32xbf16>
    %10 = vector.shape_cast %9 : vector<1x32x32xbf16> to vector<32x32xbf16>
    %c0_12 = arith.constant 0 : index
    %c0_13 = arith.constant 0 : index
    %c0_14 = arith.constant 0 : index
    %11 = vector.load %arg11[%c0_12, %c0_13, %c0_14] : memref<1x64x32xbf16, #tpu.memory_space<vmem>>, vector<1x64x32xbf16>
    %12 = vector.shape_cast %11 : vector<1x64x32xbf16> to vector<64x32xbf16>
    %c0_15 = arith.constant 0 : index
    %c0_16 = arith.constant 0 : index
    %c0_17 = arith.constant 0 : index
    %13 = vector.load %arg13[%c0_15, %c0_16, %c0_17] : memref<1x32x64xbf16, #tpu.memory_space<vmem>>, vector<1x32x64xbf16>
    %14 = vector.shape_cast %13 : vector<1x32x64xbf16> to vector<32x64xbf16>
    %c0_18 = arith.constant 0 : index
    %c0_19 = arith.constant 0 : index
    %c0_20 = arith.constant 0 : index
    %15 = vector.load %arg6[%c0_18, %c0_19, %c0_20] : memref<1x32x1xf32, #tpu.memory_space<vmem>>, vector<1x32x1xf32>
    %16 = vector.shape_cast %15 : vector<1x32x1xf32> to vector<32x1xf32>
    %c0_21 = arith.constant 0 : index
    %c0_22 = arith.constant 0 : index
    %c0_23 = arith.constant 0 : index
    %17 = vector.load %arg7[%c0_21, %c0_22, %c0_23] : memref<1x32x1xf32, #tpu.memory_space<vmem>>, vector<1x32x1xf32>
    %18 = vector.shape_cast %17 : vector<1x32x1xf32> to vector<32x1xf32>
    %c0_24 = arith.constant 0 : index
    %c0_25 = arith.constant 0 : index
    %c0_26 = arith.constant 0 : index
    %19 = vector.load %arg8[%c0_24, %c0_25, %c0_26] : memref<1x32x1xf32, #tpu.memory_space<vmem>>, vector<1x32x1xf32>
    %20 = vector.shape_cast %19 : vector<1x32x1xf32> to vector<32x1xf32>
    %c0_27 = arith.constant 0 : index
    %c0_28 = arith.constant 0 : index
    %c0_29 = arith.constant 0 : index
    %21 = vector.load %arg10[%c0_27, %c0_28, %c0_29] : memref<1x1x32xf32, #tpu.memory_space<vmem>>, vector<1x1x32xf32>
    %22 = vector.shape_cast %21 : vector<1x1x32xf32> to vector<1x32xf32>
    %c0_30 = arith.constant 0 : index
    %c0_31 = arith.constant 0 : index
    %c0_32 = arith.constant 0 : index
    %23 = vector.load %arg12[%c0_30, %c0_31, %c0_32] : memref<1x1x64xf32, #tpu.memory_space<vmem>>, vector<1x1x64xf32>
    %24 = vector.shape_cast %23 : vector<1x1x64xf32> to vector<1x64xf32>
    %c0_33 = arith.constant 0 : index
    %c0_34 = arith.constant 0 : index
    %c0_35 = arith.constant 0 : index
    %25 = vector.load %arg14[%c0_33, %c0_34, %c0_35] : memref<1x1x32xf32, #tpu.memory_space<vmem>>, vector<1x1x32xf32>
    %26 = vector.shape_cast %25 : vector<1x1x32xf32> to vector<1x32xf32>
    %c0_36 = arith.constant 0 : index
    %c0_37 = arith.constant 0 : index
    %c0_38 = arith.constant 0 : index
    %27 = vector.load %arg15[%c0_36, %c0_37, %c0_38] : memref<1x1x32xf32, #tpu.memory_space<vmem>>, vector<1x1x32xf32>
    %28 = vector.shape_cast %27 : vector<1x1x32xf32> to vector<1x32xf32>
    %c0_39 = arith.constant 0 : index
    %c0_40 = arith.constant 0 : index
    %c0_41 = arith.constant 0 : index
    %29 = vector.load %arg16[%c0_39, %c0_40, %c0_41] : memref<1x1x32xf32, #tpu.memory_space<vmem>>, vector<1x1x32xf32>
    %30 = vector.shape_cast %29 : vector<1x1x32xf32> to vector<1x32xf32>
    %c0_42 = arith.constant 0 : index
    %c0_43 = arith.constant 0 : index
    %c0_44 = arith.constant 0 : index
    %31 = vector.load %arg17[%c0_42, %c0_43, %c0_44] : memref<1x1x32xf32, #tpu.memory_space<vmem>>, vector<1x1x32xf32>
    %32 = vector.shape_cast %31 : vector<1x1x32xf32> to vector<1x32xf32>
    %c0_45 = arith.constant 0 : index
    %c0_46 = arith.constant 0 : index
    %c0_47 = arith.constant 0 : index
    %33 = vector.load %arg18[%c0_45, %c0_46, %c0_47] : memref<1x1x32xf32, #tpu.memory_space<vmem>>, vector<1x1x32xf32>
    %34 = vector.shape_cast %33 : vector<1x1x32xf32> to vector<1x32xf32>
    %c0_48 = arith.constant 0 : index
    %c0_49 = arith.constant 0 : index
    %35 = vector.load %arg20[%c0_48, %c0_49] : memref<8x8xf32, #tpu.memory_space<vmem>>, vector<8x8xf32>
    %c0_50 = arith.constant 0 : index
    %c0_51 = arith.constant 0 : index
    %c0_52 = arith.constant 0 : index
    %36 = vector.load %arg19[%c0_50, %c0_51, %c0_52] : memref<2x8x32xf32, #tpu.memory_space<vmem>>, vector<2x8x32xf32>
    %37 = vector.extract_strided_slice %36 {offsets = [0, 0, 0], sizes = [1, 8, 32], strides = [1, 1, 1]} : vector<2x8x32xf32> to vector<1x8x32xf32>
    %38 = vector.shape_cast %37 : vector<1x8x32xf32> to vector<8x32xf32>
    %39 = arith.truncf %38 : vector<8x32xf32> to vector<8x32xbf16>
    %cst = arith.constant dense<0.000000e+00> : vector<32x8xf32>
    %40 = tpu.matmul %4, %39, %cst {dimension_numbers = #tpu.dot_dimension_numbers<[1], [1], [0], [0], [0, 0, 1, 0], [], []>} : vector<32x32xbf16>, vector<8x32xbf16>, vector<32x8xf32> -> vector<32x8xf32>
    %41 = vector.broadcast %16 : vector<32x1xf32> to vector<32x8xf32>
    %42 = arith.addf %40, %41 : vector<32x8xf32>
    %43 = vector.shape_cast %42 : vector<32x8xf32> to vector<4x8x8xf32>
    %cst_53 = arith.constant dense<0.000000e+00> : vector<32x8xf32>
    %44 = tpu.matmul %6, %39, %cst_53 {dimension_numbers = #tpu.dot_dimension_numbers<[1], [1], [0], [0], [0, 0, 1, 0], [], []>} : vector<32x32xbf16>, vector<8x32xbf16>, vector<32x8xf32> -> vector<32x8xf32>
    %45 = vector.broadcast %18 : vector<32x1xf32> to vector<32x8xf32>
    %46 = arith.addf %44, %45 : vector<32x8xf32>
    %47 = vector.shape_cast %46 : vector<32x8xf32> to vector<4x8x8xf32>
    %cst_54 = arith.constant dense<0.000000e+00> : vector<32x8xf32>
    %48 = tpu.matmul %8, %39, %cst_54 {dimension_numbers = #tpu.dot_dimension_numbers<[1], [1], [0], [0], [0, 0, 1, 0], [], []>} : vector<32x32xbf16>, vector<8x32xbf16>, vector<32x8xf32> -> vector<32x8xf32>
    %49 = vector.broadcast %20 : vector<32x1xf32> to vector<32x8xf32>
    %50 = arith.addf %48, %49 : vector<32x8xf32>
    %51 = vector.shape_cast %50 : vector<32x8xf32> to vector<4x8x8xf32>
    %52 = arith.truncf %43 : vector<4x8x8xf32> to vector<4x8x8xbf16>
    %53 = arith.truncf %47 : vector<4x8x8xf32> to vector<4x8x8xbf16>
    %cst_55 = arith.constant dense<0.000000e+00> : vector<4x8x8xf32>
    %54 = tpu.matmul %52, %53, %cst_55 {dimension_numbers = #tpu.dot_dimension_numbers<[1], [1], [2], [2], [0, 0, 0, 2, 1, 2], [0], [0]>} : vector<4x8x8xbf16>, vector<4x8x8xbf16>, vector<4x8x8xf32> -> vector<4x8x8xf32>
    %55 = vector.shape_cast %35 : vector<8x8xf32> to vector<1x8x8xf32>
    %56 = vector.broadcast %55 : vector<1x8x8xf32> to vector<4x8x8xf32>
    %57 = arith.addf %54, %56 : vector<4x8x8xf32>
    %cst_56 = arith.constant dense<0xFF800000> : vector<4x8xf32>
    %58 = vector.multi_reduction <maximumf>, %57, %cst_56 [2] : vector<4x8x8xf32> to vector<4x8xf32>
    %59 = vector.shape_cast %58 : vector<4x8xf32> to vector<4x8x1xf32>
    %60 = vector.broadcast %59 : vector<4x8x1xf32> to vector<4x8x8xf32>
    %61 = arith.subf %57, %60 : vector<4x8x8xf32>
    %62 = math.exp %61 : vector<4x8x8xf32>
    %cst_57 = arith.constant dense<0.000000e+00> : vector<4x8xf32>
    %63 = vector.multi_reduction <add>, %62, %cst_57 [2] : vector<4x8x8xf32> to vector<4x8xf32>
    %64 = vector.shape_cast %63 : vector<4x8xf32> to vector<4x8x1xf32>
    %65 = tpu.reciprocal %64 {approx = true} : vector<4x8x1xf32> -> vector<4x8x1xf32>
    %66 = vector.broadcast %65 : vector<4x8x1xf32> to vector<4x8x8xf32>
    %67 = arith.mulf %62, %66 : vector<4x8x8xf32>
    %68 = arith.truncf %51 : vector<4x8x8xf32> to vector<4x8x8xbf16>
    %69 = arith.truncf %67 : vector<4x8x8xf32> to vector<4x8x8xbf16>
    %cst_58 = arith.constant dense<0.000000e+00> : vector<4x8x8xf32>
    %70 = tpu.matmul %68, %69, %cst_58 {dimension_numbers = #tpu.dot_dimension_numbers<[2], [2], [1], [1], [0, 0, 0, 1, 1, 1], [0], [0]>} : vector<4x8x8xbf16>, vector<4x8x8xbf16>, vector<4x8x8xf32> -> vector<4x8x8xf32>
    %71 = vector.shape_cast %70 : vector<4x8x8xf32> to vector<32x8xf32>
    %72 = arith.truncf %71 : vector<32x8xf32> to vector<32x8xbf16>
    %cst_59 = arith.constant dense<0.000000e+00> : vector<8x32xf32>
    %73 = tpu.matmul %72, %10, %cst_59 {dimension_numbers = #tpu.dot_dimension_numbers<[0], [1], [1], [0], [0, 1, 1, 0], [], []>} : vector<32x8xbf16>, vector<32x32xbf16>, vector<8x32xf32> -> vector<8x32xf32>
    %74 = vector.broadcast %22 : vector<1x32xf32> to vector<8x32xf32>
    %75 = arith.addf %73, %74 : vector<8x32xf32>
    %76 = arith.addf %38, %75 : vector<8x32xf32>
    %cst_60 = arith.constant dense<0.000000e+00> : vector<8xf32>
    %77 = vector.multi_reduction <add>, %76, %cst_60 [1] : vector<8x32xf32> to vector<8xf32>
    %78 = vector.shape_cast %77 : vector<8xf32> to vector<8x1xf32>
    %cst_61 = arith.constant 3.200000e+01 : f32
    %79 = vector.broadcast %cst_61 : f32 to vector<8x1xf32>
    %80 = arith.divf %78, %79 : vector<8x1xf32>
    %81 = vector.broadcast %80 : vector<8x1xf32> to vector<8x32xf32>
    %82 = arith.subf %76, %81 : vector<8x32xf32>
    %83 = arith.mulf %82, %82 : vector<8x32xf32>
    %cst_62 = arith.constant dense<0.000000e+00> : vector<8xf32>
    %84 = vector.multi_reduction <add>, %83, %cst_62 [1] : vector<8x32xf32> to vector<8xf32>
    %85 = vector.shape_cast %84 : vector<8xf32> to vector<8x1xf32>
    %cst_63 = arith.constant 3.200000e+01 : f32
    %86 = vector.broadcast %cst_63 : f32 to vector<8x1xf32>
    %87 = arith.divf %85, %86 : vector<8x1xf32>
    %88 = vector.broadcast %80 : vector<8x1xf32> to vector<8x32xf32>
    %89 = arith.subf %76, %88 : vector<8x32xf32>
    %cst_64 = arith.constant 9.99999974E-6 : f32
    %90 = vector.broadcast %cst_64 : f32 to vector<8x1xf32>
    %91 = arith.addf %87, %90 : vector<8x1xf32>
    %92 = math.rsqrt %91 : vector<8x1xf32>
    %93 = vector.broadcast %92 : vector<8x1xf32> to vector<8x32xf32>
    %94 = arith.mulf %89, %93 : vector<8x32xf32>
    %95 = vector.broadcast %28 : vector<1x32xf32> to vector<8x32xf32>
    %96 = arith.mulf %94, %95 : vector<8x32xf32>
    %97 = vector.broadcast %30 : vector<1x32xf32> to vector<8x32xf32>
    %98 = arith.addf %96, %97 : vector<8x32xf32>
    %99 = arith.truncf %98 : vector<8x32xf32> to vector<8x32xbf16>
    %cst_65 = arith.constant dense<0.000000e+00> : vector<8x64xf32>
    %100 = tpu.matmul %99, %12, %cst_65 {dimension_numbers = #tpu.dot_dimension_numbers<[1], [1], [0], [0], [0, 0, 1, 0], [], []>} : vector<8x32xbf16>, vector<64x32xbf16>, vector<8x64xf32> -> vector<8x64xf32>
    %101 = vector.broadcast %24 : vector<1x64xf32> to vector<8x64xf32>
    %102 = arith.addf %100, %101 : vector<8x64xf32>
    %cst_66 = arith.constant 0.000000e+00 : f32
    %103 = vector.broadcast %cst_66 : f32 to vector<8x64xf32>
    %104 = arith.maximumf %102, %103 : vector<8x64xf32>
    %105 = arith.truncf %104 : vector<8x64xf32> to vector<8x64xbf16>
    %cst_67 = arith.constant dense<0.000000e+00> : vector<8x32xf32>
    %106 = tpu.matmul %105, %14, %cst_67 {dimension_numbers = #tpu.dot_dimension_numbers<[1], [1], [0], [0], [0, 0, 1, 0], [], []>} : vector<8x64xbf16>, vector<32x64xbf16>, vector<8x32xf32> -> vector<8x32xf32>
    %107 = vector.broadcast %26 : vector<1x32xf32> to vector<8x32xf32>
    %108 = arith.addf %106, %107 : vector<8x32xf32>
    %109 = arith.addf %98, %108 : vector<8x32xf32>
    %cst_68 = arith.constant dense<0.000000e+00> : vector<8xf32>
    %110 = vector.multi_reduction <add>, %109, %cst_68 [1] : vector<8x32xf32> to vector<8xf32>
    %111 = vector.shape_cast %110 : vector<8xf32> to vector<8x1xf32>
    %cst_69 = arith.constant 3.200000e+01 : f32
    %112 = vector.broadcast %cst_69 : f32 to vector<8x1xf32>
    %113 = arith.divf %111, %112 : vector<8x1xf32>
    %114 = vector.broadcast %113 : vector<8x1xf32> to vector<8x32xf32>
    %115 = arith.subf %109, %114 : vector<8x32xf32>
    %116 = arith.mulf %115, %115 : vector<8x32xf32>
    %cst_70 = arith.constant dense<0.000000e+00> : vector<8xf32>
    %117 = vector.multi_reduction <add>, %116, %cst_70 [1] : vector<8x32xf32> to vector<8xf32>
    %118 = vector.shape_cast %117 : vector<8xf32> to vector<8x1xf32>
    %cst_71 = arith.constant 3.200000e+01 : f32
    %119 = vector.broadcast %cst_71 : f32 to vector<8x1xf32>
    %120 = arith.divf %118, %119 : vector<8x1xf32>
    %121 = vector.broadcast %113 : vector<8x1xf32> to vector<8x32xf32>
    %122 = arith.subf %109, %121 : vector<8x32xf32>
    %cst_72 = arith.constant 9.99999974E-6 : f32
    %123 = vector.broadcast %cst_72 : f32 to vector<8x1xf32>
    %124 = arith.addf %120, %123 : vector<8x1xf32>
    %125 = math.rsqrt %124 : vector<8x1xf32>
    %126 = vector.broadcast %125 : vector<8x1xf32> to vector<8x32xf32>
    %127 = arith.mulf %122, %126 : vector<8x32xf32>
    %128 = vector.broadcast %32 : vector<1x32xf32> to vector<8x32xf32>
    %129 = arith.mulf %127, %128 : vector<8x32xf32>
    %130 = vector.broadcast %34 : vector<1x32xf32> to vector<8x32xf32>
    %131 = arith.addf %129, %130 : vector<8x32xf32>
    %c0_73 = arith.constant 0 : index
    %c0_74 = arith.constant 0 : index
    %c0_75 = arith.constant 0 : index
    %132 = vector.load %arg19[%c0_73, %c0_74, %c0_75] : memref<2x8x32xf32, #tpu.memory_space<vmem>>, vector<1x8x32xf32>
    %133 = vector.shape_cast %132 : vector<1x8x32xf32> to vector<8x32xf32>
    %134 = vector.shape_cast %131 : vector<8x32xf32> to vector<1x8x32xf32>
    tpu.vector_store %arg19[%c0_73, %c0_74, %c0_75], %134 {strides = array<i32>} : memref<2x8x32xf32, #tpu.memory_space<vmem>>, vector<1x8x32xf32>,
    %135 = vector.extract_strided_slice %36 {offsets = [1, 0, 0], sizes = [1, 8, 32], strides = [1, 1, 1]} : vector<2x8x32xf32> to vector<1x8x32xf32>
    %136 = vector.shape_cast %135 : vector<1x8x32xf32> to vector<8x32xf32>
    %137 = arith.truncf %136 : vector<8x32xf32> to vector<8x32xbf16>
    %cst_76 = arith.constant dense<0.000000e+00> : vector<32x8xf32>
    %138 = tpu.matmul %4, %137, %cst_76 {dimension_numbers = #tpu.dot_dimension_numbers<[1], [1], [0], [0], [0, 0, 1, 0], [], []>} : vector<32x32xbf16>, vector<8x32xbf16>, vector<32x8xf32> -> vector<32x8xf32>
    %139 = vector.broadcast %16 : vector<32x1xf32> to vector<32x8xf32>
    %140 = arith.addf %138, %139 : vector<32x8xf32>
    %141 = vector.shape_cast %140 : vector<32x8xf32> to vector<4x8x8xf32>
    %cst_77 = arith.constant dense<0.000000e+00> : vector<32x8xf32>
    %142 = tpu.matmul %6, %137, %cst_77 {dimension_numbers = #tpu.dot_dimension_numbers<[1], [1], [0], [0], [0, 0, 1, 0], [], []>} : vector<32x32xbf16>, vector<8x32xbf16>, vector<32x8xf32> -> vector<32x8xf32>
    %143 = vector.broadcast %18 : vector<32x1xf32> to vector<32x8xf32>
    %144 = arith.addf %142, %143 : vector<32x8xf32>
    %145 = vector.shape_cast %144 : vector<32x8xf32> to vector<4x8x8xf32>
    %cst_78 = arith.constant dense<0.000000e+00> : vector<32x8xf32>
    %146 = tpu.matmul %8, %137, %cst_78 {dimension_numbers = #tpu.dot_dimension_numbers<[1], [1], [0], [0], [0, 0, 1, 0], [], []>} : vector<32x32xbf16>, vector<8x32xbf16>, vector<32x8xf32> -> vector<32x8xf32>
    %147 = vector.broadcast %20 : vector<32x1xf32> to vector<32x8xf32>
    %148 = arith.addf %146, %147 : vector<32x8xf32>
    %149 = vector.shape_cast %148 : vector<32x8xf32> to vector<4x8x8xf32>
    %150 = arith.truncf %141 : vector<4x8x8xf32> to vector<4x8x8xbf16>
    %151 = arith.truncf %145 : vector<4x8x8xf32> to vector<4x8x8xbf16>
    %cst_79 = arith.constant dense<0.000000e+00> : vector<4x8x8xf32>
    %152 = tpu.matmul %150, %151, %cst_79 {dimension_numbers = #tpu.dot_dimension_numbers<[1], [1], [2], [2], [0, 0, 0, 2, 1, 2], [0], [0]>} : vector<4x8x8xbf16>, vector<4x8x8xbf16>, vector<4x8x8xf32> -> vector<4x8x8xf32>
    %153 = vector.shape_cast %35 : vector<8x8xf32> to vector<1x8x8xf32>
    %154 = vector.broadcast %153 : vector<1x8x8xf32> to vector<4x8x8xf32>
    %155 = arith.addf %152, %154 : vector<4x8x8xf32>
    %cst_80 = arith.constant dense<0xFF800000> : vector<4x8xf32>
    %156 = vector.multi_reduction <maximumf>, %155, %cst_80 [2] : vector<4x8x8xf32> to vector<4x8xf32>
    %157 = vector.shape_cast %156 : vector<4x8xf32> to vector<4x8x1xf32>
    %158 = vector.broadcast %157 : vector<4x8x1xf32> to vector<4x8x8xf32>
    %159 = arith.subf %155, %158 : vector<4x8x8xf32>
    %160 = math.exp %159 : vector<4x8x8xf32>
    %cst_81 = arith.constant dense<0.000000e+00> : vector<4x8xf32>
    %161 = vector.multi_reduction <add>, %160, %cst_81 [2] : vector<4x8x8xf32> to vector<4x8xf32>
    %162 = vector.shape_cast %161 : vector<4x8xf32> to vector<4x8x1xf32>
    %163 = tpu.reciprocal %162 {approx = true} : vector<4x8x1xf32> -> vector<4x8x1xf32>
    %164 = vector.broadcast %163 : vector<4x8x1xf32> to vector<4x8x8xf32>
    %165 = arith.mulf %160, %164 : vector<4x8x8xf32>
    %166 = arith.truncf %149 : vector<4x8x8xf32> to vector<4x8x8xbf16>
    %167 = arith.truncf %165 : vector<4x8x8xf32> to vector<4x8x8xbf16>
    %cst_82 = arith.constant dense<0.000000e+00> : vector<4x8x8xf32>
    %168 = tpu.matmul %166, %167, %cst_82 {dimension_numbers = #tpu.dot_dimension_numbers<[2], [2], [1], [1], [0, 0, 0, 1, 1, 1], [0], [0]>} : vector<4x8x8xbf16>, vector<4x8x8xbf16>, vector<4x8x8xf32> -> vector<4x8x8xf32>
    %169 = vector.shape_cast %168 : vector<4x8x8xf32> to vector<32x8xf32>
    %170 = arith.truncf %169 : vector<32x8xf32> to vector<32x8xbf16>
    %cst_83 = arith.constant dense<0.000000e+00> : vector<8x32xf32>
    %171 = tpu.matmul %170, %10, %cst_83 {dimension_numbers = #tpu.dot_dimension_numbers<[0], [1], [1], [0], [0, 1, 1, 0], [], []>} : vector<32x8xbf16>, vector<32x32xbf16>, vector<8x32xf32> -> vector<8x32xf32>
    %172 = vector.broadcast %22 : vector<1x32xf32> to vector<8x32xf32>
    %173 = arith.addf %171, %172 : vector<8x32xf32>
    %174 = arith.addf %136, %173 : vector<8x32xf32>
    %cst_84 = arith.constant dense<0.000000e+00> : vector<8xf32>
    %175 = vector.multi_reduction <add>, %174, %cst_84 [1] : vector<8x32xf32> to vector<8xf32>
    %176 = vector.shape_cast %175 : vector<8xf32> to vector<8x1xf32>
    %cst_85 = arith.constant 3.200000e+01 : f32
    %177 = vector.broadcast %cst_85 : f32 to vector<8x1xf32>
    %178 = arith.divf %176, %177 : vector<8x1xf32>
    %179 = vector.broadcast %178 : vector<8x1xf32> to vector<8x32xf32>
    %180 = arith.subf %174, %179 : vector<8x32xf32>
    %181 = arith.mulf %180, %180 : vector<8x32xf32>
    %cst_86 = arith.constant dense<0.000000e+00> : vector<8xf32>
    %182 = vector.multi_reduction <add>, %181, %cst_86 [1] : vector<8x32xf32> to vector<8xf32>
    %183 = vector.shape_cast %182 : vector<8xf32> to vector<8x1xf32>
    %cst_87 = arith.constant 3.200000e+01 : f32
    %184 = vector.broadcast %cst_87 : f32 to vector<8x1xf32>
    %185 = arith.divf %183, %184 : vector<8x1xf32>
    %186 = vector.broadcast %178 : vector<8x1xf32> to vector<8x32xf32>
    %187 = arith.subf %174, %186 : vector<8x32xf32>
    %cst_88 = arith.constant 9.99999974E-6 : f32
    %188 = vector.broadcast %cst_88 : f32 to vector<8x1xf32>
    %189 = arith.addf %185, %188 : vector<8x1xf32>
    %190 = math.rsqrt %189 : vector<8x1xf32>
    %191 = vector.broadcast %190 : vector<8x1xf32> to vector<8x32xf32>
    %192 = arith.mulf %187, %191 : vector<8x32xf32>
    %193 = vector.broadcast %28 : vector<1x32xf32> to vector<8x32xf32>
    %194 = arith.mulf %192, %193 : vector<8x32xf32>
    %195 = vector.broadcast %30 : vector<1x32xf32> to vector<8x32xf32>
    %196 = arith.addf %194, %195 : vector<8x32xf32>
    %197 = arith.truncf %196 : vector<8x32xf32> to vector<8x32xbf16>
    %cst_89 = arith.constant dense<0.000000e+00> : vector<8x64xf32>
    %198 = tpu.matmul %197, %12, %cst_89 {dimension_numbers = #tpu.dot_dimension_numbers<[1], [1], [0], [0], [0, 0, 1, 0], [], []>} : vector<8x32xbf16>, vector<64x32xbf16>, vector<8x64xf32> -> vector<8x64xf32>
    %199 = vector.broadcast %24 : vector<1x64xf32> to vector<8x64xf32>
    %200 = arith.addf %198, %199 : vector<8x64xf32>
    %cst_90 = arith.constant 0.000000e+00 : f32
    %201 = vector.broadcast %cst_90 : f32 to vector<8x64xf32>
    %202 = arith.maximumf %200, %201 : vector<8x64xf32>
    %203 = arith.truncf %202 : vector<8x64xf32> to vector<8x64xbf16>
    %cst_91 = arith.constant dense<0.000000e+00> : vector<8x32xf32>
    %204 = tpu.matmul %203, %14, %cst_91 {dimension_numbers = #tpu.dot_dimension_numbers<[1], [1], [0], [0], [0, 0, 1, 0], [], []>} : vector<8x64xbf16>, vector<32x64xbf16>, vector<8x32xf32> -> vector<8x32xf32>
    %205 = vector.broadcast %26 : vector<1x32xf32> to vector<8x32xf32>
    %206 = arith.addf %204, %205 : vector<8x32xf32>
    %207 = arith.addf %196, %206 : vector<8x32xf32>
    %cst_92 = arith.constant dense<0.000000e+00> : vector<8xf32>
    %208 = vector.multi_reduction <add>, %207, %cst_92 [1] : vector<8x32xf32> to vector<8xf32>
    %209 = vector.shape_cast %208 : vector<8xf32> to vector<8x1xf32>
    %cst_93 = arith.constant 3.200000e+01 : f32
    %210 = vector.broadcast %cst_93 : f32 to vector<8x1xf32>
    %211 = arith.divf %209, %210 : vector<8x1xf32>
    %212 = vector.broadcast %211 : vector<8x1xf32> to vector<8x32xf32>
    %213 = arith.subf %207, %212 : vector<8x32xf32>
    %214 = arith.mulf %213, %213 : vector<8x32xf32>
    %cst_94 = arith.constant dense<0.000000e+00> : vector<8xf32>
    %215 = vector.multi_reduction <add>, %214, %cst_94 [1] : vector<8x32xf32> to vector<8xf32>
    %216 = vector.shape_cast %215 : vector<8xf32> to vector<8x1xf32>
    %cst_95 = arith.constant 3.200000e+01 : f32
    %217 = vector.broadcast %cst_95 : f32 to vector<8x1xf32>
    %218 = arith.divf %216, %217 : vector<8x1xf32>
    %219 = vector.broadcast %211 : vector<8x1xf32> to vector<8x32xf32>
    %220 = arith.subf %207, %219 : vector<8x32xf32>
    %cst_96 = arith.constant 9.99999974E-6 : f32
    %221 = vector.broadcast %cst_96 : f32 to vector<8x1xf32>
    %222 = arith.addf %218, %221 : vector<8x1xf32>
    %223 = math.rsqrt %222 : vector<8x1xf32>
    %224 = vector.broadcast %223 : vector<8x1xf32> to vector<8x32xf32>
    %225 = arith.mulf %220, %224 : vector<8x32xf32>
    %226 = vector.broadcast %32 : vector<1x32xf32> to vector<8x32xf32>
    %227 = arith.mulf %225, %226 : vector<8x32xf32>
    %228 = vector.broadcast %34 : vector<1x32xf32> to vector<8x32xf32>
    %229 = arith.addf %227, %228 : vector<8x32xf32>
    %c1 = arith.constant 1 : index
    %c0_97 = arith.constant 0 : index
    %c0_98 = arith.constant 0 : index
    %230 = vector.load %arg19[%c1, %c0_97, %c0_98] : memref<2x8x32xf32, #tpu.memory_space<vmem>>, vector<1x8x32xf32>
    %231 = vector.shape_cast %230 : vector<1x8x32xf32> to vector<8x32xf32>
    %232 = vector.shape_cast %229 : vector<8x32xf32> to vector<1x8x32xf32>
    tpu.vector_store %arg19[%c1, %c0_97, %c0_98], %232 {strides = array<i32>} : memref<2x8x32xf32, #tpu.memory_space<vmem>>, vector<1x8x32xf32>,
    return
  }
  func.func @transform_0(%arg0: i32, %arg1: i32) -> (i32, i32, i32) {
    %c0_i32 = arith.constant 0 : i32
    %c0_i32_0 = arith.constant 0 : i32
    %c0_i32_1 = arith.constant 0 : i32
    return %arg0, %c0_i32, %c0_i32_0 : i32, i32, i32
  }
  func.func @transform_1(%arg0: i32, %arg1: i32) -> (i32, i32, i32) {
    %c0_i32 = arith.constant 0 : i32
    %c0_i32_0 = arith.constant 0 : i32
    %c0_i32_1 = arith.constant 0 : i32
    return %arg1, %c0_i32, %c0_i32_0 : i32, i32, i32
  }
  func.func @transform_2(%arg0: i32, %arg1: i32) -> (i32, i32, i32) {
    %c0_i32 = arith.constant 0 : i32
    %c0_i32_0 = arith.constant 0 : i32
    %c0_i32_1 = arith.constant 0 : i32
    return %arg1, %c0_i32, %c0_i32_0 : i32, i32, i32
  }
  func.func @transform_3(%arg0: i32, %arg1: i32) -> (i32, i32, i32) {
    %c0_i32 = arith.constant 0 : i32
    %c0_i32_0 = arith.constant 0 : i32
    %c0_i32_1 = arith.constant 0 : i32
    return %arg1, %c0_i32, %c0_i32_0 : i32, i32, i32
  }
  func.func @transform_4(%arg0: i32, %arg1: i32) -> (i32, i32, i32) {
    %c0_i32 = arith.constant 0 : i32
    %c0_i32_0 = arith.constant 0 : i32
    %c0_i32_1 = arith.constant 0 : i32
    return %arg1, %c0_i32, %c0_i32_0 : i32, i32, i32
  }
  func.func @transform_5(%arg0: i32, %arg1: i32) -> (i32, i32, i32) {
    %c0_i32 = arith.constant 0 : i32
    %c0_i32_0 = arith.constant 0 : i32
    %c0_i32_1 = arith.constant 0 : i32
    return %arg1, %c0_i32, %c0_i32_0 : i32, i32, i32
  }
  func.func @transform_6(%arg0: i32, %arg1: i32) -> (i32, i32, i32) {
    %c0_i32 = arith.constant 0 : i32
    %c0_i32_0 = arith.constant 0 : i32
    %c0_i32_1 = arith.constant 0 : i32
    return %arg1, %c0_i32, %c0_i32_0 : i32, i32, i32
  }
  func.func @transform_7(%arg0: i32, %arg1: i32) -> (i32, i32, i32) {
    %c0_i32 = arith.constant 0 : i32
    %c0_i32_0 = arith.constant 0 : i32
    %c0_i32_1 = arith.constant 0 : i32
    return %arg1, %c0_i32, %c0_i32_0 : i32, i32, i32
  }
  func.func @transform_8(%arg0: i32, %arg1: i32) -> (i32, i32, i32) {
    %c0_i32 = arith.constant 0 : i32
    %c0_i32_0 = arith.constant 0 : i32
    %c0_i32_1 = arith.constant 0 : i32
    return %arg1, %c0_i32, %c0_i32_0 : i32, i32, i32
  }
  func.func @transform_9(%arg0: i32, %arg1: i32) -> (i32, i32, i32) {
    %c0_i32 = arith.constant 0 : i32
    %c0_i32_0 = arith.constant 0 : i32
    %c0_i32_1 = arith.constant 0 : i32
    return %arg1, %c0_i32, %c0_i32_0 : i32, i32, i32
  }
  func.func @transform_10(%arg0: i32, %arg1: i32) -> (i32, i32, i32) {
    %c0_i32 = arith.constant 0 : i32
    %c0_i32_0 = arith.constant 0 : i32
    %c0_i32_1 = arith.constant 0 : i32
    return %arg1, %c0_i32, %c0_i32_0 : i32, i32, i32
  }
  func.func @transform_11(%arg0: i32, %arg1: i32) -> (i32, i32, i32) {
    %c0_i32 = arith.constant 0 : i32
    %c0_i32_0 = arith.constant 0 : i32
    %c0_i32_1 = arith.constant 0 : i32
    return %arg1, %c0_i32, %c0_i32_0 : i32, i32, i32
  }
  func.func @transform_12(%arg0: i32, %arg1: i32) -> (i32, i32, i32) {
    %c0_i32 = arith.constant 0 : i32
    %c0_i32_0 = arith.constant 0 : i32
    %c0_i32_1 = arith.constant 0 : i32
    return %arg1, %c0_i32, %c0_i32_0 : i32, i32, i32
  }
  func.func @transform_13(%arg0: i32, %arg1: i32) -> (i32, i32, i32) {
    %c0_i32 = arith.constant 0 : i32
    %c0_i32_0 = arith.constant 0 : i32
    %c0_i32_1 = arith.constant 0 : i32
    return %arg1, %c0_i32, %c0_i32_0 : i32, i32, i32
  }
  func.func @transform_14(%arg0: i32, %arg1: i32) -> (i32, i32, i32) {
    %c0_i32 = arith.constant 0 : i32
    %c0_i32_0 = arith.constant 0 : i32
    %c0_i32_1 = arith.constant 0 : i32
    return %arg1, %c0_i32, %c0_i32_0 : i32, i32, i32
  }
  func.func @transform_15(%arg0: i32, %arg1: i32) -> (i32, i32, i32) {
    %c0_i32 = arith.constant 0 : i32
    %c0_i32_0 = arith.constant 0 : i32
    %c0_i32_1 = arith.constant 0 : i32
    return %arg1, %c0_i32, %c0_i32_0 : i32, i32, i32
  }
  func.func @transform_16(%arg0: i32, %arg1: i32) -> (i32, i32, i32) {
    %c0_i32 = arith.constant 0 : i32
    %c0_i32_0 = arith.constant 0 : i32
    %c0_i32_1 = arith.constant 0 : i32
    return %arg1, %c0_i32, %c0_i32_0 : i32, i32, i32
  }
  func.func @transform_17(%arg0: i32, %arg1: i32) -> (i32, i32, i32) {
    %c0_i32 = arith.constant 0 : i32
    %c0_i32_0 = arith.constant 0 : i32
    %c0_i32_1 = arith.constant 0 : i32
    return %arg0, %c0_i32, %c0_i32_0 : i32, i32, i32
  }
}

</mosaic_0001>

<llo_original>
// kernel: tpu_custom_call.1
$region0: #{tpu_custom_call.1}
  #allocation0 [shape = 'u32[]', space=smem, size = 0x4, offset = 0x4, fixed_abs, tag = 'smem constant byte address 0x4 - core index']
  #allocation1 [shape = 'u32[144,128]{1,0:T(1,128)}', space=vmem, size = 0x12000, scoped, tag = 'internal scratch']
  #allocation2 [shape = 'f32[8,8]{1,0:T(8,128)}', space=vmem, size = 0x1000, scoped, tag = 'scratch operand']
  %s0 = inlined_call_operand.vmem [shape: f32[2,8,32], index: 0, kind: input, shape index: {}]
  %s1 = inlined_call_operand.vmem [shape: bf16[2,32,32], index: 1, kind: input, shape index: {}]
  %s2 = inlined_call_operand.vmem [shape: bf16[2,32,32], index: 2, kind: input, shape index: {}]
  %s3 = inlined_call_operand.vmem [shape: bf16[2,32,32], index: 3, kind: input, shape index: {}]
  %s4 = inlined_call_operand.vmem [shape: f32[2,32,1], index: 4, kind: input, shape index: {}]
  %s5 = inlined_call_operand.vmem [shape: f32[2,32,1], index: 5, kind: input, shape index: {}]
  %s6 = inlined_call_operand.vmem [shape: f32[2,32,1], index: 6, kind: input, shape index: {}]
  %s7 = inlined_call_operand.vmem [shape: bf16[2,32,32], index: 7, kind: input, shape index: {}]
  %s8 = inlined_call_operand.vmem [shape: f32[2,1,32], index: 8, kind: input, shape index: {}]
  %s9 = inlined_call_operand.vmem [shape: bf16[2,64,32], index: 9, kind: input, shape index: {}]
  %s10 = inlined_call_operand.vmem [shape: f32[2,1,64], index: 10, kind: input, shape index: {}]
  %s11 = inlined_call_operand.vmem [shape: bf16[2,32,64], index: 11, kind: input, shape index: {}]
  %s12 = inlined_call_operand.vmem [shape: f32[2,1,32], index: 12, kind: input, shape index: {}]
  %s13 = inlined_call_operand.vmem [shape: f32[2,1,32], index: 13, kind: input, shape index: {}]
  %s14 = inlined_call_operand.vmem [shape: f32[2,1,32], index: 14, kind: input, shape index: {}]
  %s15 = inlined_call_operand.vmem [shape: f32[2,1,32], index: 15, kind: input, shape index: {}]
  %s16 = inlined_call_operand.vmem [shape: f32[2,1,32], index: 16, kind: input, shape index: {}]
  %s17 = inlined_call_operand.hbm [shape: f32[2,8,32], index: 17, kind: output, shape index: {}]
  %s18 = sld [smem:[#allocation0]]
  $region105: #{tpu_custom_call.1} parent=0
    _
  %s20 = ssub.s32 1, %s18
  %s21 = scalar_select 0, %s20, %s18
  $region1: #{tpu_custom_call.1} parent=0
    #allocation3 [shape = 'u8[8192]{0}', space=vmem, size = 0x2000, scoped, tag = 'output window, operand 0, single buffered']
    #allocation4 [shape = 's32[2]{0}', space=sflag, size = 0x8, scoped, tag = 'scoped memory for tpu_custom_call.1']
    %22 = vsyncpa [#allocation4], 0
    loop: start=0, step=1, limit=4
    $region2: #{tpu_custom_call.1} parent=1 // loop_pre_header
      _
    $region3: #{tpu_custom_call.1} parent=1 // loop_header
      %s24 = sphi 0, %s28
      %p25 = scmp.ge.s32.totalorder %s24, 4
      %s31 = sphi 0, %s43
      %s32 = sphi 0, %s39
      %s33 = sphi 0, %s31
      %s34 = sphi 0, %s32
      %s35 = sphi 0, %s33
      %s36 = sphi 0, %s34
      %s46 = sphi 0, %s48
      %s49 = sphi 0, %s46
      %s50 = sphi 0, %s49
      %s66 = sphi 0, %s50
      %s72 = sphi 0, %s74
      %s75 = sphi 0, %s72
      %s76 = sphi 0, %s75
      %s92 = sphi 0, %s76
      %s98 = sphi 0, %s100
      %s101 = sphi 0, %s98
      %s102 = sphi 0, %s101
      %s118 = sphi 0, %s102
      %s124 = sphi 0, %s126
      %s127 = sphi 0, %s124
      %s128 = sphi 0, %s127
      %s144 = sphi 0, %s128
      %s150 = sphi 0, %s152
      %s153 = sphi 0, %s150
      %s154 = sphi 0, %s153
      %s170 = sphi 0, %s154
      %s176 = sphi 0, %s178
      %s179 = sphi 0, %s176
      %s180 = sphi 0, %s179
      %s196 = sphi 0, %s180
      %s202 = sphi 0, %s204
      %s205 = sphi 0, %s202
      %s206 = sphi 0, %s205
      %s222 = sphi 0, %s206
      %s228 = sphi 0, %s230
      %s231 = sphi 0, %s228
      %s232 = sphi 0, %s231
      %s248 = sphi 0, %s232
      %s254 = sphi 0, %s256
      %s257 = sphi 0, %s254
      %s258 = sphi 0, %s257
      %s274 = sphi 0, %s258
      %s280 = sphi 0, %s282
      %s283 = sphi 0, %s280
      %s284 = sphi 0, %s283
      %s300 = sphi 0, %s284
      %s306 = sphi 0, %s308
      %s309 = sphi 0, %s306
      %s310 = sphi 0, %s309
      %s326 = sphi 0, %s310
      %s332 = sphi 0, %s334
      %s335 = sphi 0, %s332
      %s336 = sphi 0, %s335
      %s352 = sphi 0, %s336
      %s358 = sphi 0, %s360
      %s361 = sphi 0, %s358
      %s362 = sphi 0, %s361
      %s378 = sphi 0, %s362
      %s384 = sphi 0, %s386
      %s387 = sphi 0, %s384
      %s388 = sphi 0, %s387
      %s404 = sphi 0, %s388
      %s410 = sphi 0, %s412
      %s413 = sphi 0, %s410
      %s414 = sphi 0, %s413
      %s430 = sphi 0, %s414
      %s436 = sphi 0, %s438
      %s439 = sphi 0, %s436
      %s440 = sphi 0, %s439
      %s456 = sphi 0, %s440
      %s462 = sphi 0, %s464
      %s465 = sphi 0, %s462
      %s466 = sphi 0, %s465
      %s482 = sphi 0, %s466
      %s488 = sphi 0, %s490
      %s491 = sphi 0, %s488
      %s492 = sphi 0, %s491
      %s508 = sphi 0, %s492
    $region4: #{tpu_custom_call.1} parent=1 // loop_header_branch
      %27 = sbr.rel (%p25) target = $region8
    $region5: #{tpu_custom_call.1} parent=1 // loop_body
      %s29 = ssub.s32 %s24, 1
      %s30 = ssub.s32 %s24, 2
      %s37 = sadd.s32 1, %s32
      %p38 = scmp.ge.s32.totalorder %s37, 2
      %s39 = scalar_select %p38, 0, %s37
      %s40 = sadd.s32 1, %s31
      %s41 = scalar_select %p38, %s40, %s31
      %p42 = scmp.ge.s32.totalorder %s41, 1
      %s43 = scalar_select %p42, 0, %s41
      %s44 = ssub.s32 %s31, %s43
      %p45 = scmp.eq.s32.totalorder %s44, 0
      %s47 = sadd.s32 %s46, 1
      %s48 = scalar_select %p45, %s46, %s47
      %p51 = pneg %p45
      %p52 = scmp.eq.s32.totalorder %s24, 1
      %p53 = por %p51, %p52
      %p54 = scmp.ne.s32.totalorder %s46, %s49
      %p55 = scmp.eq.s32.totalorder %s24, 0
      %p56 = por %p54, %p55
      %p57 = scmp.ne.s32.totalorder %s46, %s49
      %p58 = scmp.eq.s32.totalorder %s29, 1
      %p59 = por %p57, %p58
      %p60 = scmp.ne.s32.totalorder %s49, %s50
      %p61 = scmp.eq.s32.totalorder %s29, 0
      %p62 = por %p60, %p61
      %p63 = scmp.ne.s32.totalorder %s49, %s50
      %p64 = scmp.eq.s32.totalorder %s30, 1
      %p65 = por %p63, %p64
      %p67 = scmp.ne.s32.totalorder %s50, %s66
      %p68 = scmp.eq.s32.totalorder %s30, 0
      %p69 = por %p67, %p68
      %s70 = ssub.s32 %s32, %s39
      %p71 = scmp.eq.s32.totalorder %s70, 0
      %s73 = sadd.s32 %s72, 1
      %s74 = scalar_select %p71, %s72, %s73
      %p77 = pneg %p71
      %p78 = scmp.eq.s32.totalorder %s24, 1
      %p79 = por %p77, %p78
      %p80 = scmp.ne.s32.totalorder %s72, %s75
      %p81 = scmp.eq.s32.totalorder %s24, 0
      %p82 = por %p80, %p81
      %p83 = scmp.ne.s32.totalorder %s72, %s75
      %p84 = scmp.eq.s32.totalorder %s29, 1
      %p85 = por %p83, %p84
      %p86 = scmp.ne.s32.totalorder %s75, %s76
      %p87 = scmp.eq.s32.totalorder %s29, 0
      %p88 = por %p86, %p87
      %p89 = scmp.ne.s32.totalorder %s75, %s76
      %p90 = scmp.eq.s32.totalorder %s30, 1
      %p91 = por %p89, %p90
      %p93 = scmp.ne.s32.totalorder %s76, %s92
      %p94 = scmp.eq.s32.totalorder %s30, 0
      %p95 = por %p93, %p94
      %s96 = ssub.s32 %s32, %s39
      %p97 = scmp.eq.s32.totalorder %s96, 0
      %s99 = sadd.s32 %s98, 1
      %s100 = scalar_select %p97, %s98, %s99
      %p103 = pneg %p97
      %p104 = scmp.eq.s32.totalorder %s24, 1
      %p105 = por %p103, %p104
      %p106 = scmp.ne.s32.totalorder %s98, %s101
      %p107 = scmp.eq.s32.totalorder %s24, 0
      %p108 = por %p106, %p107
      %p109 = scmp.ne.s32.totalorder %s98, %s101
      %p110 = scmp.eq.s32.totalorder %s29, 1
      %p111 = por %p109, %p110
      %p112 = scmp.ne.s32.totalorder %s101, %s102
      %p113 = scmp.eq.s32.totalorder %s29, 0
      %p114 = por %p112, %p113
      %p115 = scmp.ne.s32.totalorder %s101, %s102
      %p116 = scmp.eq.s32.totalorder %s30, 1
      %p117 = por %p115, %p116
      %p119 = scmp.ne.s32.totalorder %s102, %s118
      %p120 = scmp.eq.s32.totalorder %s30, 0
      %p121 = por %p119, %p120
      %s122 = ssub.s32 %s32, %s39
      %p123 = scmp.eq.s32.totalorder %s122, 0
      %s125 = sadd.s32 %s124, 1
      %s126 = scalar_select %p123, %s124, %s125
      %p129 = pneg %p123
      %p130 = scmp.eq.s32.totalorder %s24, 1
      %p131 = por %p129, %p130
      %p132 = scmp.ne.s32.totalorder %s124, %s127
      %p133 = scmp.eq.s32.totalorder %s24, 0
      %p134 = por %p132, %p133
      %p135 = scmp.ne.s32.totalorder %s124, %s127
      %p136 = scmp.eq.s32.totalorder %s29, 1
      %p137 = por %p135, %p136
      %p138 = scmp.ne.s32.totalorder %s127, %s128
      %p139 = scmp.eq.s32.totalorder %s29, 0
      %p140 = por %p138, %p139
      %p141 = scmp.ne.s32.totalorder %s127, %s128
      %p142 = scmp.eq.s32.totalorder %s30, 1
      %p143 = por %p141, %p142
      %p145 = scmp.ne.s32.totalorder %s128, %s144
      %p146 = scmp.eq.s32.totalorder %s30, 0
      %p147 = por %p145, %p146
      %s148 = ssub.s32 %s32, %s39
      %p149 = scmp.eq.s32.totalorder %s148, 0
      %s151 = sadd.s32 %s150, 1
      %s152 = scalar_select %p149, %s150, %s151
      %p155 = pneg %p149
      %p156 = scmp.eq.s32.totalorder %s24, 1
      %p157 = por %p155, %p156
      %p158 = scmp.ne.s32.totalorder %s150, %s153
      %p159 = scmp.eq.s32.totalorder %s24, 0
      %p160 = por %p158, %p159
      %p161 = scmp.ne.s32.totalorder %s150, %s153
      %p162 = scmp.eq.s32.totalorder %s29, 1
      %p163 = por %p161, %p162
      %p164 = scmp.ne.s32.totalorder %s153, %s154
      %p165 = scmp.eq.s32.totalorder %s29, 0
      %p166 = por %p164, %p165
      %p167 = scmp.ne.s32.totalorder %s153, %s154
      %p168 = scmp.eq.s32.totalorder %s30, 1
      %p169 = por %p167, %p168
      %p171 = scmp.ne.s32.totalorder %s154, %s170
      %p172 = scmp.eq.s32.totalorder %s30, 0
      %p173 = por %p171, %p172
      %s174 = ssub.s32 %s32, %s39
      %p175 = scmp.eq.s32.totalorder %s174, 0
      %s177 = sadd.s32 %s176, 1
      %s178 = scalar_select %p175, %s176, %s177
      %p181 = pneg %p175
      %p182 = scmp.eq.s32.totalorder %s24, 1
      %p183 = por %p181, %p182
      %p184 = scmp.ne.s32.totalorder %s176, %s179
      %p185 = scmp.eq.s32.totalorder %s24, 0
      %p186 = por %p184, %p185
      %p187 = scmp.ne.s32.totalorder %s176, %s179
      %p188 = scmp.eq.s32.totalorder %s29, 1
      %p189 = por %p187, %p188
      %p190 = scmp.ne.s32.totalorder %s179, %s180
      %p191 = scmp.eq.s32.totalorder %s29, 0
      %p192 = por %p190, %p191
      %p193 = scmp.ne.s32.totalorder %s179, %s180
      %p194 = scmp.eq.s32.totalorder %s30, 1
      %p195 = por %p193, %p194
      %p197 = scmp.ne.s32.totalorder %s180, %s196
      %p198 = scmp.eq.s32.totalorder %s30, 0
      %p199 = por %p197, %p198
      %s200 = ssub.s32 %s32, %s39
      %p201 = scmp.eq.s32.totalorder %s200, 0
      %s203 = sadd.s32 %s202, 1
      %s204 = scalar_select %p201, %s202, %s203
      %p207 = pneg %p201
      %p208 = scmp.eq.s32.totalorder %s24, 1
      %p209 = por %p207, %p208
      %p210 = scmp.ne.s32.totalorder %s202, %s205
      %p211 = scmp.eq.s32.totalorder %s24, 0
      %p212 = por %p210, %p211
      %p213 = scmp.ne.s32.totalorder %s202, %s205
      %p214 = scmp.eq.s32.totalorder %s29, 1
      %p215 = por %p213, %p214
      %p216 = scmp.ne.s32.totalorder %s205, %s206
      %p217 = scmp.eq.s32.totalorder %s29, 0
      %p218 = por %p216, %p217
      %p219 = scmp.ne.s32.totalorder %s205, %s206
      %p220 = scmp.eq.s32.totalorder %s30, 1
      %p221 = por %p219, %p220
      %p223 = scmp.ne.s32.totalorder %s206, %s222
      %p224 = scmp.eq.s32.totalorder %s30, 0
      %p225 = por %p223, %p224
      %s226 = ssub.s32 %s32, %s39
      %p227 = scmp.eq.s32.totalorder %s226, 0
      %s229 = sadd.s32 %s228, 1
      %s230 = scalar_select %p227, %s228, %s229
      %p233 = pneg %p227
      %p234 = scmp.eq.s32.totalorder %s24, 1
      %p235 = por %p233, %p234
      %p236 = scmp.ne.s32.totalorder %s228, %s231
      %p237 = scmp.eq.s32.totalorder %s24, 0
      %p238 = por %p236, %p237
      %p239 = scmp.ne.s32.totalorder %s228, %s231
      %p240 = scmp.eq.s32.totalorder %s29, 1
      %p241 = por %p239, %p240
      %p242 = scmp.ne.s32.totalorder %s231, %s232
      %p243 = scmp.eq.s32.totalorder %s29, 0
      %p244 = por %p242, %p243
      %p245 = scmp.ne.s32.totalorder %s231, %s232
      %p246 = scmp.eq.s32.totalorder %s30, 1
      %p247 = por %p245, %p246
      %p249 = scmp.ne.s32.totalorder %s232, %s248
      %p250 = scmp.eq.s32.totalorder %s30, 0
      %p251 = por %p249, %p250
      %s252 = ssub.s32 %s32, %s39
      %p253 = scmp.eq.s32.totalorder %s252, 0
      %s255 = sadd.s32 %s254, 1
      %s256 = scalar_select %p253, %s254, %s255
      %p259 = pneg %p253
      %p260 = scmp.eq.s32.totalorder %s24, 1
      %p261 = por %p259, %p260
      %p262 = scmp.ne.s32.totalorder %s254, %s257
      %p263 = scmp.eq.s32.totalorder %s24, 0
      %p264 = por %p262, %p263
      %p265 = scmp.ne.s32.totalorder %s254, %s257
      %p266 = scmp.eq.s32.totalorder %s29, 1
      %p267 = por %p265, %p266
      %p268 = scmp.ne.s32.totalorder %s257, %s258
      %p269 = scmp.eq.s32.totalorder %s29, 0
      %p270 = por %p268, %p269
      %p271 = scmp.ne.s32.totalorder %s257, %s258
      %p272 = scmp.eq.s32.totalorder %s30, 1
      %p273 = por %p271, %p272
      %p275 = scmp.ne.s32.totalorder %s258, %s274
      %p276 = scmp.eq.s32.totalorder %s30, 0
      %p277 = por %p275, %p276
      %s278 = ssub.s32 %s32, %s39
      %p279 = scmp.eq.s32.totalorder %s278, 0
      %s281 = sadd.s32 %s280, 1
      %s282 = scalar_select %p279, %s280, %s281
      %p285 = pneg %p279
      %p286 = scmp.eq.s32.totalorder %s24, 1
      %p287 = por %p285, %p286
      %p288 = scmp.ne.s32.totalorder %s280, %s283
      %p289 = scmp.eq.s32.totalorder %s24, 0
      %p290 = por %p288, %p289
      %p291 = scmp.ne.s32.totalorder %s280, %s283
      %p292 = scmp.eq.s32.totalorder %s29, 1
      %p293 = por %p291, %p292
      %p294 = scmp.ne.s32.totalorder %s283, %s284
      %p295 = scmp.eq.s32.totalorder %s29, 0
      %p296 = por %p294, %p295
      %p297 = scmp.ne.s32.totalorder %s283, %s284
      %p298 = scmp.eq.s32.totalorder %s30, 1
      %p299 = por %p297, %p298
      %p301 = scmp.ne.s32.totalorder %s284, %s300
      %p302 = scmp.eq.s32.totalorder %s30, 0
      %p303 = por %p301, %p302
      %s304 = ssub.s32 %s32, %s39
      %p305 = scmp.eq.s32.totalorder %s304, 0
      %s307 = sadd.s32 %s306, 1
      %s308 = scalar_select %p305, %s306, %s307
      %p311 = pneg %p305
      %p312 = scmp.eq.s32.totalorder %s24, 1
      %p313 = por %p311, %p312
      %p314 = scmp.ne.s32.totalorder %s306, %s309
      %p315 = scmp.eq.s32.totalorder %s24, 0
      %p316 = por %p314, %p315
      %p317 = scmp.ne.s32.totalorder %s306, %s309
      %p318 = scmp.eq.s32.totalorder %s29, 1
      %p319 = por %p317, %p318
      %p320 = scmp.ne.s32.totalorder %s309, %s310
      %p321 = scmp.eq.s32.totalorder %s29, 0
      %p322 = por %p320, %p321
      %p323 = scmp.ne.s32.totalorder %s309, %s310
      %p324 = scmp.eq.s32.totalorder %s30, 1
      %p325 = por %p323, %p324
      %p327 = scmp.ne.s32.totalorder %s310, %s326
      %p328 = scmp.eq.s32.totalorder %s30, 0
      %p329 = por %p327, %p328
      %s330 = ssub.s32 %s32, %s39
      %p331 = scmp.eq.s32.totalorder %s330, 0
      %s333 = sadd.s32 %s332, 1
      %s334 = scalar_select %p331, %s332, %s333
      %p337 = pneg %p331
      %p338 = scmp.eq.s32.totalorder %s24, 1
      %p339 = por %p337, %p338
      %p340 = scmp.ne.s32.totalorder %s332, %s335
      %p341 = scmp.eq.s32.totalorder %s24, 0
      %p342 = por %p340, %p341
      %p343 = scmp.ne.s32.totalorder %s332, %s335
      %p344 = scmp.eq.s32.totalorder %s29, 1
      %p345 = por %p343, %p344
      %p346 = scmp.ne.s32.totalorder %s335, %s336
      %p347 = scmp.eq.s32.totalorder %s29, 0
      %p348 = por %p346, %p347
      %p349 = scmp.ne.s32.totalorder %s335, %s336
      %p350 = scmp.eq.s32.totalorder %s30, 1
      %p351 = por %p349, %p350
      %p353 = scmp.ne.s32.totalorder %s336, %s352
      %p354 = scmp.eq.s32.totalorder %s30, 0
      %p355 = por %p353, %p354
      %s356 = ssub.s32 %s32, %s39
      %p357 = scmp.eq.s32.totalorder %s356, 0
      %s359 = sadd.s32 %s358, 1
      %s360 = scalar_select %p357, %s358, %s359
      %p363 = pneg %p357
      %p364 = scmp.eq.s32.totalorder %s24, 1
      %p365 = por %p363, %p364
      %p366 = scmp.ne.s32.totalorder %s358, %s361
      %p367 = scmp.eq.s32.totalorder %s24, 0
      %p368 = por %p366, %p367
      %p369 = scmp.ne.s32.totalorder %s358, %s361
      %p370 = scmp.eq.s32.totalorder %s29, 1
      %p371 = por %p369, %p370
      %p372 = scmp.ne.s32.totalorder %s361, %s362
      %p373 = scmp.eq.s32.totalorder %s29, 0
      %p374 = por %p372, %p373
      %p375 = scmp.ne.s32.totalorder %s361, %s362
      %p376 = scmp.eq.s32.totalorder %s30, 1
      %p377 = por %p375, %p376
      %p379 = scmp.ne.s32.totalorder %s362, %s378
      %p380 = scmp.eq.s32.totalorder %s30, 0
      %p381 = por %p379, %p380
      %s382 = ssub.s32 %s32, %s39
      %p383 = scmp.eq.s32.totalorder %s382, 0
      %s385 = sadd.s32 %s384, 1
      %s386 = scalar_select %p383, %s384, %s385
      %p389 = pneg %p383
      %p390 = scmp.eq.s32.totalorder %s24, 1
      %p391 = por %p389, %p390
      %p392 = scmp.ne.s32.totalorder %s384, %s387
      %p393 = scmp.eq.s32.totalorder %s24, 0
      %p394 = por %p392, %p393
      %p395 = scmp.ne.s32.totalorder %s384, %s387
      %p396 = scmp.eq.s32.totalorder %s29, 1
      %p397 = por %p395, %p396
      %p398 = scmp.ne.s32.totalorder %s387, %s388
      %p399 = scmp.eq.s32.totalorder %s29, 0
      %p400 = por %p398, %p399
      %p401 = scmp.ne.s32.totalorder %s387, %s388
      %p402 = scmp.eq.s32.totalorder %s30, 1
      %p403 = por %p401, %p402
      %p405 = scmp.ne.s32.totalorder %s388, %s404
      %p406 = scmp.eq.s32.totalorder %s30, 0
      %p407 = por %p405, %p406
      %s408 = ssub.s32 %s32, %s39
      %p409 = scmp.eq.s32.totalorder %s408, 0
      %s411 = sadd.s32 %s410, 1
      %s412 = scalar_select %p409, %s410, %s411
      %p415 = pneg %p409
      %p416 = scmp.eq.s32.totalorder %s24, 1
      %p417 = por %p415, %p416
      %p418 = scmp.ne.s32.totalorder %s410, %s413
      %p419 = scmp.eq.s32.totalorder %s24, 0
      %p420 = por %p418, %p419
      %p421 = scmp.ne.s32.totalorder %s410, %s413
      %p422 = scmp.eq.s32.totalorder %s29, 1
      %p423 = por %p421, %p422
      %p424 = scmp.ne.s32.totalorder %s413, %s414
      %p425 = scmp.eq.s32.totalorder %s29, 0
      %p426 = por %p424, %p425
      %p427 = scmp.ne.s32.totalorder %s413, %s414
      %p428 = scmp.eq.s32.totalorder %s30, 1
      %p429 = por %p427, %p428
      %p431 = scmp.ne.s32.totalorder %s414, %s430
      %p432 = scmp.eq.s32.totalorder %s30, 0
      %p433 = por %p431, %p432
      %s434 = ssub.s32 %s32, %s39
      %p435 = scmp.eq.s32.totalorder %s434, 0
      %s437 = sadd.s32 %s436, 1
      %s438 = scalar_select %p435, %s436, %s437
      %p441 = pneg %p435
      %p442 = scmp.eq.s32.totalorder %s24, 1
      %p443 = por %p441, %p442
      %p444 = scmp.ne.s32.totalorder %s436, %s439
      %p445 = scmp.eq.s32.totalorder %s24, 0
      %p446 = por %p444, %p445
      %p447 = scmp.ne.s32.totalorder %s436, %s439
      %p448 = scmp.eq.s32.totalorder %s29, 1
      %p449 = por %p447, %p448
      %p450 = scmp.ne.s32.totalorder %s439, %s440
      %p451 = scmp.eq.s32.totalorder %s29, 0
      %p452 = por %p450, %p451
      %p453 = scmp.ne.s32.totalorder %s439, %s440
      %p454 = scmp.eq.s32.totalorder %s30, 1
      %p455 = por %p453, %p454
      %p457 = scmp.ne.s32.totalorder %s440, %s456
      %p458 = scmp.eq.s32.totalorder %s30, 0
      %p459 = por %p457, %p458
      %s460 = ssub.s32 %s32, %s39
      %p461 = scmp.eq.s32.totalorder %s460, 0
      %s463 = sadd.s32 %s462, 1
      %s464 = scalar_select %p461, %s462, %s463
      %p467 = pneg %p461
      %p468 = scmp.eq.s32.totalorder %s24, 1
      %p469 = por %p467, %p468
      %p470 = scmp.ne.s32.totalorder %s462, %s465
      %p471 = scmp.eq.s32.totalorder %s24, 0
      %p472 = por %p470, %p471
      %p473 = scmp.ne.s32.totalorder %s462, %s465
      %p474 = scmp.eq.s32.totalorder %s29, 1
      %p475 = por %p473, %p474
      %p476 = scmp.ne.s32.totalorder %s465, %s466
      %p477 = scmp.eq.s32.totalorder %s29, 0
      %p478 = por %p476, %p477
      %p479 = scmp.ne.s32.totalorder %s465, %s466
      %p480 = scmp.eq.s32.totalorder %s30, 1
      %p481 = por %p479, %p480
      %p483 = scmp.ne.s32.totalorder %s466, %s482
      %p484 = scmp.eq.s32.totalorder %s30, 0
      %p485 = por %p483, %p484
      %s486 = ssub.s32 %s31, %s43
      %p487 = scmp.eq.s32.totalorder %s486, 0
      %s489 = sadd.s32 %s488, 1
      %s490 = scalar_select %p487, %s488, %s489
      %p493 = pneg %p487
      %p494 = scmp.eq.s32.totalorder %s24, 1
      %p495 = por %p493, %p494
      %p496 = scmp.ne.s32.totalorder %s488, %s491
      %p497 = scmp.eq.s32.totalorder %s24, 0
      %p498 = por %p496, %p497
      %p499 = scmp.ne.s32.totalorder %s488, %s491
      %p500 = scmp.eq.s32.totalorder %s29, 1
      %p501 = por %p499, %p500
      %p502 = scmp.ne.s32.totalorder %s491, %s492
      %p503 = scmp.eq.s32.totalorder %s29, 0
      %p504 = por %p502, %p503
      %p505 = scmp.ne.s32.totalorder %s491, %s492
      %p506 = scmp.eq.s32.totalorder %s30, 1
      %p507 = por %p505, %p506
      %p509 = scmp.ne.s32.totalorder %s492, %s508
      %p510 = scmp.eq.s32.totalorder %s30, 0
      %p511 = por %p509, %p510
      %p512 = scmp.le.s32.totalorder 1, %s24
      %p513 = scmp.lt.s32.totalorder %s24, 3
      %p514 = pnand %p512, %p513
      %p515 = pneg %p514
      // Predicated region
      $region9: #{tpu_custom_call.1} parent=5 // pred_check
        _
      $region10: #{tpu_custom_call.1} parent=5 // pred_check_branch
        %517 = sbr.rel (%p514) target = $region12
      $region11: #{tpu_custom_call.1} parent=5 // pred_region
        %s518 = ssub.s32 %s24, 1
        // Predicated region
        $region13: #{tpu_custom_call.1} parent=11 // pred_check
          %p519 = pneg %p62
        $region14: #{tpu_custom_call.1} parent=11 // pred_check_branch
          %521 = sbr.rel (%p519) target = $region16
        $region15: #{tpu_custom_call.1} parent=11 // pred_region
          %s522 = smul.u32 2, %s33
          %p523 = scmp.lt.s32.totalorder %s522, 1
          %s524 = scalar_select %p523, %s522, 1
          %s525 = smul.addr %s524, 8
          %s526 = scalar_lea.vmem %s0, %s525
          %s527 = smul.u32 2, %s33
        $region16: #{tpu_custom_call.1} parent=11 // pred_fallthru
          _
      $region12: #{tpu_custom_call.1} parent=5 // pred_fallthru
        _
      %p528 = scmp.lt.s32.totalorder %s24, 2
      // Predicated region
      $region17: #{tpu_custom_call.1} parent=5 // pred_check
        %p529 = pneg %p528
      $region18: #{tpu_custom_call.1} parent=5 // pred_check_branch
        %531 = sbr.rel (%p529) target = $region20
      $region19: #{tpu_custom_call.1} parent=5 // pred_region
        // Predicated region
        $region21: #{tpu_custom_call.1} parent=19 // pred_check
          %p532 = pneg %p82
        $region22: #{tpu_custom_call.1} parent=19 // pred_check_branch
          %534 = sbr.rel (%p532) target = $region24
        $region23: #{tpu_custom_call.1} parent=19 // pred_region
          %p535 = scmp.lt.s32.totalorder %s32, 1
          %s536 = scalar_select %p535, %s32, 1
          %s537 = smul.addr %s536, 4
          %s538 = smul.addr %s537, 4
          %s539 = scalar_lea.vmem %s1, %s538
        $region24: #{tpu_custom_call.1} parent=19 // pred_fallthru
          _
        // Predicated region
        $region25: #{tpu_custom_call.1} parent=19 // pred_check
          %p540 = pneg %p108
        $region26: #{tpu_custom_call.1} parent=19 // pred_check_branch
          %542 = sbr.rel (%p540) target = $region28
        $region27: #{tpu_custom_call.1} parent=19 // pred_region
          %p543 = scmp.lt.s32.totalorder %s32, 1
          %s544 = scalar_select %p543, %s32, 1
          %s545 = smul.addr %s544, 4
          %s546 = smul.addr %s545, 4
          %s547 = scalar_lea.vmem %s2, %s546
        $region28: #{tpu_custom_call.1} parent=19 // pred_fallthru
          _
        // Predicated region
        $region29: #{tpu_custom_call.1} parent=19 // pred_check
          %p548 = pneg %p134
        $region30: #{tpu_custom_call.1} parent=19 // pred_check_branch
          %550 = sbr.rel (%p548) target = $region32
        $region31: #{tpu_custom_call.1} parent=19 // pred_region
          %p551 = scmp.lt.s32.totalorder %s32, 1
          %s552 = scalar_select %p551, %s32, 1
          %s553 = smul.addr %s552, 4
          %s554 = smul.addr %s553, 4
          %s555 = scalar_lea.vmem %s3, %s554
        $region32: #{tpu_custom_call.1} parent=19 // pred_fallthru
          _
        // Predicated region
        $region33: #{tpu_custom_call.1} parent=19 // pred_check
          %p556 = pneg %p160
        $region34: #{tpu_custom_call.1} parent=19 // pred_check_branch
          %558 = sbr.rel (%p556) target = $region36
        $region35: #{tpu_custom_call.1} parent=19 // pred_region
          %p559 = scmp.lt.s32.totalorder %s32, 1
          %s560 = scalar_select %p559, %s32, 1
          %s561 = smul.addr %s560, 4
          %s562 = smul.addr %s561, 8
          %s563 = scalar_lea.vmem %s4, %s562
        $region36: #{tpu_custom_call.1} parent=19 // pred_fallthru
          _
        // Predicated region
        $region37: #{tpu_custom_call.1} parent=19 // pred_check
          %p564 = pneg %p186
        $region38: #{tpu_custom_call.1} parent=19 // pred_check_branch
          %566 = sbr.rel (%p564) target = $region40
        $region39: #{tpu_custom_call.1} parent=19 // pred_region
          %p567 = scmp.lt.s32.totalorder %s32, 1
          %s568 = scalar_select %p567, %s32, 1
          %s569 = smul.addr %s568, 4
          %s570 = smul.addr %s569, 8
          %s571 = scalar_lea.vmem %s5, %s570
        $region40: #{tpu_custom_call.1} parent=19 // pred_fallthru
          _
        // Predicated region
        $region41: #{tpu_custom_call.1} parent=19 // pred_check
          %p572 = pneg %p212
        $region42: #{tpu_custom_call.1} parent=19 // pred_check_branch
          %574 = sbr.rel (%p572) target = $region44
        $region43: #{tpu_custom_call.1} parent=19 // pred_region
          %p575 = scmp.lt.s32.totalorder %s32, 1
          %s576 = scalar_select %p575, %s32, 1
          %s577 = smul.addr %s576, 4
          %s578 = smul.addr %s577, 8
          %s579 = scalar_lea.vmem %s6, %s578
        $region44: #{tpu_custom_call.1} parent=19 // pred_fallthru
          _
        // Predicated region
        $region45: #{tpu_custom_call.1} parent=19 // pred_check
          %p580 = pneg %p238
        $region46: #{tpu_custom_call.1} parent=19 // pred_check_branch
          %582 = sbr.rel (%p580) target = $region48
        $region47: #{tpu_custom_call.1} parent=19 // pred_region
          %p583 = scmp.lt.s32.totalorder %s32, 1
          %s584 = scalar_select %p583, %s32, 1
          %s585 = smul.addr %s584, 4
          %s586 = smul.addr %s585, 4
          %s587 = scalar_lea.vmem %s7, %s586
        $region48: #{tpu_custom_call.1} parent=19 // pred_fallthru
          _
        // Predicated region
        $region49: #{tpu_custom_call.1} parent=19 // pred_check
          %p588 = pneg %p264
        $region50: #{tpu_custom_call.1} parent=19 // pred_check_branch
          %590 = sbr.rel (%p588) target = $region52
        $region51: #{tpu_custom_call.1} parent=19 // pred_region
          %p591 = scmp.lt.s32.totalorder %s32, 1
          %s592 = scalar_select %p591, %s32, 1
          %s593 = scalar_lea.vmem %s8, %s592
        $region52: #{tpu_custom_call.1} parent=19 // pred_fallthru
          _
        // Predicated region
        $region53: #{tpu_custom_call.1} parent=19 // pred_check
          %p594 = pneg %p290
        $region54: #{tpu_custom_call.1} parent=19 // pred_check_branch
          %596 = sbr.rel (%p594) target = $region56
        $region55: #{tpu_custom_call.1} parent=19 // pred_region
          %p597 = scmp.lt.s32.totalorder %s32, 1
          %s598 = scalar_select %p597, %s32, 1
          %s599 = smul.addr %s598, 8
          %s600 = smul.addr %s599, 4
          %s601 = scalar_lea.vmem %s9, %s600
        $region56: #{tpu_custom_call.1} parent=19 // pred_fallthru
          _
        // Predicated region
        $region57: #{tpu_custom_call.1} parent=19 // pred_check
          %p602 = pneg %p316
        $region58: #{tpu_custom_call.1} parent=19 // pred_check_branch
          %604 = sbr.rel (%p602) target = $region60
        $region59: #{tpu_custom_call.1} parent=19 // pred_region
          %p605 = scmp.lt.s32.totalorder %s32, 1
          %s606 = scalar_select %p605, %s32, 1
          %s607 = scalar_lea.vmem %s10, %s606
        $region60: #{tpu_custom_call.1} parent=19 // pred_fallthru
          _
        // Predicated region
        $region61: #{tpu_custom_call.1} parent=19 // pred_check
          %p608 = pneg %p342
        $region62: #{tpu_custom_call.1} parent=19 // pred_check_branch
          %610 = sbr.rel (%p608) target = $region64
        $region63: #{tpu_custom_call.1} parent=19 // pred_region
          %p611 = scmp.lt.s32.totalorder %s32, 1
          %s612 = scalar_select %p611, %s32, 1
          %s613 = smul.addr %s612, 4
          %s614 = smul.addr %s613, 4
          %s615 = scalar_lea.vmem %s11, %s614
        $region64: #{tpu_custom_call.1} parent=19 // pred_fallthru
          _
        // Predicated region
        $region65: #{tpu_custom_call.1} parent=19 // pred_check
          %p616 = pneg %p368
        $region66: #{tpu_custom_call.1} parent=19 // pred_check_branch
          %618 = sbr.rel (%p616) target = $region68
        $region67: #{tpu_custom_call.1} parent=19 // pred_region
          %p619 = scmp.lt.s32.totalorder %s32, 1
          %s620 = scalar_select %p619, %s32, 1
          %s621 = scalar_lea.vmem %s12, %s620
        $region68: #{tpu_custom_call.1} parent=19 // pred_fallthru
          _
        // Predicated region
        $region69: #{tpu_custom_call.1} parent=19 // pred_check
          %p622 = pneg %p394
        $region70: #{tpu_custom_call.1} parent=19 // pred_check_branch
          %624 = sbr.rel (%p622) target = $region72
        $region71: #{tpu_custom_call.1} parent=19 // pred_region
          %p625 = scmp.lt.s32.totalorder %s32, 1
          %s626 = scalar_select %p625, %s32, 1
          %s627 = scalar_lea.vmem %s13, %s626
        $region72: #{tpu_custom_call.1} parent=19 // pred_fallthru
          _
        // Predicated region
        $region73: #{tpu_custom_call.1} parent=19 // pred_check
          %p628 = pneg %p420
        $region74: #{tpu_custom_call.1} parent=19 // pred_check_branch
          %630 = sbr.rel (%p628) target = $region76
        $region75: #{tpu_custom_call.1} parent=19 // pred_region
          %p631 = scmp.lt.s32.totalorder %s32, 1
          %s632 = scalar_select %p631, %s32, 1
          %s633 = scalar_lea.vmem %s14, %s632
        $region76: #{tpu_custom_call.1} parent=19 // pred_fallthru
          _
        // Predicated region
        $region77: #{tpu_custom_call.1} parent=19 // pred_check
          %p634 = pneg %p446
        $region78: #{tpu_custom_call.1} parent=19 // pred_check_branch
          %636 = sbr.rel (%p634) target = $region80
        $region79: #{tpu_custom_call.1} parent=19 // pred_region
          %p637 = scmp.lt.s32.totalorder %s32, 1
          %s638 = scalar_select %p637, %s32, 1
          %s639 = scalar_lea.vmem %s15, %s638
        $region80: #{tpu_custom_call.1} parent=19 // pred_fallthru
          _
        // Predicated region
        $region81: #{tpu_custom_call.1} parent=19 // pred_check
          %p640 = pneg %p472
        $region82: #{tpu_custom_call.1} parent=19 // pred_check_branch
          %642 = sbr.rel (%p640) target = $region84
        $region83: #{tpu_custom_call.1} parent=19 // pred_region
          %p643 = scmp.lt.s32.totalorder %s32, 1
          %s644 = scalar_select %p643, %s32, 1
          %s645 = scalar_lea.vmem %s16, %s644
        $region84: #{tpu_custom_call.1} parent=19 // pred_fallthru
          _
      $region20: #{tpu_custom_call.1} parent=5 // pred_fallthru
        _
      %p646 = scmp.le.s32.totalorder 1, %s24
      %p647 = scmp.lt.s32.totalorder %s24, 3
      %p648 = pnand %p646, %p647
      %p649 = pneg %p648
      // Predicated region
      $region85: #{tpu_custom_call.1} parent=5 // pred_check
        _
      $region86: #{tpu_custom_call.1} parent=5 // pred_check_branch
        %651 = sbr.rel (%p648) target = $region88
      $region87: #{tpu_custom_call.1} parent=5 // pred_region
        %s652 = ssub.s32 %s24, 1
        %s653 = smul.u32 2, %s33
        %p654 = scmp.lt.s32.totalorder %s653, 1
        %s655 = scalar_select %p654, %s653, 1
        %s656 = smul.addr %s655, 8
        %s657 = scalar_lea.vmem %s0, %s656
        %p658 = pneg %p62
        %p659 = pneg %p59
        %p660 = scmp.lt.s32.totalorder %s34, 1
        %s661 = scalar_select %p660, %s34, 1
        %s662 = smul.addr %s661, 4
        %s663 = smul.addr %s662, 4
        %s664 = scalar_lea.vmem %s1, %s663
        %p665 = pneg %p88
        %p666 = pneg %p85
        %p667 = scmp.lt.s32.totalorder %s34, 1
        %s668 = scalar_select %p667, %s34, 1
        %s669 = smul.addr %s668, 4
        %s670 = smul.addr %s669, 4
        %s671 = scalar_lea.vmem %s2, %s670
        %p672 = pneg %p114
        %p673 = pneg %p111
        %p674 = scmp.lt.s32.totalorder %s34, 1
        %s675 = scalar_select %p674, %s34, 1
        %s676 = smul.addr %s675, 4
        %s677 = smul.addr %s676, 4
        %s678 = scalar_lea.vmem %s3, %s677
        %p679 = pneg %p140
        %p680 = pneg %p137
        %p681 = scmp.lt.s32.totalorder %s34, 1
        %s682 = scalar_select %p681, %s34, 1
        %s683 = smul.addr %s682, 4
        %s684 = smul.addr %s683, 8
        %s685 = scalar_lea.vmem %s4, %s684
        %p686 = pneg %p166
        %p687 = pneg %p163
        %p688 = scmp.lt.s32.totalorder %s34, 1
        %s689 = scalar_select %p688, %s34, 1
        %s690 = smul.addr %s689, 4
        %s691 = smul.addr %s690, 8
        %s692 = scalar_lea.vmem %s5, %s691
        %p693 = pneg %p192
        %p694 = pneg %p189
        %p695 = scmp.lt.s32.totalorder %s34, 1
        %s696 = scalar_select %p695, %s34, 1
        %s697 = smul.addr %s696, 4
        %s698 = smul.addr %s697, 8
        %s699 = scalar_lea.vmem %s6, %s698
        %p700 = pneg %p218
        %p701 = pneg %p215
        %p702 = scmp.lt.s32.totalorder %s34, 1
        %s703 = scalar_select %p702, %s34, 1
        %s704 = smul.addr %s703, 4
        %s705 = smul.addr %s704, 4
        %s706 = scalar_lea.vmem %s7, %s705
        %p707 = pneg %p244
        %p708 = pneg %p241
        %p709 = scmp.lt.s32.totalorder %s34, 1
        %s710 = scalar_select %p709, %s34, 1
        %s711 = scalar_lea.vmem %s8, %s710
        %p712 = pneg %p270
        %p713 = pneg %p267
        %p714 = scmp.lt.s32.totalorder %s34, 1
        %s715 = scalar_select %p714, %s34, 1
        %s716 = smul.addr %s715, 8
        %s717 = smul.addr %s716, 4
        %s718 = scalar_lea.vmem %s9, %s717
        %p719 = pneg %p296
        %p720 = pneg %p293
        %p721 = scmp.lt.s32.totalorder %s34, 1
        %s722 = scalar_select %p721, %s34, 1
        %s723 = scalar_lea.vmem %s10, %s722
        %p724 = pneg %p322
        %p725 = pneg %p319
        %p726 = scmp.lt.s32.totalorder %s34, 1
        %s727 = scalar_select %p726, %s34, 1
        %s728 = smul.addr %s727, 4
        %s729 = smul.addr %s728, 4
        %s730 = scalar_lea.vmem %s11, %s729
        %p731 = pneg %p348
        %p732 = pneg %p345
        %p733 = scmp.lt.s32.totalorder %s34, 1
        %s734 = scalar_select %p733, %s34, 1
        %s735 = scalar_lea.vmem %s12, %s734
        %p736 = pneg %p374
        %p737 = pneg %p371
        %p738 = scmp.lt.s32.totalorder %s34, 1
        %s739 = scalar_select %p738, %s34, 1
        %s740 = scalar_lea.vmem %s13, %s739
        %p741 = pneg %p400
        %p742 = pneg %p397
        %p743 = scmp.lt.s32.totalorder %s34, 1
        %s744 = scalar_select %p743, %s34, 1
        %s745 = scalar_lea.vmem %s14, %s744
        %p746 = pneg %p426
        %p747 = pneg %p423
        %p748 = scmp.lt.s32.totalorder %s34, 1
        %s749 = scalar_select %p748, %s34, 1
        %s750 = scalar_lea.vmem %s15, %s749
        %p751 = pneg %p452
        %p752 = pneg %p449
        %p753 = scmp.lt.s32.totalorder %s34, 1
        %s754 = scalar_select %p753, %s34, 1
        %s755 = scalar_lea.vmem %s16, %s754
        %p756 = pneg %p478
        %p757 = pneg %p475
        %p758 = pneg %p504
        %p759 = pneg %p501
        %s760 = smul.u32 2, %s33
        %p761 = scmp.lt.s32.totalorder %s760, 1
        %s762 = scalar_select %p761, %s760, 1
        %s763 = smul.addr %s762, 8
        %s764 = scalar_lea.vmem %s0, %s763
        %s765 = smul.u32 2, %s33
        %p766 = scmp.lt.s32.totalorder %s34, 1
        %s767 = scalar_select %p766, %s34, 1
        %s768 = smul.addr %s767, 4
        %s769 = smul.addr %s768, 4
        %s770 = scalar_lea.vmem %s1, %s769
        %p771 = scmp.lt.s32.totalorder %s34, 1
        %s772 = scalar_select %p771, %s34, 1
        %s773 = smul.addr %s772, 4
        %s774 = smul.addr %s773, 4
        %s775 = scalar_lea.vmem %s2, %s774
        %p776 = scmp.lt.s32.totalorder %s34, 1
        %s777 = scalar_select %p776, %s34, 1
        %s778 = smul.addr %s777, 4
        %s779 = smul.addr %s778, 4
        %s780 = scalar_lea.vmem %s3, %s779
        %p781 = scmp.lt.s32.totalorder %s34, 1
        %s782 = scalar_select %p781, %s34, 1
        %s783 = smul.addr %s782, 4
        %s784 = smul.addr %s783, 8
        %s785 = scalar_lea.vmem %s4, %s784
        %p786 = scmp.lt.s32.totalorder %s34, 1
        %s787 = scalar_select %p786, %s34, 1
        %s788 = smul.addr %s787, 4
        %s789 = smul.addr %s788, 8
        %s790 = scalar_lea.vmem %s5, %s789
        %p791 = scmp.lt.s32.totalorder %s34, 1
        %s792 = scalar_select %p791, %s34, 1
        %s793 = smul.addr %s792, 4
        %s794 = smul.addr %s793, 8
        %s795 = scalar_lea.vmem %s6, %s794
        %p796 = scmp.lt.s32.totalorder %s34, 1
        %s797 = scalar_select %p796, %s34, 1
        %s798 = smul.addr %s797, 4
        %s799 = smul.addr %s798, 4
        %s800 = scalar_lea.vmem %s7, %s799
        %p801 = scmp.lt.s32.totalorder %s34, 1
        %s802 = scalar_select %p801, %s34, 1
        %s803 = scalar_lea.vmem %s8, %s802
        %p804 = scmp.lt.s32.totalorder %s34, 1
        %s805 = scalar_select %p804, %s34, 1
        %s806 = smul.addr %s805, 8
        %s807 = smul.addr %s806, 4
        %s808 = scalar_lea.vmem %s9, %s807
        %p809 = scmp.lt.s32.totalorder %s34, 1
        %s810 = scalar_select %p809, %s34, 1
        %s811 = scalar_lea.vmem %s10, %s810
        %p812 = scmp.lt.s32.totalorder %s34, 1
        %s813 = scalar_select %p812, %s34, 1
        %s814 = smul.addr %s813, 4
        %s815 = smul.addr %s814, 4
        %s816 = scalar_lea.vmem %s11, %s815
        %p817 = scmp.lt.s32.totalorder %s34, 1
        %s818 = scalar_select %p817, %s34, 1
        %s819 = scalar_lea.vmem %s12, %s818
        %p820 = scmp.lt.s32.totalorder %s34, 1
        %s821 = scalar_select %p820, %s34, 1
        %s822 = scalar_lea.vmem %s13, %s821
        %p823 = scmp.lt.s32.totalorder %s34, 1
        %s824 = scalar_select %p823, %s34, 1
        %s825 = scalar_lea.vmem %s14, %s824
        %p826 = scmp.lt.s32.totalorder %s34, 1
        %s827 = scalar_select %p826, %s34, 1
        %s828 = scalar_lea.vmem %s15, %s827
        %p829 = scmp.lt.s32.totalorder %s34, 1
        %s830 = scalar_select %p829, %s34, 1
        %s831 = scalar_lea.vmem %s16, %s830
        %s832 = smul.u32 2, %s33
        %p834 = scmp.eq.s32.totalorder %s34, 0
        // Predicated region
        $region89: #{tpu_custom_call.1} parent=87 // pred_check
          %p835 = pneg %p834
        $region90: #{tpu_custom_call.1} parent=87 // pred_check_branch
          %837 = sbr.rel (%p835) target = $region92
        $region91: #{tpu_custom_call.1} parent=87 // pred_region
          %v838 = vld [vmem:[%s764] sm:$0xff]
          %v839 = vld [vmem:[%s764 + $0x8] sm:$0xff]
          %vm840 = vcmask 261120
          %841 = vst.msk [vmem:[#allocation3] sm:$0xff] %vm840, %v838
          %842 = vst.msk [vmem:[#allocation3 + $0x8] sm:$0xff] %vm840, %v839
          %v843 = vlaneseq
          %v844 = vshrl.u32 %v843, 7
          %v845 = vlaneseq
          %v846 = vand.u32 %v845, 127
          %vm847 = vcmp.le.s32.totalorder %v846, %v844
          %v848 = vsel %vm847, 0.0, -1e+30
          %vm849 = vcmask 64512
          %850 = vst.msk [vmem:[#allocation2] sm:$0xff] %vm849, %v848
        $region92: #{tpu_custom_call.1} parent=87 // pred_fallthru
          _
        %v851 = vld [vmem:[%s770] sm:$0xf]
        %v852 = vld [vmem:[%s770 + $0x4] sm:$0xf]
        %v853 = vld [vmem:[%s770 + $0x8] sm:$0xf]
        %v854 = vld [vmem:[%s770 + $0xc] sm:$0xf]
        %v855 = vld [vmem:[%s775] sm:$0xf]
        %v856 = vld [vmem:[%s775 + $0x4] sm:$0xf]
        %v857 = vld [vmem:[%s775 + $0x8] sm:$0xf]
        %v858 = vld [vmem:[%s775 + $0xc] sm:$0xf]
        %v859 = vld [vmem:[%s780] sm:$0xf]
        %v860 = vld [vmem:[%s780 + $0x4] sm:$0xf]
        %v861 = vld [vmem:[%s780 + $0x8] sm:$0xf]
        %v862 = vld [vmem:[%s780 + $0xc] sm:$0xf]
        %v863 = vld [vmem:[%s800] sm:$0xf]
        %v864 = vld [vmem:[%s800 + $0x4] sm:$0xf]
        %v865 = vld [vmem:[%s800 + $0x8] sm:$0xf]
        %v866 = vld [vmem:[%s800 + $0xc] sm:$0xf]
        %v867 = vld [vmem:[%s808] sm:$0xf]
        %v868 = vld [vmem:[%s808 + $0x4] sm:$0xf]
        %v869 = vld [vmem:[%s808 + $0x8] sm:$0xf]
        %v870 = vld [vmem:[%s808 + $0xc] sm:$0xf]
        %v871 = vld [vmem:[%s808 + $0x10] sm:$0xf]
        %v872 = vld [vmem:[%s808 + $0x14] sm:$0xf]
        %v873 = vld [vmem:[%s808 + $0x18] sm:$0xf]
        %v874 = vld [vmem:[%s808 + $0x1c] sm:$0xf]
        %v875 = vld [vmem:[%s816] sm:$0xf]
        %v876 = vld [vmem:[%s816 + $0x4] sm:$0xf]
        %v877 = vld [vmem:[%s816 + $0x8] sm:$0xf]
        %v878 = vld [vmem:[%s816 + $0xc] sm:$0xf]
        %v879 = vld [vmem:[%s785] sm:$0xff]
        %v880 = vld [vmem:[%s785 + $0x8] sm:$0xff]
        %v881 = vld [vmem:[%s785 + $0x10] sm:$0xff]
        %v882 = vld [vmem:[%s785 + $0x18] sm:$0xff]
        %v883 = vld [vmem:[%s790] sm:$0xff]
        %v884 = vld [vmem:[%s790 + $0x8] sm:$0xff]
        %v885 = vld [vmem:[%s790 + $0x10] sm:$0xff]
        %v886 = vld [vmem:[%s790 + $0x18] sm:$0xff]
        %v887 = vld [vmem:[%s795] sm:$0xff]
        %v888 = vld [vmem:[%s795 + $0x8] sm:$0xff]
        %v889 = vld [vmem:[%s795 + $0x10] sm:$0xff]
        %v890 = vld [vmem:[%s795 + $0x18] sm:$0xff]
        %v891 = vld [vmem:[%s803] sm:$0x1]
        %v892 = vld [vmem:[%s811] sm:$0x1]
        %v893 = vld [vmem:[%s819] sm:$0x1]
        %v894 = vld [vmem:[%s822] sm:$0x1]
        %v895 = vld [vmem:[%s825] sm:$0x1]
        %v896 = vld [vmem:[%s828] sm:$0x1]
        %v897 = vld [vmem:[%s831] sm:$0x1]
        %v898 = vld [vmem:[#allocation2] sm:$0xff]
        %v899 = vld [vmem:[#allocation3] sm:$0xff]
        %v900 = vld [vmem:[#allocation3 + $0x8] sm:$0xff]
        %v901 = vpack.c.bf16 %v899, %v899
        %903 = vset.pattern.permute.xlu0 0
        %904 = vperm.xlu0 %903, %v879
        %v905 = vpop.permute.xlu0 %904
        %908 = vset.pattern.permute.xlu0 0
        %909 = vperm.xlu0 %908, %v880
        %v910 = vpop.permute.xlu0 %909
        %913 = vset.pattern.permute.xlu0 0
        %914 = vperm.xlu0 %913, %v881
        %v915 = vpop.permute.xlu0 %914
        %918 = vset.pattern.permute.xlu0 0
        %919 = vperm.xlu0 %918, %v882
        %v920 = vpop.permute.xlu0 %919
        %v926 = vunpack.c.l.b16 %v851
        %v927 = vunpack.c.l.b16 %v852
        %v928 = vunpack.c.l.b16 %v853
        %v929 = vunpack.c.l.b16 %v854
        %v930 = vpack.c.b16 %v927, %v926
        %v931 = vpack.c.b16 %v929, %v928
        %vm932 = vcmask 261120
        %v934 = vsel %vm932, %v930, 0
        %v937 = vsel %vm932, %v931, 0
        %v940 = vsel %vm932, %v901, 0
        %942 = vmatprep.subr.bf16.mxu0 0
        %943 = vmatpush1.bf16.xpose.msra.mxu0 %v940
        %944 = vmatprep.subr.bf16.mxu0 0
        %945 = vmatpush1.bf16.xpose.msra.mxu0 0
        %946 = vmatprep.subr.bf16.mxu0 0
        %947 = vmatpush1.bf16.xpose.msra.mxu0 0
        %948 = vmatprep.subr.bf16.mxu0 0
        %949 = vmatpush1.bf16.xpose.msra.mxu0 0
        %950 = vmatprep.subr.bf16.mxu0 0
        %951 = vmatpush1.bf16.xpose.msra.mxu0 0
        %952 = vmatprep.subr.bf16.mxu0 0
        %953 = vmatpush1.bf16.xpose.msra.mxu0 0
        %954 = vmatprep.subr.bf16.mxu0 0
        %955 = vmatpush1.bf16.xpose.msra.mxu0 0
        %956 = vmatprep.subr.bf16.mxu0 0
        %957 = vmatpush1.bf16.xpose.msra.mxu0 0
        %958 = vmatprep.subr.bf16.mxu0 0
        %959 = vmatpush1.bf16.xpose.msra.mxu0 0
        %960 = vmatprep.subr.bf16.mxu0 0
        %961 = vmatpush1.bf16.xpose.msra.mxu0 0
        %962 = vmatprep.subr.bf16.mxu0 0
        %963 = vmatpush1.bf16.xpose.msra.mxu0 0
        %964 = vmatprep.subr.bf16.mxu0 0
        %965 = vmatpush1.bf16.xpose.msra.mxu0 0
        %966 = vmatprep.subr.bf16.mxu0 0
        %967 = vmatpush1.bf16.xpose.msra.mxu0 0
        %968 = vmatprep.subr.bf16.mxu0 0
        %969 = vmatpush1.bf16.xpose.msra.mxu0 0
        %970 = vmatprep.subr.bf16.mxu0 0
        %971 = vmatpush1.bf16.xpose.msra.mxu0 0
        %972 = vmatprep.subr.bf16.mxu0 0
        %973 = vmatpush1.bf16.xpose.msra.mxu0 0
        %974 = vmatprep.mubr.bf16.mxu0 0
        %975 = vmatmul.mubr.bf16.gmra.mrb[0].mxu0 %v934
        %v976 = vpop.f32.mrb[0].mxu0
        %v977 = vadd.f32 %v905, %v976
        %v978 = vpop.f32.mrb[0].mxu0
        %v979 = vpop.f32.mrb[0].mxu0
        %v980 = vadd.f32 %v910, %v979
        %v981 = vpop.f32.mrb[0].mxu0
        %982 = vmatprep.mubr.bf16.mxu0 0
        %983 = vmatmul.mubr.bf16.gmra.mrb[0].mxu0 %v937
        %v984 = vpop.f32.mrb[0].mxu0
        %v985 = vadd.f32 %v915, %v984
        %v986 = vpop.f32.mrb[0].mxu0
        %v987 = vpop.f32.mrb[0].mxu0
        %v988 = vadd.f32 %v920, %v987
        %v989 = vpop.f32.mrb[0].mxu0
        %990 = vdwg.mxu0
        %992 = vset.pattern.permute.xlu0 0
        %993 = vperm.xlu0 %992, %v883
        %v994 = vpop.permute.xlu0 %993
        %997 = vset.pattern.permute.xlu0 0
        %998 = vperm.xlu0 %997, %v884
        %v999 = vpop.permute.xlu0 %998
        %1002 = vset.pattern.permute.xlu0 0
        %1003 = vperm.xlu0 %1002, %v885
        %v1004 = vpop.permute.xlu0 %1003
        %1007 = vset.pattern.permute.xlu0 0
        %1008 = vperm.xlu0 %1007, %v886
        %v1009 = vpop.permute.xlu0 %1008
        %v1015 = vunpack.c.l.b16 %v855
        %v1016 = vunpack.c.l.b16 %v856
        %v1017 = vunpack.c.l.b16 %v857
        %v1018 = vunpack.c.l.b16 %v858
        %v1019 = vpack.c.b16 %v1016, %v1015
        %v1020 = vpack.c.b16 %v1018, %v1017
        %v1022 = vsel %vm932, %v1019, 0
        %v1025 = vsel %vm932, %v1020, 0
        %1027 = vmatprep.subr.bf16.mxu0 0
        %1028 = vmatpush1.bf16.xpose.msra.mxu0 %v940
        %1029 = vmatprep.subr.bf16.mxu0 0
        %1030 = vmatpush1.bf16.xpose.msra.mxu0 0
        %1031 = vmatprep.subr.bf16.mxu0 0
        %1032 = vmatpush1.bf16.xpose.msra.mxu0 0
        %1033 = vmatprep.subr.bf16.mxu0 0
        %1034 = vmatpush1.bf16.xpose.msra.mxu0 0
        %1035 = vmatprep.subr.bf16.mxu0 0
        %1036 = vmatpush1.bf16.xpose.msra.mxu0 0
        %1037 = vmatprep.subr.bf16.mxu0 0
        %1038 = vmatpush1.bf16.xpose.msra.mxu0 0
        %1039 = vmatprep.subr.bf16.mxu0 0
        %1040 = vmatpush1.bf16.xpose.msra.mxu0 0
        %1041 = vmatprep.subr.bf16.mxu0 0
        %1042 = vmatpush1.bf16.xpose.msra.mxu0 0
        %1043 = vmatprep.subr.bf16.mxu0 0
        %1044 = vmatpush1.bf16.xpose.msra.mxu0 0
        %1045 = vmatprep.subr.bf16.mxu0 0
        %1046 = vmatpush1.bf16.xpose.msra.mxu0 0
        %1047 = vmatprep.subr.bf16.mxu0 0
        %1048 = vmatpush1.bf16.xpose.msra.mxu0 0
        %1049 = vmatprep.subr.bf16.mxu0 0
        %1050 = vmatpush1.bf16.xpose.msra.mxu0 0
        %1051 = vmatprep.subr.bf16.mxu0 0
        %1052 = vmatpush1.bf16.xpose.msra.mxu0 0
        %1053 = vmatprep.subr.bf16.mxu0 0
        %1054 = vmatpush1.bf16.xpose.msra.mxu0 0
        %1055 = vmatprep.subr.bf16.mxu0 0
        %1056 = vmatpush1.bf16.xpose.msra.mxu0 0
        %1057 = vmatprep.subr.bf16.mxu0 0
        %1058 = vmatpush1.bf16.xpose.msra.mxu0 0
        %1059 = vmatprep.mubr.bf16.mxu0 0
        %1060 = vmatmul.mubr.bf16.gmra.mrb[0].mxu0 %v1022
        %v1061 = vpop.f32.mrb[0].mxu0
        %v1062 = vadd.f32 %v994, %v1061
        %v1063 = vpop.f32.mrb[0].mxu0
        %v1064 = vpop.f32.mrb[0].mxu0
        %v1065 = vadd.f32 %v999, %v1064
        %v1066 = vpop.f32.mrb[0].mxu0
        %1067 = vmatprep.mubr.bf16.mxu0 0
        %1068 = vmatmul.mubr.bf16.gmra.mrb[0].mxu0 %v1025
        %v1069 = vpop.f32.mrb[0].mxu0
        %v1070 = vadd.f32 %v1004, %v1069
        %v1071 = vpop.f32.mrb[0].mxu0
        %v1072 = vpop.f32.mrb[0].mxu0
        %v1073 = vadd.f32 %v1009, %v1072
        %v1074 = vpop.f32.mrb[0].mxu0
        %1075 = vdwg.mxu0
        %1077 = vset.pattern.permute.xlu0 0
        %1078 = vperm.xlu0 %1077, %v887
        %v1079 = vpop.permute.xlu0 %1078
        %1082 = vset.pattern.permute.xlu0 0
        %1083 = vperm.xlu0 %1082, %v888
        %v1084 = vpop.permute.xlu0 %1083
        %1087 = vset.pattern.permute.xlu0 0
        %1088 = vperm.xlu0 %1087, %v889
        %v1089 = vpop.permute.xlu0 %1088
        %1092 = vset.pattern.permute.xlu0 0
        %1093 = vperm.xlu0 %1092, %v890
        %v1094 = vpop.permute.xlu0 %1093
        %v1100 = vunpack.c.l.b16 %v859
        %v1101 = vunpack.c.l.b16 %v860
        %v1102 = vunpack.c.l.b16 %v861
        %v1103 = vunpack.c.l.b16 %v862
        %v1104 = vpack.c.b16 %v1101, %v1100
        %v1105 = vpack.c.b16 %v1103, %v1102
        %v1107 = vsel %vm932, %v1104, 0
        %v1110 = vsel %vm932, %v1105, 0
        %1112 = vmatprep.subr.bf16.mxu0 0
        %1113 = vmatpush1.bf16.xpose.msra.mxu0 %v940
        %1114 = vmatprep.subr.bf16.mxu0 0
        %1115 = vmatpush1.bf16.xpose.msra.mxu0 0
        %1116 = vmatprep.subr.bf16.mxu0 0
        %1117 = vmatpush1.bf16.xpose.msra.mxu0 0
        %1118 = vmatprep.subr.bf16.mxu0 0
        %1119 = vmatpush1.bf16.xpose.msra.mxu0 0
        %1120 = vmatprep.subr.bf16.mxu0 0
        %1121 = vmatpush1.bf16.xpose.msra.mxu0 0
        %1122 = vmatprep.subr.bf16.mxu0 0
        %1123 = vmatpush1.bf16.xpose.msra.mxu0 0
        %1124 = vmatprep.subr.bf16.mxu0 0
        %1125 = vmatpush1.bf16.xpose.msra.mxu0 0
        %1126 = vmatprep.subr.bf16.mxu0 0
        %1127 = vmatpush1.bf16.xpose.msra.mxu0 0
        %1128 = vmatprep.subr.bf16.mxu0 0
        %1129 = vmatpush1.bf16.xpose.msra.mxu0 0
        %1130 = vmatprep.subr.bf16.mxu0 0
        %1131 = vmatpush1.bf16.xpose.msra.mxu0 0
        %1132 = vmatprep.subr.bf16.mxu0 0
        %1133 = vmatpush1.bf16.xpose.msra.mxu0 0
        %1134 = vmatprep.subr.bf16.mxu0 0
        %1135 = vmatpush1.bf16.xpose.msra.mxu0 0
        %1136 = vmatprep.subr.bf16.mxu0 0
        %1137 = vmatpush1.bf16.xpose.msra.mxu0 0
        %1138 = vmatprep.subr.bf16.mxu0 0
        %1139 = vmatpush1.bf16.xpose.msra.mxu0 0
        %1140 = vmatprep.subr.bf16.mxu0 0
        %1141 = vmatpush1.bf16.xpose.msra.mxu0 0
        %1142 = vmatprep.subr.bf16.mxu0 0
        %1143 = vmatpush1.bf16.xpose.msra.mxu0 0
        %1144 = vmatprep.mubr.bf16.mxu0 0
        %1145 = vmatmul.mubr.bf16.gmra.mrb[0].mxu0 %v1107
        %v1146 = vpop.f32.mrb[0].mxu0
        %v1147 = vadd.f32 %v1079, %v1146
        %v1148 = vpop.f32.mrb[0].mxu0
        %v1149 = vpop.f32.mrb[0].mxu0
        %v1150 = vadd.f32 %v1084, %v1149
        %v1151 = vpop.f32.mrb[0].mxu0
        %1152 = vmatprep.mubr.bf16.mxu0 0
        %1153 = vmatmul.mubr.bf16.gmra.mrb[0].mxu0 %v1110
        %v1154 = vpop.f32.mrb[0].mxu0
        %v1155 = vadd.f32 %v1089, %v1154
        %v1156 = vpop.f32.mrb[0].mxu0
        %v1157 = vpop.f32.mrb[0].mxu0
        %v1158 = vadd.f32 %v1094, %v1157
        %v1159 = vpop.f32.mrb[0].mxu0
        %1160 = vdwg.mxu0
        %v1161 = vpack.c.bf16 %v977, %v977
        %v1162 = vpack.c.bf16 %v980, %v980
        %v1163 = vpack.c.bf16 %v985, %v985
        %v1164 = vpack.c.bf16 %v988, %v988
        %v1165 = vpack.c.bf16 %v1062, %v1062
        %v1166 = vpack.c.bf16 %v1065, %v1065
        %v1167 = vpack.c.bf16 %v1070, %v1070
        %v1168 = vpack.c.bf16 %v1073, %v1073
        %1169 = vxpose.xlu0.c.b16.start [1/8] %v1161, 128
        %1170 = vxpose.xlu0.c.b16.cont [2/8] 0, 128
        %1171 = vxpose.xlu0.c.b16.cont [3/8] 0, 128
        %1172 = vxpose.xlu0.c.b16.cont [4/8] 0, 128
        %1173 = vxpose.xlu0.c.b16.cont [5/8] 0, 128
        %1174 = vxpose.xlu0.c.b16.cont [6/8] 0, 128
        %1175 = vxpose.xlu0.c.b16.cont [7/8] 0, 128
        %1176 = vxpose.xlu0.c.b16.end [8/8] 0, 128
        %v1177 = vpop.trf.xlu0
        %v1178 = vpop.trf.xlu0
        %v1179 = vpop.trf.xlu0
        %v1180 = vpop.trf.xlu0
        %v1181 = vpop.trf.xlu0
        %v1182 = vpop.trf.xlu0
        %v1183 = vpop.trf.xlu0
        %v1184 = vpop.trf.xlu0
        %vm1185 = vcmask 64512
        %v1187 = vsel %vm1185, %v1177, 0
        %vm1189 = vcmask 1043456
        %v1191 = vsel %vm1189, %v1165, 0
        %1193 = vmatprep.subr.bf16.mxu0 0
        %1194 = vmatpush1.bf16.msra.mxu0 %v1191
        %1195 = vmatprep.subr.bf16.mxu0 0
        %1196 = vmatpush1.bf16.msra.mxu0 0
        %1197 = vmatprep.subr.bf16.mxu0 0
        %1198 = vmatpush1.bf16.msra.mxu0 0
        %1199 = vmatprep.subr.bf16.mxu0 0
        %1200 = vmatpush1.bf16.msra.mxu0 0
        %1201 = vmatprep.subr.bf16.mxu0 0
        %1202 = vmatpush1.bf16.msra.mxu0 0
        %1203 = vmatprep.subr.bf16.mxu0 0
        %1204 = vmatpush1.bf16.msra.mxu0 0
        %1205 = vmatprep.subr.bf16.mxu0 0
        %1206 = vmatpush1.bf16.msra.mxu0 0
        %1207 = vmatprep.subr.bf16.mxu0 0
        %1208 = vmatpush1.bf16.msra.mxu0 0
        %1209 = vmatprep.subr.bf16.mxu0 0
        %1210 = vmatpush1.bf16.msra.mxu0 0
        %1211 = vmatprep.subr.bf16.mxu0 0
        %1212 = vmatpush1.bf16.msra.mxu0 0
        %1213 = vmatprep.subr.bf16.mxu0 0
        %1214 = vmatpush1.bf16.msra.mxu0 0
        %1215 = vmatprep.subr.bf16.mxu0 0
        %1216 = vmatpush1.bf16.msra.mxu0 0
        %1217 = vmatprep.subr.bf16.mxu0 0
        %1218 = vmatpush1.bf16.msra.mxu0 0
        %1219 = vmatprep.subr.bf16.mxu0 0
        %1220 = vmatpush1.bf16.msra.mxu0 0
        %1221 = vmatprep.subr.bf16.mxu0 0
        %1222 = vmatpush1.bf16.msra.mxu0 0
        %1223 = vmatprep.subr.bf16.mxu0 0
        %1224 = vmatpush1.bf16.msra.mxu0 0
        %1225 = vmatprep.mubr.bf16.mxu0 0
        %1226 = vmatmul.mubr.bf16.gmra.mrb[0].mxu0 %v1187
        %v1227 = vpop.f32.mrb[0].mxu0
        %v1228 = vadd.f32 %v898, %v1227
        %v1229 = vpop.f32.mrb[0].mxu0
        %v1230 = vpop.f32.mrb[0].mxu0
        %v1231 = vpop.f32.mrb[0].mxu0
        %1232 = vdwg.mxu0
        %1233 = vxpose.xlu0.c.b16.start [1/8] %v1162, 128
        %1234 = vxpose.xlu0.c.b16.cont [2/8] 0, 128
        %1235 = vxpose.xlu0.c.b16.cont [3/8] 0, 128
        %1236 = vxpose.xlu0.c.b16.cont [4/8] 0, 128
        %1237 = vxpose.xlu0.c.b16.cont [5/8] 0, 128
        %1238 = vxpose.xlu0.c.b16.cont [6/8] 0, 128
        %1239 = vxpose.xlu0.c.b16.cont [7/8] 0, 128
        %1240 = vxpose.xlu0.c.b16.end [8/8] 0, 128
        %v1241 = vpop.trf.xlu0
        %v1242 = vpop.trf.xlu0
        %v1243 = vpop.trf.xlu0
        %v1244 = vpop.trf.xlu0
        %v1245 = vpop.trf.xlu0
        %v1246 = vpop.trf.xlu0
        %v1247 = vpop.trf.xlu0
        %v1248 = vpop.trf.xlu0
        %v1250 = vsel %vm1185, %v1241, 0
        %v1253 = vsel %vm1189, %v1166, 0
        %1255 = vmatprep.subr.bf16.mxu0 0
        %1256 = vmatpush1.bf16.msra.mxu0 %v1253
        %1257 = vmatprep.subr.bf16.mxu0 0
        %1258 = vmatpush1.bf16.msra.mxu0 0
        %1259 = vmatprep.subr.bf16.mxu0 0
        %1260 = vmatpush1.bf16.msra.mxu0 0
        %1261 = vmatprep.subr.bf16.mxu0 0
        %1262 = vmatpush1.bf16.msra.mxu0 0
        %1263 = vmatprep.subr.bf16.mxu0 0
        %1264 = vmatpush1.bf16.msra.mxu0 0
        %1265 = vmatprep.subr.bf16.mxu0 0
        %1266 = vmatpush1.bf16.msra.mxu0 0
        %1267 = vmatprep.subr.bf16.mxu0 0
        %1268 = vmatpush1.bf16.msra.mxu0 0
        %1269 = vmatprep.subr.bf16.mxu0 0
        %1270 = vmatpush1.bf16.msra.mxu0 0
        %1271 = vmatprep.subr.bf16.mxu0 0
        %1272 = vmatpush1.bf16.msra.mxu0 0
        %1273 = vmatprep.subr.bf16.mxu0 0
        %1274 = vmatpush1.bf16.msra.mxu0 0
        %1275 = vmatprep.subr.bf16.mxu0 0
        %1276 = vmatpush1.bf16.msra.mxu0 0
        %1277 = vmatprep.subr.bf16.mxu0 0
        %1278 = vmatpush1.bf16.msra.mxu0 0
        %1279 = vmatprep.subr.bf16.mxu0 0
        %1280 = vmatpush1.bf16.msra.mxu0 0
        %1281 = vmatprep.subr.bf16.mxu0 0
        %1282 = vmatpush1.bf16.msra.mxu0 0
        %1283 = vmatprep.subr.bf16.mxu0 0
        %1284 = vmatpush1.bf16.msra.mxu0 0
        %1285 = vmatprep.subr.bf16.mxu0 0
        %1286 = vmatpush1.bf16.msra.mxu0 0
        %1287 = vmatprep.mubr.bf16.mxu0 0
        %1288 = vmatmul.mubr.bf16.gmra.mrb[0].mxu0 %v1250
        %v1289 = vpop.f32.mrb[0].mxu0
        %v1290 = vadd.f32 %v898, %v1289
        %v1291 = vpop.f32.mrb[0].mxu0
        %v1292 = vpop.f32.mrb[0].mxu0
        %v1293 = vpop.f32.mrb[0].mxu0
        %1294 = vdwg.mxu0
        %1295 = vxpose.xlu0.c.b16.start [1/8] %v1163, 128
        %1296 = vxpose.xlu0.c.b16.cont [2/8] 0, 128
        %1297 = vxpose.xlu0.c.b16.cont [3/8] 0, 128
        %1298 = vxpose.xlu0.c.b16.cont [4/8] 0, 128
        %1299 = vxpose.xlu0.c.b16.cont [5/8] 0, 128
        %1300 = vxpose.xlu0.c.b16.cont [6/8] 0, 128
        %1301 = vxpose.xlu0.c.b16.cont [7/8] 0, 128
        %1302 = vxpose.xlu0.c.b16.end [8/8] 0, 128
        %v1303 = vpop.trf.xlu0
        %v1304 = vpop.trf.xlu0
        %v1305 = vpop.trf.xlu0
        %v1306 = vpop.trf.xlu0
        %v1307 = vpop.trf.xlu0
        %v1308 = vpop.trf.xlu0
        %v1309 = vpop.trf.xlu0
        %v1310 = vpop.trf.xlu0
        %v1312 = vsel %vm1185, %v1303, 0
        %v1315 = vsel %vm1189, %v1167, 0
        %1317 = vmatprep.subr.bf16.mxu0 0
        %1318 = vmatpush1.bf16.msra.mxu0 %v1315
        %1319 = vmatprep.subr.bf16.mxu0 0
        %1320 = vmatpush1.bf16.msra.mxu0 0
        %1321 = vmatprep.subr.bf16.mxu0 0
        %1322 = vmatpush1.bf16.msra.mxu0 0
        %1323 = vmatprep.subr.bf16.mxu0 0
        %1324 = vmatpush1.bf16.msra.mxu0 0
        %1325 = vmatprep.subr.bf16.mxu0 0
        %1326 = vmatpush1.bf16.msra.mxu0 0
        %1327 = vmatprep.subr.bf16.mxu0 0
        %1328 = vmatpush1.bf16.msra.mxu0 0
        %1329 = vmatprep.subr.bf16.mxu0 0
        %1330 = vmatpush1.bf16.msra.mxu0 0
        %1331 = vmatprep.subr.bf16.mxu0 0
        %1332 = vmatpush1.bf16.msra.mxu0 0
        %1333 = vmatprep.subr.bf16.mxu0 0
        %1334 = vmatpush1.bf16.msra.mxu0 0
        %1335 = vmatprep.subr.bf16.mxu0 0
        %1336 = vmatpush1.bf16.msra.mxu0 0
        %1337 = vmatprep.subr.bf16.mxu0 0
        %1338 = vmatpush1.bf16.msra.mxu0 0
        %1339 = vmatprep.subr.bf16.mxu0 0
        %1340 = vmatpush1.bf16.msra.mxu0 0
        %1341 = vmatprep.subr.bf16.mxu0 0
        %1342 = vmatpush1.bf16.msra.mxu0 0
        %1343 = vmatprep.subr.bf16.mxu0 0
        %1344 = vmatpush1.bf16.msra.mxu0 0
        %1345 = vmatprep.subr.bf16.mxu0 0
        %1346 = vmatpush1.bf16.msra.mxu0 0
        %1347 = vmatprep.subr.bf16.mxu0 0
        %1348 = vmatpush1.bf16.msra.mxu0 0
        %1349 = vmatprep.mubr.bf16.mxu0 0
        %1350 = vmatmul.mubr.bf16.gmra.mrb[0].mxu0 %v1312
        %v1351 = vpop.f32.mrb[0].mxu0
        %v1352 = vadd.f32 %v898, %v1351
        %v1353 = vpop.f32.mrb[0].mxu0
        %v1354 = vpop.f32.mrb[0].mxu0
        %v1355 = vpop.f32.mrb[0].mxu0
        %1356 = vdwg.mxu0
        %1357 = vxpose.xlu0.c.b16.start [1/8] %v1164, 128
        %1358 = vxpose.xlu0.c.b16.cont [2/8] 0, 128
        %1359 = vxpose.xlu0.c.b16.cont [3/8] 0, 128
        %1360 = vxpose.xlu0.c.b16.cont [4/8] 0, 128
        %1361 = vxpose.xlu0.c.b16.cont [5/8] 0, 128
        %1362 = vxpose.xlu0.c.b16.cont [6/8] 0, 128
        %1363 = vxpose.xlu0.c.b16.cont [7/8] 0, 128
        %1364 = vxpose.xlu0.c.b16.end [8/8] 0, 128
        %v1365 = vpop.trf.xlu0
        %v1366 = vpop.trf.xlu0
        %v1367 = vpop.trf.xlu0
        %v1368 = vpop.trf.xlu0
        %v1369 = vpop.trf.xlu0
        %v1370 = vpop.trf.xlu0
        %v1371 = vpop.trf.xlu0
        %v1372 = vpop.trf.xlu0
        %v1374 = vsel %vm1185, %v1365, 0
        %v1377 = vsel %vm1189, %v1168, 0
        %1379 = vmatprep.subr.bf16.mxu0 0
        %1380 = vmatpush1.bf16.msra.mxu0 %v1377
        %1381 = vmatprep.subr.bf16.mxu0 0
        %1382 = vmatpush1.bf16.msra.mxu0 0
        %1383 = vmatprep.subr.bf16.mxu0 0
        %1384 = vmatpush1.bf16.msra.mxu0 0
        %1385 = vmatprep.subr.bf16.mxu0 0
        %1386 = vmatpush1.bf16.msra.mxu0 0
        %1387 = vmatprep.subr.bf16.mxu0 0
        %1388 = vmatpush1.bf16.msra.mxu0 0
        %1389 = vmatprep.subr.bf16.mxu0 0
        %1390 = vmatpush1.bf16.msra.mxu0 0
        %1391 = vmatprep.subr.bf16.mxu0 0
        %1392 = vmatpush1.bf16.msra.mxu0 0
        %1393 = vmatprep.subr.bf16.mxu0 0
        %1394 = vmatpush1.bf16.msra.mxu0 0
        %1395 = vmatprep.subr.bf16.mxu0 0
        %1396 = vmatpush1.bf16.msra.mxu0 0
        %1397 = vmatprep.subr.bf16.mxu0 0
        %1398 = vmatpush1.bf16.msra.mxu0 0
        %1399 = vmatprep.subr.bf16.mxu0 0
        %1400 = vmatpush1.bf16.msra.mxu0 0
        %1401 = vmatprep.subr.bf16.mxu0 0
        %1402 = vmatpush1.bf16.msra.mxu0 0
        %1403 = vmatprep.subr.bf16.mxu0 0
        %1404 = vmatpush1.bf16.msra.mxu0 0
        %1405 = vmatprep.subr.bf16.mxu0 0
        %1406 = vmatpush1.bf16.msra.mxu0 0
        %1407 = vmatprep.subr.bf16.mxu0 0
        %1408 = vmatpush1.bf16.msra.mxu0 0
        %1409 = vmatprep.subr.bf16.mxu0 0
        %1410 = vmatpush1.bf16.msra.mxu0 0
        %1411 = vmatprep.mubr.bf16.mxu0 0
        %1412 = vmatmul.mubr.bf16.gmra.mrb[0].mxu0 %v1374
        %v1413 = vpop.f32.mrb[0].mxu0
        %v1414 = vadd.f32 %v898, %v1413
        %v1415 = vpop.f32.mrb[0].mxu0
        %v1416 = vpop.f32.mrb[0].mxu0
        %v1417 = vpop.f32.mrb[0].mxu0
        %1418 = vdwg.mxu0
        %v1419 = vsel %vm1185, %v1228, -inf
        %1420 = vmax.xlane.f32.xlu0 %v1419
        %v1421 = vpop.xlane.xlu0 %1420
        %v1422 = vsel %vm1185, %v1290, -inf
        %1423 = vmax.xlane.f32.xlu0 %v1422
        %v1424 = vpop.xlane.xlu0 %1423
        %v1425 = vsel %vm1185, %v1352, -inf
        %1426 = vmax.xlane.f32.xlu0 %v1425
        %v1427 = vpop.xlane.xlu0 %1426
        %v1428 = vsel %vm1185, %v1414, -inf
        %1429 = vmax.xlane.f32.xlu0 %v1428
        %v1430 = vpop.xlane.xlu0 %1429
        %v1431 = vsub.f32 %v1228, %v1421
        %v1432 = vsub.f32 %v1290, %v1424
        %v1433 = vsub.f32 %v1352, %v1427
        %v1434 = vsub.f32 %v1414, %v1430
        %v1435 = vmul.f32 %v1431, 1.442695
        %v1436 = vpow.pop %v1435
        %v1437 = vmul.f32 %v1432, 1.442695
        %v1438 = vpow.pop %v1437
        %v1439 = vmul.f32 %v1433, 1.442695
        %v1440 = vpow.pop %v1439
        %v1441 = vmul.f32 %v1434, 1.442695
        %v1442 = vpow.pop %v1441
        %v1443 = vsel %vm1185, %v1436, 0.0
        %1444 = vadd.xlane.f32.xlu0 %v1443
        %v1445 = vpop.xlane.xlu0 %1444
        %v1446 = vsel %vm1185, %v1438, 0.0
        %1447 = vadd.xlane.f32.xlu0 %v1446
        %v1448 = vpop.xlane.xlu0 %1447
        %v1449 = vsel %vm1185, %v1440, 0.0
        %1450 = vadd.xlane.f32.xlu0 %v1449
        %v1451 = vpop.xlane.xlu0 %1450
        %v1452 = vsel %vm1185, %v1442, 0.0
        %1453 = vadd.xlane.f32.xlu0 %v1452
        %v1454 = vpop.xlane.xlu0 %1453
        %v1455 = vrcp.pop %v1445
        %v1456 = vrcp.pop %v1448
        %v1457 = vrcp.pop %v1451
        %v1458 = vrcp.pop %v1454
        %v1459 = vmul.f32 %v1436, %v1455
        %v1460 = vmul.f32 %v1438, %v1456
        %v1461 = vmul.f32 %v1440, %v1457
        %v1462 = vmul.f32 %v1442, %v1458
        %v1463 = vpack.c.bf16 %v1147, %v1147
        %v1464 = vpack.c.bf16 %v1150, %v1150
        %v1465 = vpack.c.bf16 %v1155, %v1155
        %v1466 = vpack.c.bf16 %v1158, %v1158
        %v1467 = vpack.c.bf16 %v1459, %v1459
        %v1468 = vpack.c.bf16 %v1460, %v1460
        %v1469 = vpack.c.bf16 %v1461, %v1461
        %v1470 = vpack.c.bf16 %v1462, %v1462
        %v1472 = vsel %vm1185, %v1463, 0
        %v1475 = vsel %vm1185, %v1467, 0
        %1477 = vmatprep.subr.bf16.mxu0 0
        %1478 = vmatpush1.bf16.xpose.msra.mxu0 %v1475
        %1479 = vmatprep.subr.bf16.mxu0 0
        %1480 = vmatpush1.bf16.xpose.msra.mxu0 0
        %1481 = vmatprep.subr.bf16.mxu0 0
        %1482 = vmatpush1.bf16.xpose.msra.mxu0 0
        %1483 = vmatprep.subr.bf16.mxu0 0
        %1484 = vmatpush1.bf16.xpose.msra.mxu0 0
        %1485 = vmatprep.subr.bf16.mxu0 0
        %1486 = vmatpush1.bf16.xpose.msra.mxu0 0
        %1487 = vmatprep.subr.bf16.mxu0 0
        %1488 = vmatpush1.bf16.xpose.msra.mxu0 0
        %1489 = vmatprep.subr.bf16.mxu0 0
        %1490 = vmatpush1.bf16.xpose.msra.mxu0 0
        %1491 = vmatprep.subr.bf16.mxu0 0
        %1492 = vmatpush1.bf16.xpose.msra.mxu0 0
        %1493 = vmatprep.subr.bf16.mxu0 0
        %1494 = vmatpush1.bf16.xpose.msra.mxu0 0
        %1495 = vmatprep.subr.bf16.mxu0 0
        %1496 = vmatpush1.bf16.xpose.msra.mxu0 0
        %1497 = vmatprep.subr.bf16.mxu0 0
        %1498 = vmatpush1.bf16.xpose.msra.mxu0 0
        %1499 = vmatprep.subr.bf16.mxu0 0
        %1500 = vmatpush1.bf16.xpose.msra.mxu0 0
        %1501 = vmatprep.subr.bf16.mxu0 0
        %1502 = vmatpush1.bf16.xpose.msra.mxu0 0
        %1503 = vmatprep.subr.bf16.mxu0 0
        %1504 = vmatpush1.bf16.xpose.msra.mxu0 0
        %1505 = vmatprep.subr.bf16.mxu0 0
        %1506 = vmatpush1.bf16.xpose.msra.mxu0 0
        %1507 = vmatprep.subr.bf16.mxu0 0
        %1508 = vmatpush1.bf16.xpose.msra.mxu0 0
        %1509 = vmatprep.mubr.bf16.mxu0 0
        %1510 = vmatmul.mubr.bf16.gmra.mrb[0].mxu0 %v1472
        %v1511 = vpop.f32.mrb[0].mxu0
        %v1512 = vadd.f32 0.0, %v1511
        %v1513 = vpop.f32.mrb[0].mxu0
        %v1514 = vpop.f32.mrb[0].mxu0
        %v1515 = vpop.f32.mrb[0].mxu0
        %1516 = vdwg.mxu0
        %v1518 = vsel %vm1185, %v1464, 0
        %v1521 = vsel %vm1185, %v1468, 0
        %1523 = vmatprep.subr.bf16.mxu0 0
        %1524 = vmatpush1.bf16.xpose.msra.mxu0 %v1521
        %1525 = vmatprep.subr.bf16.mxu0 0
        %1526 = vmatpush1.bf16.xpose.msra.mxu0 0
        %1527 = vmatprep.subr.bf16.mxu0 0
        %1528 = vmatpush1.bf16.xpose.msra.mxu0 0
        %1529 = vmatprep.subr.bf16.mxu0 0
        %1530 = vmatpush1.bf16.xpose.msra.mxu0 0
        %1531 = vmatprep.subr.bf16.mxu0 0
        %1532 = vmatpush1.bf16.xpose.msra.mxu0 0
        %1533 = vmatprep.subr.bf16.mxu0 0
        %1534 = vmatpush1.bf16.xpose.msra.mxu0 0
        %1535 = vmatprep.subr.bf16.mxu0 0
        %1536 = vmatpush1.bf16.xpose.msra.mxu0 0
        %1537 = vmatprep.subr.bf16.mxu0 0
        %1538 = vmatpush1.bf16.xpose.msra.mxu0 0
        %1539 = vmatprep.subr.bf16.mxu0 0
        %1540 = vmatpush1.bf16.xpose.msra.mxu0 0
        %1541 = vmatprep.subr.bf16.mxu0 0
        %1542 = vmatpush1.bf16.xpose.msra.mxu0 0
        %1543 = vmatprep.subr.bf16.mxu0 0
        %1544 = vmatpush1.bf16.xpose.msra.mxu0 0
        %1545 = vmatprep.subr.bf16.mxu0 0
        %1546 = vmatpush1.bf16.xpose.msra.mxu0 0
        %1547 = vmatprep.subr.bf16.mxu0 0
        %1548 = vmatpush1.bf16.xpose.msra.mxu0 0
        %1549 = vmatprep.subr.bf16.mxu0 0
        %1550 = vmatpush1.bf16.xpose.msra.mxu0 0
        %1551 = vmatprep.subr.bf16.mxu0 0
        %1552 = vmatpush1.bf16.xpose.msra.mxu0 0
        %1553 = vmatprep.subr.bf16.mxu0 0
        %1554 = vmatpush1.bf16.xpose.msra.mxu0 0
        %1555 = vmatprep.mubr.bf16.mxu0 0
        %1556 = vmatmul.mubr.bf16.gmra.mrb[0].mxu0 %v1518
        %v1557 = vpop.f32.mrb[0].mxu0
        %v1558 = vadd.f32 0.0, %v1557
        %v1559 = vpop.f32.mrb[0].mxu0
        %v1560 = vpop.f32.mrb[0].mxu0
        %v1561 = vpop.f32.mrb[0].mxu0
        %1562 = vdwg.mxu0
        %v1564 = vsel %vm1185, %v1465, 0
        %v1567 = vsel %vm1185, %v1469, 0
        %1569 = vmatprep.subr.bf16.mxu0 0
        %1570 = vmatpush1.bf16.xpose.msra.mxu0 %v1567
        %1571 = vmatprep.subr.bf16.mxu0 0
        %1572 = vmatpush1.bf16.xpose.msra.mxu0 0
        %1573 = vmatprep.subr.bf16.mxu0 0
        %1574 = vmatpush1.bf16.xpose.msra.mxu0 0
        %1575 = vmatprep.subr.bf16.mxu0 0
        %1576 = vmatpush1.bf16.xpose.msra.mxu0 0
        %1577 = vmatprep.subr.bf16.mxu0 0
        %1578 = vmatpush1.bf16.xpose.msra.mxu0 0
        %1579 = vmatprep.subr.bf16.mxu0 0
        %1580 = vmatpush1.bf16.xpose.msra.mxu0 0
        %1581 = vmatprep.subr.bf16.mxu0 0
        %1582 = vmatpush1.bf16.xpose.msra.mxu0 0
        %1583 = vmatprep.subr.bf16.mxu0 0
        %1584 = vmatpush1.bf16.xpose.msra.mxu0 0
        %1585 = vmatprep.subr.bf16.mxu0 0
        %1586 = vmatpush1.bf16.xpose.msra.mxu0 0
        %1587 = vmatprep.subr.bf16.mxu0 0
        %1588 = vmatpush1.bf16.xpose.msra.mxu0 0
        %1589 = vmatprep.subr.bf16.mxu0 0
        %1590 = vmatpush1.bf16.xpose.msra.mxu0 0
        %1591 = vmatprep.subr.bf16.mxu0 0
        %1592 = vmatpush1.bf16.xpose.msra.mxu0 0
        %1593 = vmatprep.subr.bf16.mxu0 0
        %1594 = vmatpush1.bf16.xpose.msra.mxu0 0
        %1595 = vmatprep.subr.bf16.mxu0 0
        %1596 = vmatpush1.bf16.xpose.msra.mxu0 0
        %1597 = vmatprep.subr.bf16.mxu0 0
        %1598 = vmatpush1.bf16.xpose.msra.mxu0 0
        %1599 = vmatprep.subr.bf16.mxu0 0
        %1600 = vmatpush1.bf16.xpose.msra.mxu0 0
        %1601 = vmatprep.mubr.bf16.mxu0 0
        %1602 = vmatmul.mubr.bf16.gmra.mrb[0].mxu0 %v1564
        %v1603 = vpop.f32.mrb[0].mxu0
        %v1604 = vadd.f32 0.0, %v1603
        %v1605 = vpop.f32.mrb[0].mxu0
        %v1606 = vpop.f32.mrb[0].mxu0
        %v1607 = vpop.f32.mrb[0].mxu0
        %1608 = vdwg.mxu0
        %v1610 = vsel %vm1185, %v1466, 0
        %v1613 = vsel %vm1185, %v1470, 0
        %1615 = vmatprep.subr.bf16.mxu0 0
        %1616 = vmatpush1.bf16.xpose.msra.mxu0 %v1613
        %1617 = vmatprep.subr.bf16.mxu0 0
        %1618 = vmatpush1.bf16.xpose.msra.mxu0 0
        %1619 = vmatprep.subr.bf16.mxu0 0
        %1620 = vmatpush1.bf16.xpose.msra.mxu0 0
        %1621 = vmatprep.subr.bf16.mxu0 0
        %1622 = vmatpush1.bf16.xpose.msra.mxu0 0
        %1623 = vmatprep.subr.bf16.mxu0 0
        %1624 = vmatpush1.bf16.xpose.msra.mxu0 0
        %1625 = vmatprep.subr.bf16.mxu0 0
        %1626 = vmatpush1.bf16.xpose.msra.mxu0 0
        %1627 = vmatprep.subr.bf16.mxu0 0
        %1628 = vmatpush1.bf16.xpose.msra.mxu0 0
        %1629 = vmatprep.subr.bf16.mxu0 0
        %1630 = vmatpush1.bf16.xpose.msra.mxu0 0
        %1631 = vmatprep.subr.bf16.mxu0 0
        %1632 = vmatpush1.bf16.xpose.msra.mxu0 0
        %1633 = vmatprep.subr.bf16.mxu0 0
        %1634 = vmatpush1.bf16.xpose.msra.mxu0 0
        %1635 = vmatprep.subr.bf16.mxu0 0
        %1636 = vmatpush1.bf16.xpose.msra.mxu0 0
        %1637 = vmatprep.subr.bf16.mxu0 0
        %1638 = vmatpush1.bf16.xpose.msra.mxu0 0
        %1639 = vmatprep.subr.bf16.mxu0 0
        %1640 = vmatpush1.bf16.xpose.msra.mxu0 0
        %1641 = vmatprep.subr.bf16.mxu0 0
        %1642 = vmatpush1.bf16.xpose.msra.mxu0 0
        %1643 = vmatprep.subr.bf16.mxu0 0
        %1644 = vmatpush1.bf16.xpose.msra.mxu0 0
        %1645 = vmatprep.subr.bf16.mxu0 0
        %1646 = vmatpush1.bf16.xpose.msra.mxu0 0
        %1647 = vmatprep.mubr.bf16.mxu0 0
        %1648 = vmatmul.mubr.bf16.gmra.mrb[0].mxu0 %v1610
        %v1649 = vpop.f32.mrb[0].mxu0
        %v1650 = vadd.f32 0.0, %v1649
        %v1651 = vpop.f32.mrb[0].mxu0
        %v1652 = vpop.f32.mrb[0].mxu0
        %v1653 = vpop.f32.mrb[0].mxu0
        %1654 = vdwg.mxu0
        %v1655 = vpack.c.bf16 %v1558, %v1512
        %v1656 = vpack.c.bf16 %v1650, %v1604
        %v1658 = vlaneseq
        %v1659 = vshrl.u32 %v1658, 7
        %v1660 = vsub.s32 0, %v1659
        %v1661 = vrot.slane %v891, %v1660
        %1663 = vxpose.xlu0.c.b16.start [1/8] %v1655, 128
        %1664 = vxpose.xlu0.c.b16.cont [2/8] %v1656, 128
        %1665 = vxpose.xlu0.c.b16.cont [3/8] 0, 128
        %1666 = vxpose.xlu0.c.b16.cont [4/8] 0, 128
        %1667 = vxpose.xlu0.c.b16.cont [5/8] 0, 128
        %1668 = vxpose.xlu0.c.b16.cont [6/8] 0, 128
        %1669 = vxpose.xlu0.c.b16.cont [7/8] 0, 128
        %1670 = vxpose.xlu0.c.b16.end [8/8] 0, 128
        %v1671 = vpop.trf.xlu0
        %v1672 = vpop.trf.xlu0
        %v1673 = vpop.trf.xlu0
        %v1674 = vpop.trf.xlu0
        %v1675 = vpop.trf.xlu0
        %v1676 = vpop.trf.xlu0
        %v1677 = vpop.trf.xlu0
        %v1678 = vpop.trf.xlu0
        %v1683 = vunpack.c.l.b16 %v863
        %v1684 = vunpack.c.l.b16 %v864
        %v1685 = vunpack.c.l.b16 %v865
        %v1686 = vunpack.c.l.b16 %v866
        %v1687 = vpack.c.b16 %v1684, %v1683
        %v1688 = vpack.c.b16 %v1686, %v1685
        %v1690 = vsel %vm932, %v1671, 0
        %v1693 = vsel %vm932, %v1687, 0
        %v1696 = vsel %vm932, %v1688, 0
        %1698 = vmatprep.subr.bf16.mxu0 0
        %1699 = vmatpush1.bf16.xpose.msra.mxu0 %v1693
        %1700 = vmatprep.subr.bf16.mxu0 0
        %1701 = vmatpush1.bf16.xpose.msra.mxu0 %v1696
        %1702 = vmatprep.subr.bf16.mxu0 0
        %1703 = vmatpush1.bf16.xpose.msra.mxu0 0
        %1704 = vmatprep.subr.bf16.mxu0 0
        %1705 = vmatpush1.bf16.xpose.msra.mxu0 0
        %1706 = vmatprep.subr.bf16.mxu0 0
        %1707 = vmatpush1.bf16.xpose.msra.mxu0 0
        %1708 = vmatprep.subr.bf16.mxu0 0
        %1709 = vmatpush1.bf16.xpose.msra.mxu0 0
        %1710 = vmatprep.subr.bf16.mxu0 0
        %1711 = vmatpush1.bf16.xpose.msra.mxu0 0
        %1712 = vmatprep.subr.bf16.mxu0 0
        %1713 = vmatpush1.bf16.xpose.msra.mxu0 0
        %1714 = vmatprep.subr.bf16.mxu0 0
        %1715 = vmatpush1.bf16.xpose.msra.mxu0 0
        %1716 = vmatprep.subr.bf16.mxu0 0
        %1717 = vmatpush1.bf16.xpose.msra.mxu0 0
        %1718 = vmatprep.subr.bf16.mxu0 0
        %1719 = vmatpush1.bf16.xpose.msra.mxu0 0
        %1720 = vmatprep.subr.bf16.mxu0 0
        %1721 = vmatpush1.bf16.xpose.msra.mxu0 0
        %1722 = vmatprep.subr.bf16.mxu0 0
        %1723 = vmatpush1.bf16.xpose.msra.mxu0 0
        %1724 = vmatprep.subr.bf16.mxu0 0
        %1725 = vmatpush1.bf16.xpose.msra.mxu0 0
        %1726 = vmatprep.subr.bf16.mxu0 0
        %1727 = vmatpush1.bf16.xpose.msra.mxu0 0
        %1728 = vmatprep.subr.bf16.mxu0 0
        %1729 = vmatpush1.bf16.xpose.msra.mxu0 0
        %1730 = vmatprep.mubr.bf16.mxu0 0
        %1731 = vmatmul.mubr.bf16.gmra.mrb[0].mxu0 %v1690
        %v1732 = vpop.f32.mrb[0].mxu0
        %v1733 = vadd.f32 %v1661, %v1732
        %v1734 = vpop.f32.mrb[0].mxu0
        %v1735 = vpop.f32.mrb[0].mxu0
        %v1736 = vpop.f32.mrb[0].mxu0
        %1737 = vdwg.mxu0
        %v1738 = vadd.f32 %v899, %v1733
        %v1739 = vsel %vm932, %v1738, 0.0
        %1740 = vadd.xlane.f32.xlu0 %v1739
        %v1741 = vpop.xlane.xlu0 %1740
        %v1742 = vrcp.pop 32.0
        %v1743 = vmul.f32 %v1741, %v1742
        %v1744 = vsub.f32 %v1738, %v1743
        %v1745 = vmul.f32 %v1744, %v1744
        %v1746 = vsel %vm932, %v1745, 0.0
        %1747 = vadd.xlane.f32.xlu0 %v1746
        %v1748 = vpop.xlane.xlu0 %1747
        %v1749 = vmul.f32 %v1748, %v1742
        %v1750 = vadd.f32 %v1749, 1e-05
        %v1751 = vrsqrt.pop %v1750
        %v1752 = vmul.f32 %v1744, %v1751
        %v1754 = vlaneseq
        %v1755 = vshrl.u32 %v1754, 7
        %v1756 = vsub.s32 0, %v1755
        %v1757 = vrot.slane %v894, %v1756
        %v1759 = vmul.f32 %v1752, %v1757
        %v1761 = vlaneseq
        %v1762 = vshrl.u32 %v1761, 7
        %v1763 = vsub.s32 0, %v1762
        %v1764 = vrot.slane %v895, %v1763
        %v1766 = vadd.f32 %v1759, %v1764
        %v1767 = vpack.c.bf16 %v1766, %v1766
        %v1769 = vlaneseq
        %v1770 = vshrl.u32 %v1769, 7
        %v1771 = vsub.s32 0, %v1770
        %v1772 = vrot.slane %v892, %v1771
        %v1782 = vunpack.c.l.b16 %v867
        %v1783 = vunpack.c.l.b16 %v868
        %v1784 = vunpack.c.l.b16 %v869
        %v1785 = vunpack.c.l.b16 %v870
        %v1786 = vunpack.c.l.b16 %v871
        %v1787 = vunpack.c.l.b16 %v872
        %v1788 = vunpack.c.l.b16 %v873
        %v1789 = vunpack.c.l.b16 %v874
        %v1790 = vpack.c.b16 %v1783, %v1782
        %v1791 = vpack.c.b16 %v1785, %v1784
        %v1792 = vpack.c.b16 %v1787, %v1786
        %v1793 = vpack.c.b16 %v1789, %v1788
        %v1795 = vsel %vm932, %v1767, 0
        %v1798 = vsel %vm932, %v1790, 0
        %v1801 = vsel %vm932, %v1791, 0
        %v1804 = vsel %vm932, %v1792, 0
        %v1807 = vsel %vm932, %v1793, 0
        %1809 = vmatprep.subr.bf16.mxu0 0
        %1810 = vmatpush1.bf16.xpose.msra.mxu0 %v1798
        %1811 = vmatprep.subr.bf16.mxu0 0
        %1812 = vmatpush1.bf16.xpose.msra.mxu0 %v1801
        %1813 = vmatprep.subr.bf16.mxu0 0
        %1814 = vmatpush1.bf16.xpose.msra.mxu0 %v1804
        %1815 = vmatprep.subr.bf16.mxu0 0
        %1816 = vmatpush1.bf16.xpose.msra.mxu0 %v1807
        %1817 = vmatprep.subr.bf16.mxu0 0
        %1818 = vmatpush1.bf16.xpose.msra.mxu0 0
        %1819 = vmatprep.subr.bf16.mxu0 0
        %1820 = vmatpush1.bf16.xpose.msra.mxu0 0
        %1821 = vmatprep.subr.bf16.mxu0 0
        %1822 = vmatpush1.bf16.xpose.msra.mxu0 0
        %1823 = vmatprep.subr.bf16.mxu0 0
        %1824 = vmatpush1.bf16.xpose.msra.mxu0 0
        %1825 = vmatprep.subr.bf16.mxu0 0
        %1826 = vmatpush1.bf16.xpose.msra.mxu0 0
        %1827 = vmatprep.subr.bf16.mxu0 0
        %1828 = vmatpush1.bf16.xpose.msra.mxu0 0
        %1829 = vmatprep.subr.bf16.mxu0 0
        %1830 = vmatpush1.bf16.xpose.msra.mxu0 0
        %1831 = vmatprep.subr.bf16.mxu0 0
        %1832 = vmatpush1.bf16.xpose.msra.mxu0 0
        %1833 = vmatprep.subr.bf16.mxu0 0
        %1834 = vmatpush1.bf16.xpose.msra.mxu0 0
        %1835 = vmatprep.subr.bf16.mxu0 0
        %1836 = vmatpush1.bf16.xpose.msra.mxu0 0
        %1837 = vmatprep.subr.bf16.mxu0 0
        %1838 = vmatpush1.bf16.xpose.msra.mxu0 0
        %1839 = vmatprep.subr.bf16.mxu0 0
        %1840 = vmatpush1.bf16.xpose.msra.mxu0 0
        %1841 = vmatprep.mubr.bf16.mxu0 0
        %1842 = vmatmul.mubr.bf16.gmra.mrb[0].mxu0 %v1795
        %v1843 = vpop.f32.mrb[0].mxu0
        %v1844 = vadd.f32 %v1772, %v1843
        %v1845 = vpop.f32.mrb[0].mxu0
        %v1846 = vpop.f32.mrb[0].mxu0
        %v1847 = vpop.f32.mrb[0].mxu0
        %1848 = vdwg.mxu0
        %v1849 = vmax.f32 %v1844, 0.0
        %v1850 = vpack.c.bf16 %v1849, %v1849
        %v1852 = vlaneseq
        %v1853 = vshrl.u32 %v1852, 7
        %v1854 = vsub.s32 0, %v1853
        %v1855 = vrot.slane %v893, %v1854
        %v1861 = vunpack.c.l.b16 %v875
        %v1862 = vunpack.c.l.b16 %v876
        %v1863 = vunpack.c.l.b16 %v877
        %v1864 = vunpack.c.l.b16 %v878
        %v1865 = vpack.c.b16 %v1862, %v1861
        %v1866 = vpack.c.b16 %v1864, %v1863
        %vm1867 = vcmask 523264
        %v1869 = vsel %vm1867, %v1850, 0
        %v1872 = vsel %vm1867, %v1865, 0
        %v1875 = vsel %vm1867, %v1866, 0
        %1877 = vmatprep.subr.bf16.mxu0 0
        %1878 = vmatpush1.bf16.xpose.msra.mxu0 %v1872
        %1879 = vmatprep.subr.bf16.mxu0 0
        %1880 = vmatpush1.bf16.xpose.msra.mxu0 %v1875
        %1881 = vmatprep.subr.bf16.mxu0 0
        %1882 = vmatpush1.bf16.xpose.msra.mxu0 0
        %1883 = vmatprep.subr.bf16.mxu0 0
        %1884 = vmatpush1.bf16.xpose.msra.mxu0 0
        %1885 = vmatprep.subr.bf16.mxu0 0
        %1886 = vmatpush1.bf16.xpose.msra.mxu0 0
        %1887 = vmatprep.subr.bf16.mxu0 0
        %1888 = vmatpush1.bf16.xpose.msra.mxu0 0
        %1889 = vmatprep.subr.bf16.mxu0 0
        %1890 = vmatpush1.bf16.xpose.msra.mxu0 0
        %1891 = vmatprep.subr.bf16.mxu0 0
        %1892 = vmatpush1.bf16.xpose.msra.mxu0 0
        %1893 = vmatprep.subr.bf16.mxu0 0
        %1894 = vmatpush1.bf16.xpose.msra.mxu0 0
        %1895 = vmatprep.subr.bf16.mxu0 0
        %1896 = vmatpush1.bf16.xpose.msra.mxu0 0
        %1897 = vmatprep.subr.bf16.mxu0 0
        %1898 = vmatpush1.bf16.xpose.msra.mxu0 0
        %1899 = vmatprep.subr.bf16.mxu0 0
        %1900 = vmatpush1.bf16.xpose.msra.mxu0 0
        %1901 = vmatprep.subr.bf16.mxu0 0
        %1902 = vmatpush1.bf16.xpose.msra.mxu0 0
        %1903 = vmatprep.subr.bf16.mxu0 0
        %1904 = vmatpush1.bf16.xpose.msra.mxu0 0
        %1905 = vmatprep.subr.bf16.mxu0 0
        %1906 = vmatpush1.bf16.xpose.msra.mxu0 0
        %1907 = vmatprep.subr.bf16.mxu0 0
        %1908 = vmatpush1.bf16.xpose.msra.mxu0 0
        %1909 = vmatprep.mubr.bf16.mxu0 0
        %1910 = vmatmul.mubr.bf16.gmra.mrb[0].mxu0 %v1869
        %v1911 = vpop.f32.mrb[0].mxu0
        %v1912 = vadd.f32 %v1855, %v1911
        %v1913 = vpop.f32.mrb[0].mxu0
        %v1914 = vpop.f32.mrb[0].mxu0
        %v1915 = vpop.f32.mrb[0].mxu0
        %1916 = vdwg.mxu0
        %v1917 = vadd.f32 %v1766, %v1912
        %v1918 = vsel %vm932, %v1917, 0.0
        %1919 = vadd.xlane.f32.xlu0 %v1918
        %v1920 = vpop.xlane.xlu0 %1919
        %v1921 = vmul.f32 %v1920, %v1742
        %v1922 = vsub.f32 %v1917, %v1921
        %v1923 = vmul.f32 %v1922, %v1922
        %v1924 = vsel %vm932, %v1923, 0.0
        %1925 = vadd.xlane.f32.xlu0 %v1924
        %v1926 = vpop.xlane.xlu0 %1925
        %v1927 = vmul.f32 %v1926, %v1742
        %v1928 = vadd.f32 %v1927, 1e-05
        %v1929 = vrsqrt.pop %v1928
        %v1930 = vmul.f32 %v1922, %v1929
        %v1932 = vlaneseq
        %v1933 = vshrl.u32 %v1932, 7
        %v1934 = vsub.s32 0, %v1933
        %v1935 = vrot.slane %v896, %v1934
        %v1937 = vmul.f32 %v1930, %v1935
        %v1939 = vlaneseq
        %v1940 = vshrl.u32 %v1939, 7
        %v1941 = vsub.s32 0, %v1940
        %v1942 = vrot.slane %v897, %v1941
        %v1944 = vadd.f32 %v1937, %v1942
        %1945 = vst.msk [vmem:[#allocation3] sm:$0xff] %vm932, %v1944
        %v1946 = vpack.c.bf16 %v900, %v900
        %v1948 = vsel %vm932, %v1946, 0
        %1950 = vmatprep.subr.bf16.mxu0 0
        %1951 = vmatpush1.bf16.xpose.msra.mxu0 %v1948
        %1952 = vmatprep.subr.bf16.mxu0 0
        %1953 = vmatpush1.bf16.xpose.msra.mxu0 0
        %1954 = vmatprep.subr.bf16.mxu0 0
        %1955 = vmatpush1.bf16.xpose.msra.mxu0 0
        %1956 = vmatprep.subr.bf16.mxu0 0
        %1957 = vmatpush1.bf16.xpose.msra.mxu0 0
        %1958 = vmatprep.subr.bf16.mxu0 0
        %1959 = vmatpush1.bf16.xpose.msra.mxu0 0
        %1960 = vmatprep.subr.bf16.mxu0 0
        %1961 = vmatpush1.bf16.xpose.msra.mxu0 0
        %1962 = vmatprep.subr.bf16.mxu0 0
        %1963 = vmatpush1.bf16.xpose.msra.mxu0 0
        %1964 = vmatprep.subr.bf16.mxu0 0
        %1965 = vmatpush1.bf16.xpose.msra.mxu0 0
        %1966 = vmatprep.subr.bf16.mxu0 0
        %1967 = vmatpush1.bf16.xpose.msra.mxu0 0
        %1968 = vmatprep.subr.bf16.mxu0 0
        %1969 = vmatpush1.bf16.xpose.msra.mxu0 0
        %1970 = vmatprep.subr.bf16.mxu0 0
        %1971 = vmatpush1.bf16.xpose.msra.mxu0 0
        %1972 = vmatprep.subr.bf16.mxu0 0
        %1973 = vmatpush1.bf16.xpose.msra.mxu0 0
        %1974 = vmatprep.subr.bf16.mxu0 0
        %1975 = vmatpush1.bf16.xpose.msra.mxu0 0
        %1976 = vmatprep.subr.bf16.mxu0 0
        %1977 = vmatpush1.bf16.xpose.msra.mxu0 0
        %1978 = vmatprep.subr.bf16.mxu0 0
        %1979 = vmatpush1.bf16.xpose.msra.mxu0 0
        %1980 = vmatprep.subr.bf16.mxu0 0
        %1981 = vmatpush1.bf16.xpose.msra.mxu0 0
        %1982 = vmatprep.mubr.bf16.mxu0 0
        %1983 = vmatmul.mubr.bf16.gmra.mrb[0].mxu0 %v934
        %v1984 = vpop.f32.mrb[0].mxu0
        %v1985 = vadd.f32 %v905, %v1984
        %v1986 = vpop.f32.mrb[0].mxu0
        %v1987 = vpop.f32.mrb[0].mxu0
        %v1988 = vadd.f32 %v910, %v1987
        %v1989 = vpop.f32.mrb[0].mxu0
        %1990 = vmatprep.mubr.bf16.mxu0 0
        %1991 = vmatmul.mubr.bf16.gmra.mrb[0].mxu0 %v937
        %v1992 = vpop.f32.mrb[0].mxu0
        %v1993 = vadd.f32 %v915, %v1992
        %v1994 = vpop.f32.mrb[0].mxu0
        %v1995 = vpop.f32.mrb[0].mxu0
        %v1996 = vadd.f32 %v920, %v1995
        %v1997 = vpop.f32.mrb[0].mxu0
        %1998 = vdwg.mxu0
        %1999 = vmatprep.subr.bf16.mxu0 0
        %2000 = vmatpush1.bf16.xpose.msra.mxu0 %v1948
        %2001 = vmatprep.subr.bf16.mxu0 0
        %2002 = vmatpush1.bf16.xpose.msra.mxu0 0
        %2003 = vmatprep.subr.bf16.mxu0 0
        %2004 = vmatpush1.bf16.xpose.msra.mxu0 0
        %2005 = vmatprep.subr.bf16.mxu0 0
        %2006 = vmatpush1.bf16.xpose.msra.mxu0 0
        %2007 = vmatprep.subr.bf16.mxu0 0
        %2008 = vmatpush1.bf16.xpose.msra.mxu0 0
        %2009 = vmatprep.subr.bf16.mxu0 0
        %2010 = vmatpush1.bf16.xpose.msra.mxu0 0
        %2011 = vmatprep.subr.bf16.mxu0 0
        %2012 = vmatpush1.bf16.xpose.msra.mxu0 0
        %2013 = vmatprep.subr.bf16.mxu0 0
        %2014 = vmatpush1.bf16.xpose.msra.mxu0 0
        %2015 = vmatprep.subr.bf16.mxu0 0
        %2016 = vmatpush1.bf16.xpose.msra.mxu0 0
        %2017 = vmatprep.subr.bf16.mxu0 0
        %2018 = vmatpush1.bf16.xpose.msra.mxu0 0
        %2019 = vmatprep.subr.bf16.mxu0 0
        %2020 = vmatpush1.bf16.xpose.msra.mxu0 0
        %2021 = vmatprep.subr.bf16.mxu0 0
        %2022 = vmatpush1.bf16.xpose.msra.mxu0 0
        %2023 = vmatprep.subr.bf16.mxu0 0
        %2024 = vmatpush1.bf16.xpose.msra.mxu0 0
        %2025 = vmatprep.subr.bf16.mxu0 0
        %2026 = vmatpush1.bf16.xpose.msra.mxu0 0
        %2027 = vmatprep.subr.bf16.mxu0 0
        %2028 = vmatpush1.bf16.xpose.msra.mxu0 0
        %2029 = vmatprep.subr.bf16.mxu0 0
        %2030 = vmatpush1.bf16.xpose.msra.mxu0 0
        %2031 = vmatprep.mubr.bf16.mxu0 0
        %2032 = vmatmul.mubr.bf16.gmra.mrb[0].mxu0 %v1022
        %v2033 = vpop.f32.mrb[0].mxu0
        %v2034 = vadd.f32 %v994, %v2033
        %v2035 = vpop.f32.mrb[0].mxu0
        %v2036 = vpop.f32.mrb[0].mxu0
        %v2037 = vadd.f32 %v999, %v2036
        %v2038 = vpop.f32.mrb[0].mxu0
        %2039 = vmatprep.mubr.bf16.mxu0 0
        %2040 = vmatmul.mubr.bf16.gmra.mrb[0].mxu0 %v1025
        %v2041 = vpop.f32.mrb[0].mxu0
        %v2042 = vadd.f32 %v1004, %v2041
        %v2043 = vpop.f32.mrb[0].mxu0
        %v2044 = vpop.f32.mrb[0].mxu0
        %v2045 = vadd.f32 %v1009, %v2044
        %v2046 = vpop.f32.mrb[0].mxu0
        %2047 = vdwg.mxu0
        %2048 = vmatprep.subr.bf16.mxu0 0
        %2049 = vmatpush1.bf16.xpose.msra.mxu0 %v1948
        %2050 = vmatprep.subr.bf16.mxu0 0
        %2051 = vmatpush1.bf16.xpose.msra.mxu0 0
        %2052 = vmatprep.subr.bf16.mxu0 0
        %2053 = vmatpush1.bf16.xpose.msra.mxu0 0
        %2054 = vmatprep.subr.bf16.mxu0 0
        %2055 = vmatpush1.bf16.xpose.msra.mxu0 0
        %2056 = vmatprep.subr.bf16.mxu0 0
        %2057 = vmatpush1.bf16.xpose.msra.mxu0 0
        %2058 = vmatprep.subr.bf16.mxu0 0
        %2059 = vmatpush1.bf16.xpose.msra.mxu0 0
        %2060 = vmatprep.subr.bf16.mxu0 0
        %2061 = vmatpush1.bf16.xpose.msra.mxu0 0
        %2062 = vmatprep.subr.bf16.mxu0 0
        %2063 = vmatpush1.bf16.xpose.msra.mxu0 0
        %2064 = vmatprep.subr.bf16.mxu0 0
        %2065 = vmatpush1.bf16.xpose.msra.mxu0 0
        %2066 = vmatprep.subr.bf16.mxu0 0
        %2067 = vmatpush1.bf16.xpose.msra.mxu0 0
        %2068 = vmatprep.subr.bf16.mxu0 0
        %2069 = vmatpush1.bf16.xpose.msra.mxu0 0
        %2070 = vmatprep.subr.bf16.mxu0 0
        %2071 = vmatpush1.bf16.xpose.msra.mxu0 0
        %2072 = vmatprep.subr.bf16.mxu0 0
        %2073 = vmatpush1.bf16.xpose.msra.mxu0 0
        %2074 = vmatprep.subr.bf16.mxu0 0
        %2075 = vmatpush1.bf16.xpose.msra.mxu0 0
        %2076 = vmatprep.subr.bf16.mxu0 0
        %2077 = vmatpush1.bf16.xpose.msra.mxu0 0
        %2078 = vmatprep.subr.bf16.mxu0 0
        %2079 = vmatpush1.bf16.xpose.msra.mxu0 0
        %2080 = vmatprep.mubr.bf16.mxu0 0
        %2081 = vmatmul.mubr.bf16.gmra.mrb[0].mxu0 %v1107
        %v2082 = vpop.f32.mrb[0].mxu0
        %v2083 = vadd.f32 %v1079, %v2082
        %v2084 = vpop.f32.mrb[0].mxu0
        %v2085 = vpop.f32.mrb[0].mxu0
        %v2086 = vadd.f32 %v1084, %v2085
        %v2087 = vpop.f32.mrb[0].mxu0
        %2088 = vmatprep.mubr.bf16.mxu0 0
        %2089 = vmatmul.mubr.bf16.gmra.mrb[0].mxu0 %v1110
        %v2090 = vpop.f32.mrb[0].mxu0
        %v2091 = vadd.f32 %v1089, %v2090
        %v2092 = vpop.f32.mrb[0].mxu0
        %v2093 = vpop.f32.mrb[0].mxu0
        %v2094 = vadd.f32 %v1094, %v2093
        %v2095 = vpop.f32.mrb[0].mxu0
        %2096 = vdwg.mxu0
        %v2097 = vpack.c.bf16 %v1985, %v1985
        %v2098 = vpack.c.bf16 %v1988, %v1988
        %v2099 = vpack.c.bf16 %v1993, %v1993
        %v2100 = vpack.c.bf16 %v1996, %v1996
        %v2101 = vpack.c.bf16 %v2034, %v2034
        %v2102 = vpack.c.bf16 %v2037, %v2037
        %v2103 = vpack.c.bf16 %v2042, %v2042
        %v2104 = vpack.c.bf16 %v2045, %v2045
        %2105 = vxpose.xlu0.c.b16.start [1/8] %v2097, 128
        %2106 = vxpose.xlu0.c.b16.cont [2/8] 0, 128
        %2107 = vxpose.xlu0.c.b16.cont [3/8] 0, 128
        %2108 = vxpose.xlu0.c.b16.cont [4/8] 0, 128
        %2109 = vxpose.xlu0.c.b16.cont [5/8] 0, 128
        %2110 = vxpose.xlu0.c.b16.cont [6/8] 0, 128
        %2111 = vxpose.xlu0.c.b16.cont [7/8] 0, 128
        %2112 = vxpose.xlu0.c.b16.end [8/8] 0, 128
        %v2113 = vpop.trf.xlu0
        %v2114 = vpop.trf.xlu0
        %v2115 = vpop.trf.xlu0
        %v2116 = vpop.trf.xlu0
        %v2117 = vpop.trf.xlu0
        %v2118 = vpop.trf.xlu0
        %v2119 = vpop.trf.xlu0
        %v2120 = vpop.trf.xlu0
        %v2122 = vsel %vm1185, %v2113, 0
        %v2125 = vsel %vm1189, %v2101, 0
        %2127 = vmatprep.subr.bf16.mxu0 0
        %2128 = vmatpush1.bf16.msra.mxu0 %v2125
        %2129 = vmatprep.subr.bf16.mxu0 0
        %2130 = vmatpush1.bf16.msra.mxu0 0
        %2131 = vmatprep.subr.bf16.mxu0 0
        %2132 = vmatpush1.bf16.msra.mxu0 0
        %2133 = vmatprep.subr.bf16.mxu0 0
        %2134 = vmatpush1.bf16.msra.mxu0 0
        %2135 = vmatprep.subr.bf16.mxu0 0
        %2136 = vmatpush1.bf16.msra.mxu0 0
        %2137 = vmatprep.subr.bf16.mxu0 0
        %2138 = vmatpush1.bf16.msra.mxu0 0
        %2139 = vmatprep.subr.bf16.mxu0 0
        %2140 = vmatpush1.bf16.msra.mxu0 0
        %2141 = vmatprep.subr.bf16.mxu0 0
        %2142 = vmatpush1.bf16.msra.mxu0 0
        %2143 = vmatprep.subr.bf16.mxu0 0
        %2144 = vmatpush1.bf16.msra.mxu0 0
        %2145 = vmatprep.subr.bf16.mxu0 0
        %2146 = vmatpush1.bf16.msra.mxu0 0
        %2147 = vmatprep.subr.bf16.mxu0 0
        %2148 = vmatpush1.bf16.msra.mxu0 0
        %2149 = vmatprep.subr.bf16.mxu0 0
        %2150 = vmatpush1.bf16.msra.mxu0 0
        %2151 = vmatprep.subr.bf16.mxu0 0
        %2152 = vmatpush1.bf16.msra.mxu0 0
        %2153 = vmatprep.subr.bf16.mxu0 0
        %2154 = vmatpush1.bf16.msra.mxu0 0
        %2155 = vmatprep.subr.bf16.mxu0 0
        %2156 = vmatpush1.bf16.msra.mxu0 0
        %2157 = vmatprep.subr.bf16.mxu0 0
        %2158 = vmatpush1.bf16.msra.mxu0 0
        %2159 = vmatprep.mubr.bf16.mxu0 0
        %2160 = vmatmul.mubr.bf16.gmra.mrb[0].mxu0 %v2122
        %v2161 = vpop.f32.mrb[0].mxu0
        %v2162 = vadd.f32 %v898, %v2161
        %v2163 = vpop.f32.mrb[0].mxu0
        %v2164 = vpop.f32.mrb[0].mxu0
        %v2165 = vpop.f32.mrb[0].mxu0
        %2166 = vdwg.mxu0
        %2167 = vxpose.xlu0.c.b16.start [1/8] %v2098, 128
        %2168 = vxpose.xlu0.c.b16.cont [2/8] 0, 128
        %2169 = vxpose.xlu0.c.b16.cont [3/8] 0, 128
        %2170 = vxpose.xlu0.c.b16.cont [4/8] 0, 128
        %2171 = vxpose.xlu0.c.b16.cont [5/8] 0, 128
        %2172 = vxpose.xlu0.c.b16.cont [6/8] 0, 128
        %2173 = vxpose.xlu0.c.b16.cont [7/8] 0, 128
        %2174 = vxpose.xlu0.c.b16.end [8/8] 0, 128
        %v2175 = vpop.trf.xlu0
        %v2176 = vpop.trf.xlu0
        %v2177 = vpop.trf.xlu0
        %v2178 = vpop.trf.xlu0
        %v2179 = vpop.trf.xlu0
        %v2180 = vpop.trf.xlu0
        %v2181 = vpop.trf.xlu0
        %v2182 = vpop.trf.xlu0
        %v2184 = vsel %vm1185, %v2175, 0
        %v2187 = vsel %vm1189, %v2102, 0
        %2189 = vmatprep.subr.bf16.mxu0 0
        %2190 = vmatpush1.bf16.msra.mxu0 %v2187
        %2191 = vmatprep.subr.bf16.mxu0 0
        %2192 = vmatpush1.bf16.msra.mxu0 0
        %2193 = vmatprep.subr.bf16.mxu0 0
        %2194 = vmatpush1.bf16.msra.mxu0 0
        %2195 = vmatprep.subr.bf16.mxu0 0
        %2196 = vmatpush1.bf16.msra.mxu0 0
        %2197 = vmatprep.subr.bf16.mxu0 0
        %2198 = vmatpush1.bf16.msra.mxu0 0
        %2199 = vmatprep.subr.bf16.mxu0 0
        %2200 = vmatpush1.bf16.msra.mxu0 0
        %2201 = vmatprep.subr.bf16.mxu0 0
        %2202 = vmatpush1.bf16.msra.mxu0 0
        %2203 = vmatprep.subr.bf16.mxu0 0
        %2204 = vmatpush1.bf16.msra.mxu0 0
        %2205 = vmatprep.subr.bf16.mxu0 0
        %2206 = vmatpush1.bf16.msra.mxu0 0
        %2207 = vmatprep.subr.bf16.mxu0 0
        %2208 = vmatpush1.bf16.msra.mxu0 0
        %2209 = vmatprep.subr.bf16.mxu0 0
        %2210 = vmatpush1.bf16.msra.mxu0 0
        %2211 = vmatprep.subr.bf16.mxu0 0
        %2212 = vmatpush1.bf16.msra.mxu0 0
        %2213 = vmatprep.subr.bf16.mxu0 0
        %2214 = vmatpush1.bf16.msra.mxu0 0
        %2215 = vmatprep.subr.bf16.mxu0 0
        %2216 = vmatpush1.bf16.msra.mxu0 0
        %2217 = vmatprep.subr.bf16.mxu0 0
        %2218 = vmatpush1.bf16.msra.mxu0 0
        %2219 = vmatprep.subr.bf16.mxu0 0
        %2220 = vmatpush1.bf16.msra.mxu0 0
        %2221 = vmatprep.mubr.bf16.mxu0 0
        %2222 = vmatmul.mubr.bf16.gmra.mrb[0].mxu0 %v2184
        %v2223 = vpop.f32.mrb[0].mxu0
        %v2224 = vadd.f32 %v898, %v2223
        %v2225 = vpop.f32.mrb[0].mxu0
        %v2226 = vpop.f32.mrb[0].mxu0
        %v2227 = vpop.f32.mrb[0].mxu0
        %2228 = vdwg.mxu0
        %2229 = vxpose.xlu0.c.b16.start [1/8] %v2099, 128
        %2230 = vxpose.xlu0.c.b16.cont [2/8] 0, 128
        %2231 = vxpose.xlu0.c.b16.cont [3/8] 0, 128
        %2232 = vxpose.xlu0.c.b16.cont [4/8] 0, 128
        %2233 = vxpose.xlu0.c.b16.cont [5/8] 0, 128
        %2234 = vxpose.xlu0.c.b16.cont [6/8] 0, 128
        %2235 = vxpose.xlu0.c.b16.cont [7/8] 0, 128
        %2236 = vxpose.xlu0.c.b16.end [8/8] 0, 128
        %v2237 = vpop.trf.xlu0
        %v2238 = vpop.trf.xlu0
        %v2239 = vpop.trf.xlu0
        %v2240 = vpop.trf.xlu0
        %v2241 = vpop.trf.xlu0
        %v2242 = vpop.trf.xlu0
        %v2243 = vpop.trf.xlu0
        %v2244 = vpop.trf.xlu0
        %v2246 = vsel %vm1185, %v2237, 0
        %v2249 = vsel %vm1189, %v2103, 0
        %2251 = vmatprep.subr.bf16.mxu0 0
        %2252 = vmatpush1.bf16.msra.mxu0 %v2249
        %2253 = vmatprep.subr.bf16.mxu0 0
        %2254 = vmatpush1.bf16.msra.mxu0 0
        %2255 = vmatprep.subr.bf16.mxu0 0
        %2256 = vmatpush1.bf16.msra.mxu0 0
        %2257 = vmatprep.subr.bf16.mxu0 0
        %2258 = vmatpush1.bf16.msra.mxu0 0
        %2259 = vmatprep.subr.bf16.mxu0 0
        %2260 = vmatpush1.bf16.msra.mxu0 0
        %2261 = vmatprep.subr.bf16.mxu0 0
        %2262 = vmatpush1.bf16.msra.mxu0 0
        %2263 = vmatprep.subr.bf16.mxu0 0
        %2264 = vmatpush1.bf16.msra.mxu0 0
        %2265 = vmatprep.subr.bf16.mxu0 0
        %2266 = vmatpush1.bf16.msra.mxu0 0
        %2267 = vmatprep.subr.bf16.mxu0 0
        %2268 = vmatpush1.bf16.msra.mxu0 0
        %2269 = vmatprep.subr.bf16.mxu0 0
        %2270 = vmatpush1.bf16.msra.mxu0 0
        %2271 = vmatprep.subr.bf16.mxu0 0
        %2272 = vmatpush1.bf16.msra.mxu0 0
        %2273 = vmatprep.subr.bf16.mxu0 0
        %2274 = vmatpush1.bf16.msra.mxu0 0
        %2275 = vmatprep.subr.bf16.mxu0 0
        %2276 = vmatpush1.bf16.msra.mxu0 0
        %2277 = vmatprep.subr.bf16.mxu0 0
        %2278 = vmatpush1.bf16.msra.mxu0 0
        %2279 = vmatprep.subr.bf16.mxu0 0
        %2280 = vmatpush1.bf16.msra.mxu0 0
        %2281 = vmatprep.subr.bf16.mxu0 0
        %2282 = vmatpush1.bf16.msra.mxu0 0
        %2283 = vmatprep.mubr.bf16.mxu0 0
        %2284 = vmatmul.mubr.bf16.gmra.mrb[0].mxu0 %v2246
        %v2285 = vpop.f32.mrb[0].mxu0
        %v2286 = vadd.f32 %v898, %v2285
        %v2287 = vpop.f32.mrb[0].mxu0
        %v2288 = vpop.f32.mrb[0].mxu0
        %v2289 = vpop.f32.mrb[0].mxu0
        %2290 = vdwg.mxu0
        %2291 = vxpose.xlu0.c.b16.start [1/8] %v2100, 128
        %2292 = vxpose.xlu0.c.b16.cont [2/8] 0, 128
        %2293 = vxpose.xlu0.c.b16.cont [3/8] 0, 128
        %2294 = vxpose.xlu0.c.b16.cont [4/8] 0, 128
        %2295 = vxpose.xlu0.c.b16.cont [5/8] 0, 128
        %2296 = vxpose.xlu0.c.b16.cont [6/8] 0, 128
        %2297 = vxpose.xlu0.c.b16.cont [7/8] 0, 128
        %2298 = vxpose.xlu0.c.b16.end [8/8] 0, 128
        %v2299 = vpop.trf.xlu0
        %v2300 = vpop.trf.xlu0
        %v2301 = vpop.trf.xlu0
        %v2302 = vpop.trf.xlu0
        %v2303 = vpop.trf.xlu0
        %v2304 = vpop.trf.xlu0
        %v2305 = vpop.trf.xlu0
        %v2306 = vpop.trf.xlu0
        %v2308 = vsel %vm1185, %v2299, 0
        %v2311 = vsel %vm1189, %v2104, 0
        %2313 = vmatprep.subr.bf16.mxu0 0
        %2314 = vmatpush1.bf16.msra.mxu0 %v2311
        %2315 = vmatprep.subr.bf16.mxu0 0
        %2316 = vmatpush1.bf16.msra.mxu0 0
        %2317 = vmatprep.subr.bf16.mxu0 0
        %2318 = vmatpush1.bf16.msra.mxu0 0
        %2319 = vmatprep.subr.bf16.mxu0 0
        %2320 = vmatpush1.bf16.msra.mxu0 0
        %2321 = vmatprep.subr.bf16.mxu0 0
        %2322 = vmatpush1.bf16.msra.mxu0 0
        %2323 = vmatprep.subr.bf16.mxu0 0
        %2324 = vmatpush1.bf16.msra.mxu0 0
        %2325 = vmatprep.subr.bf16.mxu0 0
        %2326 = vmatpush1.bf16.msra.mxu0 0
        %2327 = vmatprep.subr.bf16.mxu0 0
        %2328 = vmatpush1.bf16.msra.mxu0 0
        %2329 = vmatprep.subr.bf16.mxu0 0
        %2330 = vmatpush1.bf16.msra.mxu0 0
        %2331 = vmatprep.subr.bf16.mxu0 0
        %2332 = vmatpush1.bf16.msra.mxu0 0
        %2333 = vmatprep.subr.bf16.mxu0 0
        %2334 = vmatpush1.bf16.msra.mxu0 0
        %2335 = vmatprep.subr.bf16.mxu0 0
        %2336 = vmatpush1.bf16.msra.mxu0 0
        %2337 = vmatprep.subr.bf16.mxu0 0
        %2338 = vmatpush1.bf16.msra.mxu0 0
        %2339 = vmatprep.subr.bf16.mxu0 0
        %2340 = vmatpush1.bf16.msra.mxu0 0
        %2341 = vmatprep.subr.bf16.mxu0 0
        %2342 = vmatpush1.bf16.msra.mxu0 0
        %2343 = vmatprep.subr.bf16.mxu0 0
        %2344 = vmatpush1.bf16.msra.mxu0 0
        %2345 = vmatprep.mubr.bf16.mxu0 0
        %2346 = vmatmul.mubr.bf16.gmra.mrb[0].mxu0 %v2308
        %v2347 = vpop.f32.mrb[0].mxu0
        %v2348 = vadd.f32 %v898, %v2347
        %v2349 = vpop.f32.mrb[0].mxu0
        %v2350 = vpop.f32.mrb[0].mxu0
        %v2351 = vpop.f32.mrb[0].mxu0
        %2352 = vdwg.mxu0
        %v2353 = vsel %vm1185, %v2162, -inf
        %2354 = vmax.xlane.f32.xlu0 %v2353
        %v2355 = vpop.xlane.xlu0 %2354
        %v2356 = vsel %vm1185, %v2224, -inf
        %2357 = vmax.xlane.f32.xlu0 %v2356
        %v2358 = vpop.xlane.xlu0 %2357
        %v2359 = vsel %vm1185, %v2286, -inf
        %2360 = vmax.xlane.f32.xlu0 %v2359
        %v2361 = vpop.xlane.xlu0 %2360
        %v2362 = vsel %vm1185, %v2348, -inf
        %2363 = vmax.xlane.f32.xlu0 %v2362
        %v2364 = vpop.xlane.xlu0 %2363
        %v2365 = vsub.f32 %v2162, %v2355
        %v2366 = vsub.f32 %v2224, %v2358
        %v2367 = vsub.f32 %v2286, %v2361
        %v2368 = vsub.f32 %v2348, %v2364
        %v2369 = vmul.f32 %v2365, 1.442695
        %v2370 = vpow.pop %v2369
        %v2371 = vmul.f32 %v2366, 1.442695
        %v2372 = vpow.pop %v2371
        %v2373 = vmul.f32 %v2367, 1.442695
        %v2374 = vpow.pop %v2373
        %v2375 = vmul.f32 %v2368, 1.442695
        %v2376 = vpow.pop %v2375
        %v2377 = vsel %vm1185, %v2370, 0.0
        %2378 = vadd.xlane.f32.xlu0 %v2377
        %v2379 = vpop.xlane.xlu0 %2378
        %v2380 = vsel %vm1185, %v2372, 0.0
        %2381 = vadd.xlane.f32.xlu0 %v2380
        %v2382 = vpop.xlane.xlu0 %2381
        %v2383 = vsel %vm1185, %v2374, 0.0
        %2384 = vadd.xlane.f32.xlu0 %v2383
        %v2385 = vpop.xlane.xlu0 %2384
        %v2386 = vsel %vm1185, %v2376, 0.0
        %2387 = vadd.xlane.f32.xlu0 %v2386
        %v2388 = vpop.xlane.xlu0 %2387
        %v2389 = vrcp.pop %v2379
        %v2390 = vrcp.pop %v2382
        %v2391 = vrcp.pop %v2385
        %v2392 = vrcp.pop %v2388
        %v2393 = vmul.f32 %v2370, %v2389
        %v2394 = vmul.f32 %v2372, %v2390
        %v2395 = vmul.f32 %v2374, %v2391
        %v2396 = vmul.f32 %v2376, %v2392
        %v2397 = vpack.c.bf16 %v2083, %v2083
        %v2398 = vpack.c.bf16 %v2086, %v2086
        %v2399 = vpack.c.bf16 %v2091, %v2091
        %v2400 = vpack.c.bf16 %v2094, %v2094
        %v2401 = vpack.c.bf16 %v2393, %v2393
        %v2402 = vpack.c.bf16 %v2394, %v2394
        %v2403 = vpack.c.bf16 %v2395, %v2395
        %v2404 = vpack.c.bf16 %v2396, %v2396
        %v2406 = vsel %vm1185, %v2397, 0
        %v2409 = vsel %vm1185, %v2401, 0
        %2411 = vmatprep.subr.bf16.mxu0 0
        %2412 = vmatpush1.bf16.xpose.msra.mxu0 %v2409
        %2413 = vmatprep.subr.bf16.mxu0 0
        %2414 = vmatpush1.bf16.xpose.msra.mxu0 0
        %2415 = vmatprep.subr.bf16.mxu0 0
        %2416 = vmatpush1.bf16.xpose.msra.mxu0 0
        %2417 = vmatprep.subr.bf16.mxu0 0
        %2418 = vmatpush1.bf16.xpose.msra.mxu0 0
        %2419 = vmatprep.subr.bf16.mxu0 0
        %2420 = vmatpush1.bf16.xpose.msra.mxu0 0
        %2421 = vmatprep.subr.bf16.mxu0 0
        %2422 = vmatpush1.bf16.xpose.msra.mxu0 0
        %2423 = vmatprep.subr.bf16.mxu0 0
        %2424 = vmatpush1.bf16.xpose.msra.mxu0 0
        %2425 = vmatprep.subr.bf16.mxu0 0
        %2426 = vmatpush1.bf16.xpose.msra.mxu0 0
        %2427 = vmatprep.subr.bf16.mxu0 0
        %2428 = vmatpush1.bf16.xpose.msra.mxu0 0
        %2429 = vmatprep.subr.bf16.mxu0 0
        %2430 = vmatpush1.bf16.xpose.msra.mxu0 0
        %2431 = vmatprep.subr.bf16.mxu0 0
        %2432 = vmatpush1.bf16.xpose.msra.mxu0 0
        %2433 = vmatprep.subr.bf16.mxu0 0
        %2434 = vmatpush1.bf16.xpose.msra.mxu0 0
        %2435 = vmatprep.subr.bf16.mxu0 0
        %2436 = vmatpush1.bf16.xpose.msra.mxu0 0
        %2437 = vmatprep.subr.bf16.mxu0 0
        %2438 = vmatpush1.bf16.xpose.msra.mxu0 0
        %2439 = vmatprep.subr.bf16.mxu0 0
        %2440 = vmatpush1.bf16.xpose.msra.mxu0 0
        %2441 = vmatprep.subr.bf16.mxu0 0
        %2442 = vmatpush1.bf16.xpose.msra.mxu0 0
        %2443 = vmatprep.mubr.bf16.mxu0 0
        %2444 = vmatmul.mubr.bf16.gmra.mrb[0].mxu0 %v2406
        %v2445 = vpop.f32.mrb[0].mxu0
        %v2446 = vadd.f32 0.0, %v2445
        %v2447 = vpop.f32.mrb[0].mxu0
        %v2448 = vpop.f32.mrb[0].mxu0
        %v2449 = vpop.f32.mrb[0].mxu0
        %2450 = vdwg.mxu0
        %v2452 = vsel %vm1185, %v2398, 0
        %v2455 = vsel %vm1185, %v2402, 0
        %2457 = vmatprep.subr.bf16.mxu0 0
        %2458 = vmatpush1.bf16.xpose.msra.mxu0 %v2455
        %2459 = vmatprep.subr.bf16.mxu0 0
        %2460 = vmatpush1.bf16.xpose.msra.mxu0 0
        %2461 = vmatprep.subr.bf16.mxu0 0
        %2462 = vmatpush1.bf16.xpose.msra.mxu0 0
        %2463 = vmatprep.subr.bf16.mxu0 0
        %2464 = vmatpush1.bf16.xpose.msra.mxu0 0
        %2465 = vmatprep.subr.bf16.mxu0 0
        %2466 = vmatpush1.bf16.xpose.msra.mxu0 0
        %2467 = vmatprep.subr.bf16.mxu0 0
        %2468 = vmatpush1.bf16.xpose.msra.mxu0 0
        %2469 = vmatprep.subr.bf16.mxu0 0
        %2470 = vmatpush1.bf16.xpose.msra.mxu0 0
        %2471 = vmatprep.subr.bf16.mxu0 0
        %2472 = vmatpush1.bf16.xpose.msra.mxu0 0
        %2473 = vmatprep.subr.bf16.mxu0 0
        %2474 = vmatpush1.bf16.xpose.msra.mxu0 0
        %2475 = vmatprep.subr.bf16.mxu0 0
        %2476 = vmatpush1.bf16.xpose.msra.mxu0 0
        %2477 = vmatprep.subr.bf16.mxu0 0
        %2478 = vmatpush1.bf16.xpose.msra.mxu0 0
        %2479 = vmatprep.subr.bf16.mxu0 0
        %2480 = vmatpush1.bf16.xpose.msra.mxu0 0
        %2481 = vmatprep.subr.bf16.mxu0 0
        %2482 = vmatpush1.bf16.xpose.msra.mxu0 0
        %2483 = vmatprep.subr.bf16.mxu0 0
        %2484 = vmatpush1.bf16.xpose.msra.mxu0 0
        %2485 = vmatprep.subr.bf16.mxu0 0
        %2486 = vmatpush1.bf16.xpose.msra.mxu0 0
        %2487 = vmatprep.subr.bf16.mxu0 0
        %2488 = vmatpush1.bf16.xpose.msra.mxu0 0
        %2489 = vmatprep.mubr.bf16.mxu0 0
        %2490 = vmatmul.mubr.bf16.gmra.mrb[0].mxu0 %v2452
        %v2491 = vpop.f32.mrb[0].mxu0
        %v2492 = vadd.f32 0.0, %v2491
        %v2493 = vpop.f32.mrb[0].mxu0
        %v2494 = vpop.f32.mrb[0].mxu0
        %v2495 = vpop.f32.mrb[0].mxu0
        %2496 = vdwg.mxu0
        %v2498 = vsel %vm1185, %v2399, 0
        %v2501 = vsel %vm1185, %v2403, 0
        %2503 = vmatprep.subr.bf16.mxu0 0
        %2504 = vmatpush1.bf16.xpose.msra.mxu0 %v2501
        %2505 = vmatprep.subr.bf16.mxu0 0
        %2506 = vmatpush1.bf16.xpose.msra.mxu0 0
        %2507 = vmatprep.subr.bf16.mxu0 0
        %2508 = vmatpush1.bf16.xpose.msra.mxu0 0
        %2509 = vmatprep.subr.bf16.mxu0 0
        %2510 = vmatpush1.bf16.xpose.msra.mxu0 0
        %2511 = vmatprep.subr.bf16.mxu0 0
        %2512 = vmatpush1.bf16.xpose.msra.mxu0 0
        %2513 = vmatprep.subr.bf16.mxu0 0
        %2514 = vmatpush1.bf16.xpose.msra.mxu0 0
        %2515 = vmatprep.subr.bf16.mxu0 0
        %2516 = vmatpush1.bf16.xpose.msra.mxu0 0
        %2517 = vmatprep.subr.bf16.mxu0 0
        %2518 = vmatpush1.bf16.xpose.msra.mxu0 0
        %2519 = vmatprep.subr.bf16.mxu0 0
        %2520 = vmatpush1.bf16.xpose.msra.mxu0 0
        %2521 = vmatprep.subr.bf16.mxu0 0
        %2522 = vmatpush1.bf16.xpose.msra.mxu0 0
        %2523 = vmatprep.subr.bf16.mxu0 0
        %2524 = vmatpush1.bf16.xpose.msra.mxu0 0
        %2525 = vmatprep.subr.bf16.mxu0 0
        %2526 = vmatpush1.bf16.xpose.msra.mxu0 0
        %2527 = vmatprep.subr.bf16.mxu0 0
        %2528 = vmatpush1.bf16.xpose.msra.mxu0 0
        %2529 = vmatprep.subr.bf16.mxu0 0
        %2530 = vmatpush1.bf16.xpose.msra.mxu0 0
        %2531 = vmatprep.subr.bf16.mxu0 0
        %2532 = vmatpush1.bf16.xpose.msra.mxu0 0
        %2533 = vmatprep.subr.bf16.mxu0 0
        %2534 = vmatpush1.bf16.xpose.msra.mxu0 0
        %2535 = vmatprep.mubr.bf16.mxu0 0
        %2536 = vmatmul.mubr.bf16.gmra.mrb[0].mxu0 %v2498
        %v2537 = vpop.f32.mrb[0].mxu0
        %v2538 = vadd.f32 0.0, %v2537
        %v2539 = vpop.f32.mrb[0].mxu0
        %v2540 = vpop.f32.mrb[0].mxu0
        %v2541 = vpop.f32.mrb[0].mxu0
        %2542 = vdwg.mxu0
        %v2544 = vsel %vm1185, %v2400, 0
        %v2547 = vsel %vm1185, %v2404, 0
        %2549 = vmatprep.subr.bf16.mxu0 0
        %2550 = vmatpush1.bf16.xpose.msra.mxu0 %v2547
        %2551 = vmatprep.subr.bf16.mxu0 0
        %2552 = vmatpush1.bf16.xpose.msra.mxu0 0
        %2553 = vmatprep.subr.bf16.mxu0 0
        %2554 = vmatpush1.bf16.xpose.msra.mxu0 0
        %2555 = vmatprep.subr.bf16.mxu0 0
        %2556 = vmatpush1.bf16.xpose.msra.mxu0 0
        %2557 = vmatprep.subr.bf16.mxu0 0
        %2558 = vmatpush1.bf16.xpose.msra.mxu0 0
        %2559 = vmatprep.subr.bf16.mxu0 0
        %2560 = vmatpush1.bf16.xpose.msra.mxu0 0
        %2561 = vmatprep.subr.bf16.mxu0 0
        %2562 = vmatpush1.bf16.xpose.msra.mxu0 0
        %2563 = vmatprep.subr.bf16.mxu0 0
        %2564 = vmatpush1.bf16.xpose.msra.mxu0 0
        %2565 = vmatprep.subr.bf16.mxu0 0
        %2566 = vmatpush1.bf16.xpose.msra.mxu0 0
        %2567 = vmatprep.subr.bf16.mxu0 0
        %2568 = vmatpush1.bf16.xpose.msra.mxu0 0
        %2569 = vmatprep.subr.bf16.mxu0 0
        %2570 = vmatpush1.bf16.xpose.msra.mxu0 0
        %2571 = vmatprep.subr.bf16.mxu0 0
        %2572 = vmatpush1.bf16.xpose.msra.mxu0 0
        %2573 = vmatprep.subr.bf16.mxu0 0
        %2574 = vmatpush1.bf16.xpose.msra.mxu0 0
        %2575 = vmatprep.subr.bf16.mxu0 0
        %2576 = vmatpush1.bf16.xpose.msra.mxu0 0
        %2577 = vmatprep.subr.bf16.mxu0 0
        %2578 = vmatpush1.bf16.xpose.msra.mxu0 0
        %2579 = vmatprep.subr.bf16.mxu0 0
        %2580 = vmatpush1.bf16.xpose.msra.mxu0 0
        %2581 = vmatprep.mubr.bf16.mxu0 0
        %2582 = vmatmul.mubr.bf16.gmra.mrb[0].mxu0 %v2544
        %v2583 = vpop.f32.mrb[0].mxu0
        %v2584 = vadd.f32 0.0, %v2583
        %v2585 = vpop.f32.mrb[0].mxu0
        %v2586 = vpop.f32.mrb[0].mxu0
        %v2587 = vpop.f32.mrb[0].mxu0
        %2588 = vdwg.mxu0
        %v2589 = vpack.c.bf16 %v2492, %v2446
        %v2590 = vpack.c.bf16 %v2584, %v2538
        %2591 = vxpose.xlu0.c.b16.start [1/8] %v2589, 128
        %2592 = vxpose.xlu0.c.b16.cont [2/8] %v2590, 128
        %2593 = vxpose.xlu0.c.b16.cont [3/8] 0, 128
        %2594 = vxpose.xlu0.c.b16.cont [4/8] 0, 128
        %2595 = vxpose.xlu0.c.b16.cont [5/8] 0, 128
        %2596 = vxpose.xlu0.c.b16.cont [6/8] 0, 128
        %2597 = vxpose.xlu0.c.b16.cont [7/8] 0, 128
        %2598 = vxpose.xlu0.c.b16.end [8/8] 0, 128
        %v2599 = vpop.trf.xlu0
        %v2600 = vpop.trf.xlu0
        %v2601 = vpop.trf.xlu0
        %v2602 = vpop.trf.xlu0
        %v2603 = vpop.trf.xlu0
        %v2604 = vpop.trf.xlu0
        %v2605 = vpop.trf.xlu0
        %v2606 = vpop.trf.xlu0
        %v2608 = vsel %vm932, %v2599, 0
        %2610 = vmatprep.subr.bf16.mxu0 0
        %2611 = vmatpush1.bf16.xpose.msra.mxu0 %v1693
        %2612 = vmatprep.subr.bf16.mxu0 0
        %2613 = vmatpush1.bf16.xpose.msra.mxu0 %v1696
        %2614 = vmatprep.subr.bf16.mxu0 0
        %2615 = vmatpush1.bf16.xpose.msra.mxu0 0
        %2616 = vmatprep.subr.bf16.mxu0 0
        %2617 = vmatpush1.bf16.xpose.msra.mxu0 0
        %2618 = vmatprep.subr.bf16.mxu0 0
        %2619 = vmatpush1.bf16.xpose.msra.mxu0 0
        %2620 = vmatprep.subr.bf16.mxu0 0
        %2621 = vmatpush1.bf16.xpose.msra.mxu0 0
        %2622 = vmatprep.subr.bf16.mxu0 0
        %2623 = vmatpush1.bf16.xpose.msra.mxu0 0
        %2624 = vmatprep.subr.bf16.mxu0 0
        %2625 = vmatpush1.bf16.xpose.msra.mxu0 0
        %2626 = vmatprep.subr.bf16.mxu0 0
        %2627 = vmatpush1.bf16.xpose.msra.mxu0 0
        %2628 = vmatprep.subr.bf16.mxu0 0
        %2629 = vmatpush1.bf16.xpose.msra.mxu0 0
        %2630 = vmatprep.subr.bf16.mxu0 0
        %2631 = vmatpush1.bf16.xpose.msra.mxu0 0
        %2632 = vmatprep.subr.bf16.mxu0 0
        %2633 = vmatpush1.bf16.xpose.msra.mxu0 0
        %2634 = vmatprep.subr.bf16.mxu0 0
        %2635 = vmatpush1.bf16.xpose.msra.mxu0 0
        %2636 = vmatprep.subr.bf16.mxu0 0
        %2637 = vmatpush1.bf16.xpose.msra.mxu0 0
        %2638 = vmatprep.subr.bf16.mxu0 0
        %2639 = vmatpush1.bf16.xpose.msra.mxu0 0
        %2640 = vmatprep.subr.bf16.mxu0 0
        %2641 = vmatpush1.bf16.xpose.msra.mxu0 0
        %2642 = vmatprep.mubr.bf16.mxu0 0
        %2643 = vmatmul.mubr.bf16.gmra.mrb[0].mxu0 %v2608
        %v2644 = vpop.f32.mrb[0].mxu0
        %v2645 = vadd.f32 %v1661, %v2644
        %v2646 = vpop.f32.mrb[0].mxu0
        %v2647 = vpop.f32.mrb[0].mxu0
        %v2648 = vpop.f32.mrb[0].mxu0
        %2649 = vdwg.mxu0
        %v2650 = vadd.f32 %v900, %v2645
        %v2651 = vsel %vm932, %v2650, 0.0
        %2652 = vadd.xlane.f32.xlu0 %v2651
        %v2653 = vpop.xlane.xlu0 %2652
        %v2654 = vmul.f32 %v2653, %v1742
        %v2655 = vsub.f32 %v2650, %v2654
        %v2656 = vmul.f32 %v2655, %v2655
        %v2657 = vsel %vm932, %v2656, 0.0
        %2658 = vadd.xlane.f32.xlu0 %v2657
        %v2659 = vpop.xlane.xlu0 %2658
        %v2660 = vmul.f32 %v2659, %v1742
        %v2661 = vadd.f32 %v2660, 1e-05
        %v2662 = vrsqrt.pop %v2661
        %v2663 = vmul.f32 %v2655, %v2662
        %v2664 = vmul.f32 %v2663, %v1757
        %v2665 = vadd.f32 %v2664, %v1764
        %v2666 = vpack.c.bf16 %v2665, %v2665
        %v2668 = vsel %vm932, %v2666, 0
        %2670 = vmatprep.subr.bf16.mxu0 0
        %2671 = vmatpush1.bf16.xpose.msra.mxu0 %v1798
        %2672 = vmatprep.subr.bf16.mxu0 0
        %2673 = vmatpush1.bf16.xpose.msra.mxu0 %v1801
        %2674 = vmatprep.subr.bf16.mxu0 0
        %2675 = vmatpush1.bf16.xpose.msra.mxu0 %v1804
        %2676 = vmatprep.subr.bf16.mxu0 0
        %2677 = vmatpush1.bf16.xpose.msra.mxu0 %v1807
        %2678 = vmatprep.subr.bf16.mxu0 0
        %2679 = vmatpush1.bf16.xpose.msra.mxu0 0
        %2680 = vmatprep.subr.bf16.mxu0 0
        %2681 = vmatpush1.bf16.xpose.msra.mxu0 0
        %2682 = vmatprep.subr.bf16.mxu0 0
        %2683 = vmatpush1.bf16.xpose.msra.mxu0 0
        %2684 = vmatprep.subr.bf16.mxu0 0
        %2685 = vmatpush1.bf16.xpose.msra.mxu0 0
        %2686 = vmatprep.subr.bf16.mxu0 0
        %2687 = vmatpush1.bf16.xpose.msra.mxu0 0
        %2688 = vmatprep.subr.bf16.mxu0 0
        %2689 = vmatpush1.bf16.xpose.msra.mxu0 0
        %2690 = vmatprep.subr.bf16.mxu0 0
        %2691 = vmatpush1.bf16.xpose.msra.mxu0 0
        %2692 = vmatprep.subr.bf16.mxu0 0
        %2693 = vmatpush1.bf16.xpose.msra.mxu0 0
        %2694 = vmatprep.subr.bf16.mxu0 0
        %2695 = vmatpush1.bf16.xpose.msra.mxu0 0
        %2696 = vmatprep.subr.bf16.mxu0 0
        %2697 = vmatpush1.bf16.xpose.msra.mxu0 0
        %2698 = vmatprep.subr.bf16.mxu0 0
        %2699 = vmatpush1.bf16.xpose.msra.mxu0 0
        %2700 = vmatprep.subr.bf16.mxu0 0
        %2701 = vmatpush1.bf16.xpose.msra.mxu0 0
        %2702 = vmatprep.mubr.bf16.mxu0 0
        %2703 = vmatmul.mubr.bf16.gmra.mrb[0].mxu0 %v2668
        %v2704 = vpop.f32.mrb[0].mxu0
        %v2705 = vadd.f32 %v1772, %v2704
        %v2706 = vpop.f32.mrb[0].mxu0
        %v2707 = vpop.f32.mrb[0].mxu0
        %v2708 = vpop.f32.mrb[0].mxu0
        %2709 = vdwg.mxu0
        %v2710 = vmax.f32 %v2705, 0.0
        %v2711 = vpack.c.bf16 %v2710, %v2710
        %v2713 = vsel %vm1867, %v2711, 0
        %2715 = vmatprep.subr.bf16.mxu0 0
        %2716 = vmatpush1.bf16.xpose.msra.mxu0 %v1872
        %2717 = vmatprep.subr.bf16.mxu0 0
        %2718 = vmatpush1.bf16.xpose.msra.mxu0 %v1875
        %2719 = vmatprep.subr.bf16.mxu0 0
        %2720 = vmatpush1.bf16.xpose.msra.mxu0 0
        %2721 = vmatprep.subr.bf16.mxu0 0
        %2722 = vmatpush1.bf16.xpose.msra.mxu0 0
        %2723 = vmatprep.subr.bf16.mxu0 0
        %2724 = vmatpush1.bf16.xpose.msra.mxu0 0
        %2725 = vmatprep.subr.bf16.mxu0 0
        %2726 = vmatpush1.bf16.xpose.msra.mxu0 0
        %2727 = vmatprep.subr.bf16.mxu0 0
        %2728 = vmatpush1.bf16.xpose.msra.mxu0 0
        %2729 = vmatprep.subr.bf16.mxu0 0
        %2730 = vmatpush1.bf16.xpose.msra.mxu0 0
        %2731 = vmatprep.subr.bf16.mxu0 0
        %2732 = vmatpush1.bf16.xpose.msra.mxu0 0
        %2733 = vmatprep.subr.bf16.mxu0 0
        %2734 = vmatpush1.bf16.xpose.msra.mxu0 0
        %2735 = vmatprep.subr.bf16.mxu0 0
        %2736 = vmatpush1.bf16.xpose.msra.mxu0 0
        %2737 = vmatprep.subr.bf16.mxu0 0
        %2738 = vmatpush1.bf16.xpose.msra.mxu0 0
        %2739 = vmatprep.subr.bf16.mxu0 0
        %2740 = vmatpush1.bf16.xpose.msra.mxu0 0
        %2741 = vmatprep.subr.bf16.mxu0 0
        %2742 = vmatpush1.bf16.xpose.msra.mxu0 0
        %2743 = vmatprep.subr.bf16.mxu0 0
        %2744 = vmatpush1.bf16.xpose.msra.mxu0 0
        %2745 = vmatprep.subr.bf16.mxu0 0
        %2746 = vmatpush1.bf16.xpose.msra.mxu0 0
        %2747 = vmatprep.mubr.bf16.mxu0 0
        %2748 = vmatmul.mubr.bf16.gmra.mrb[0].mxu0 %v2713
        %v2749 = vpop.f32.mrb[0].mxu0
        %v2750 = vadd.f32 %v1855, %v2749
        %v2751 = vpop.f32.mrb[0].mxu0
        %v2752 = vpop.f32.mrb[0].mxu0
        %v2753 = vpop.f32.mrb[0].mxu0
        %2754 = vdwg.mxu0
        %v2755 = vadd.f32 %v2665, %v2750
        %v2756 = vsel %vm932, %v2755, 0.0
        %2757 = vadd.xlane.f32.xlu0 %v2756
        %v2758 = vpop.xlane.xlu0 %2757
        %v2759 = vmul.f32 %v2758, %v1742
        %v2760 = vsub.f32 %v2755, %v2759
        %v2761 = vmul.f32 %v2760, %v2760
        %v2762 = vsel %vm932, %v2761, 0.0
        %2763 = vadd.xlane.f32.xlu0 %v2762
        %v2764 = vpop.xlane.xlu0 %2763
        %v2765 = vmul.f32 %v2764, %v1742
        %v2766 = vadd.f32 %v2765, 1e-05
        %v2767 = vrsqrt.pop %v2766
        %v2768 = vmul.f32 %v2760, %v2767
        %v2769 = vmul.f32 %v2768, %v1935
        %v2770 = vadd.f32 %v2769, %v1942
        %s2771 = scalar_lea.vmem [#allocation3], 8
        %2772 = vst.msk [vmem:[%s2771] sm:$0xff] %vm932, %v2770
        // Predicated region
        $region93: #{tpu_custom_call.1} parent=87 // pred_check
          %p2773 = pneg %p501
        $region94: #{tpu_custom_call.1} parent=87 // pred_check_branch
          %2775 = sbr.rel (%p2773) target = $region96
        $region95: #{tpu_custom_call.1} parent=87 // pred_region
          %s2776 = smul.u32 2, %s33
          %s2778 = ssub.s32 256, 256
          %2779 = vsyncadd [#allocation4], %s2778
          %s2780 = smul.addr %s2776, 128
          %s2781 = scalar_lea.hbm %s17, %s2780
          %s2782 = sshll.u32 [#allocation3], 4
          %s2783 = int_to_ptr.vmem [resolvable:$true] %s2782
          %2788 = dma.vmem_to_hbm [thread:$0]  %s2783, 256, %s2781, [#allocation4], 128, 128, 8
        $region96: #{tpu_custom_call.1} parent=87 // pred_fallthru
          _
        // Predicated region
        $region97: #{tpu_custom_call.1} parent=87 // pred_check
          %p2789 = pneg %p501
        $region98: #{tpu_custom_call.1} parent=87 // pred_check_branch
          %2791 = sbr.rel (%p2789) target = $region100
        $region99: #{tpu_custom_call.1} parent=87 // pred_region
          %2792 = dma.done [#allocation4], 256
        $region100: #{tpu_custom_call.1} parent=87 // pred_fallthru
          _
      $region88: #{tpu_custom_call.1} parent=5 // pred_fallthru
        _
      %p2793 = scmp.le.s32.totalorder 2, %s24
      // Predicated region
      $region101: #{tpu_custom_call.1} parent=5 // pred_check
        %p2794 = pneg %p2793
      $region102: #{tpu_custom_call.1} parent=5 // pred_check_branch
        %2796 = sbr.rel (%p2794) target = $region104
      $region103: #{tpu_custom_call.1} parent=5 // pred_region
        %s2797 = ssub.s32 %s24, 2
      $region104: #{tpu_custom_call.1} parent=5 // pred_fallthru
        _
    $region6: #{tpu_custom_call.1} parent=1 // loop_footer
      %s28 = sadd.s32 1, %s24
    $region7: #{tpu_custom_call.1} parent=1 // loop_footer_branch
      %23 = sbr.rel target = $region3
    $region8: #{tpu_custom_call.1} parent=1 // loop_exit
      _
    %2798 = vsyncpa [#allocation4], 1
    %s2799 = scalar_lea.sflag [#allocation4], 1
    %2800 = vsyncpa %s2799, 1

</llo_original>
